<compile_context>
chip_gen: v7x
topology: tpu7x:2x2x1
jax: 0.10.0
libtpu: 0.0.40
codegen_flags: <defaults>
</compile_context>

<pallas_src>
import math
import functools

import jax
import jax.numpy as jnp
from jax.experimental import pallas as pl
from jax.experimental.pallas import tpu as pltpu


def _round_up(x, m):
    return (x + m - 1) // m * m


def _block(dim, target):
    """Pick a block size for `dim`: full dim if small, `target` if it divides,
    else pad up (fallback only; never hit for tile-friendly shapes)."""
    if dim <= target:
        return dim, dim
    if dim % target == 0:
        return target, dim
    return target, _round_up(dim, target)


# ------------------------- tiled linear (bf16 matmul + bias [+ relu]) -------------------------

def _linear_kernel(x_ref, w_ref, b_ref, o_ref, acc_ref, *, activation):
    @pl.when(pl.program_id(2) == 0)
    def _():
        acc_ref[...] = jnp.zeros_like(acc_ref)

    x = x_ref[...]
    if x.dtype != w_ref.dtype:
        x = x.astype(w_ref.dtype)
    acc_ref[...] += jnp.dot(x, w_ref[...], preferred_element_type=jnp.float32)

    @pl.when(pl.program_id(2) == pl.num_programs(2) - 1)
    def _():
        out = acc_ref[...] + b_ref[...].astype(jnp.float32)
        if activation == "relu":
            out = jnp.maximum(out, 0.0)
        o_ref[...] = out.astype(o_ref.dtype)


def pallas_linear(x, w, b, activation=None, out_dtype=None, tm=512, tn=512, tkc=512):
    """x: (M, K), w: (K, N) pre-transposed bf16, b: (N,) f32 -> (M, N)."""
    M, K = x.shape
    N = w.shape[1]
    out_dtype = out_dtype or x.dtype

    bm, Mp = _block(M, tm)
    bk, Kp = _block(K, tkc)
    bn, Np = _block(N, tn)

    if (Mp, Kp) != (M, K):
        x = jnp.pad(x, ((0, Mp - M), (0, Kp - K)))
    if (Kp, Np) != (K, N):
        w = jnp.pad(w, ((0, Kp - K), (0, Np - N)))
    b2 = b.reshape(1, N)
    if Np != N:
        b2 = jnp.pad(b2, ((0, 0), (0, Np - N)))

    grid = (Mp // bm, Np // bn, Kp // bk)
    out = pl.pallas_call(
        functools.partial(_linear_kernel, activation=activation),
        grid=grid,
        in_specs=[
            pl.BlockSpec((bm, bk), lambda i, j, k: (i, k)),
            pl.BlockSpec((bk, bn), lambda i, j, k: (k, j)),
            pl.BlockSpec((1, bn), lambda i, j, k: (0, j)),
        ],
        out_specs=pl.BlockSpec((bm, bn), lambda i, j, k: (i, j)),
        out_shape=jax.ShapeDtypeStruct((Mp, Np), out_dtype),
        scratch_shapes=[pltpu.VMEM((bm, bn), jnp.float32)],
        compiler_params=pltpu.CompilerParams(
            dimension_semantics=("parallel", "parallel", "arbitrary")),
    )(x, w, b2)
    if (Mp, Np) != (M, N):
        out = out[:M, :N]
    return out


# ------------------------- linear + bias + residual + LayerNorm (fused epilogue) -------------------------

def _linear_res_ln_kernel(x_ref, w_ref, b_ref, r_ref, g_ref, be_ref, o_ref, acc_ref, *, eps):
    @pl.when(pl.program_id(1) == 0)
    def _():
        acc_ref[...] = jnp.zeros_like(acc_ref)

    x = x_ref[...]
    if x.dtype != w_ref.dtype:
        x = x.astype(w_ref.dtype)
    acc_ref[...] += jnp.dot(x, w_ref[...], preferred_element_type=jnp.float32)

    @pl.when(pl.program_id(1) == pl.num_programs(1) - 1)
    def _():
        h = (acc_ref[...] + b_ref[...].astype(jnp.float32)
             + r_ref[...].astype(jnp.float32))
        mu = jnp.mean(h, axis=-1, keepdims=True)
        var = jnp.mean((h - mu) ** 2, axis=-1, keepdims=True)
        y = ((h - mu) * jax.lax.rsqrt(var + eps)
             * g_ref[...].astype(jnp.float32) + be_ref[...].astype(jnp.float32))
        o_ref[...] = y.astype(o_ref.dtype)


def pallas_linear_res_ln(x, w, b, res, gamma, beta, eps=1e-5, out_dtype=None, tm=512, tkc=512):
    """LayerNorm(res + x @ w + b): x (M, K), w (K, E), res (M, E) -> (M, E)."""
    M, K = x.shape
    E = w.shape[1]
    out_dtype = out_dtype or res.dtype

    bm, Mp = _block(M, tm)
    bk, Kp = _block(K, tkc)
    if (Mp, Kp) != (M, K):
        x = jnp.pad(x, ((0, Mp - M), (0, Kp - K)))
    if Kp != K:
        w = jnp.pad(w, ((0, Kp - K), (0, 0)))
    if Mp != M:
        res = jnp.pad(res, ((0, Mp - M), (0, 0)))

    grid = (Mp // bm, Kp // bk)
    out = pl.pallas_call(
        functools.partial(_linear_res_ln_kernel, eps=eps),
        grid=grid,
        in_specs=[
            pl.BlockSpec((bm, bk), lambda i, k: (i, k)),
            pl.BlockSpec((bk, E), lambda i, k: (k, 0)),
            pl.BlockSpec((1, E), lambda i, k: (0, 0)),
            pl.BlockSpec((bm, E), lambda i, k: (i, 0)),
            pl.BlockSpec((1, E), lambda i, k: (0, 0)),
            pl.BlockSpec((1, E), lambda i, k: (0, 0)),
        ],
        out_specs=pl.BlockSpec((bm, E), lambda i, k: (i, 0)),
        out_shape=jax.ShapeDtypeStruct((Mp, E), out_dtype),
        scratch_shapes=[pltpu.VMEM((bm, E), jnp.float32)],
        compiler_params=pltpu.CompilerParams(
            dimension_semantics=("parallel", "arbitrary")),
    )(x, w, b.reshape(1, E), res, gamma.reshape(1, E), beta.reshape(1, E))
    if Mp != M:
        out = out[:M]
    return out


# ------------------------- standalone layernorm (encoder/decoder final norms) -------------------------

def _ln_kernel(x_ref, g_ref, b_ref, o_ref, *, eps):
    x = x_ref[...].astype(jnp.float32)
    mu = jnp.mean(x, axis=-1, keepdims=True)
    var = jnp.mean((x - mu) ** 2, axis=-1, keepdims=True)
    y = ((x - mu) * jax.lax.rsqrt(var + eps)
         * g_ref[...].astype(jnp.float32) + b_ref[...].astype(jnp.float32))
    o_ref[...] = y.astype(o_ref.dtype)


def pallas_layernorm(x, gamma, beta, eps=1e-5, tm=512):
    M, E = x.shape
    bm, Mp = _block(M, tm)
    if Mp != M:
        x = jnp.pad(x, ((0, Mp - M), (0, 0)))
    out = pl.pallas_call(
        functools.partial(_ln_kernel, eps=eps),
        grid=(Mp // bm,),
        in_specs=[pl.BlockSpec((bm, E), lambda i: (i, 0)),
                  pl.BlockSpec((1, E), lambda i: (0, 0)),
                  pl.BlockSpec((1, E), lambda i: (0, 0))],
        out_specs=pl.BlockSpec((bm, E), lambda i: (i, 0)),
        out_shape=jax.ShapeDtypeStruct((Mp, E), x.dtype),
        compiler_params=pltpu.CompilerParams(dimension_semantics=("parallel",)),
    )(x, gamma.reshape(1, E), beta.reshape(1, E))
    if Mp != M:
        out = out[:M]
    return out


# ------------------------- flash-style multi-head attention -------------------------
# grid = (batch, kv_blocks).  Heads are processed inside the kernel (per-head lane blocks
# are illegal when dh < 128); q/k/v are read as static lane slices of the packed
# (Tq, E) / (tk, 2E) blocks, softmax runs online in f32, and the output is written as a
# single lane-dense (Tq, E) store so the out-projection consumes it with a free reshape.

def _attn_kernel(q_ref, kv_ref, o_ref, m_ref, l_ref, acc_ref, *, nhead, dh, scale, causal):
    j = pl.program_id(1)
    E = nhead * dh
    Tq = q_ref.shape[1]
    tk = kv_ref.shape[1]

    @pl.when(j == 0)
    def _():
        m_ref[...] = jnp.full(m_ref.shape, -1e30, jnp.float32)
        l_ref[...] = jnp.zeros_like(l_ref)
        acc_ref[...] = jnp.zeros_like(acc_ref)

    if causal:
        qpos = jax.lax.broadcasted_iota(jnp.int32, (Tq, tk), 0)
        kpos = jax.lax.broadcasted_iota(jnp.int32, (Tq, tk), 1) + j * tk
        allow = kpos <= qpos

    for h in range(nhead):
        sl = slice(h * dh, (h + 1) * dh)
        q_h = q_ref[0, :, sl]                                   # (Tq, dh) bf16
        k_h = kv_ref[0, :, sl]                                  # (tk, dh) bf16
        v_h = kv_ref[0, :, E + h * dh: E + (h + 1) * dh]        # (tk, dh) bf16

        s = jax.lax.dot_general(q_h, k_h, (((1,), (1,)), ((), ())),
                                preferred_element_type=jnp.float32) * scale   # (Tq, tk) f32
        if causal:
            s = jnp.where(allow, s, -1e30)

        m_prev = m_ref[:, h:h + 1]                              # (Tq, 1)
        m_new = jnp.maximum(m_prev, jnp.max(s, axis=-1, keepdims=True))
        alpha = jnp.exp(m_prev - m_new)
        p = jnp.exp(s - m_new)
        l_ref[:, h:h + 1] = alpha * l_ref[:, h:h + 1] + jnp.sum(p, axis=-1, keepdims=True)
        pv = jax.lax.dot_general(p.astype(v_h.dtype), v_h, (((1,), (0,)), ((), ())),
                                 preferred_element_type=jnp.float32)          # (Tq, dh) f32
        acc_ref[:, sl] = alpha * acc_ref[:, sl] + pv
        m_ref[:, h:h + 1] = m_new

    @pl.when(j == pl.num_programs(1) - 1)
    def _():
        for h in range(nhead):
            sl = slice(h * dh, (h + 1) * dh)
            inv = pl.reciprocal(l_ref[:, h:h + 1], approx=True)
            acc_ref[:, sl] = acc_ref[:, sl] * inv
        o_ref[0] = acc_ref[...].astype(o_ref.dtype)             # single lane-dense store


def pallas_attention(q, kv, nhead, scale, causal, tk_target=512):
    """q: (N, Tq, E), kv: (N, Tk, 2E) -> (N, Tq, E).  Flash-tiled over Tk."""
    N, Tq, E = q.shape
    Tk = kv.shape[1]
    dh = E // nhead
    tk = tk_target if Tk % tk_target == 0 else Tk   # tile Tk only when it divides cleanly
    # TODO(synk): also tile Tq (and pad/mask ragged Tk) for very long sequences.

    kernel = functools.partial(_attn_kernel, nhead=nhead, dh=dh, scale=scale, causal=causal)
    return pl.pallas_call(
        kernel,
        grid=(N, Tk // tk),
        in_specs=[
            pl.BlockSpec((1, Tq, E), lambda b, j: (b, 0, 0)),
            pl.BlockSpec((1, tk, 2 * E), lambda b, j: (b, j, 0)),
        ],
        out_specs=pl.BlockSpec((1, Tq, E), lambda b, j: (b, 0, 0)),
        out_shape=jax.ShapeDtypeStruct((N, Tq, E), q.dtype),
        scratch_shapes=[pltpu.VMEM((Tq, nhead), jnp.float32),   # running max m
                        pltpu.VMEM((Tq, nhead), jnp.float32),   # running denom l
                        pltpu.VMEM((Tq, E), jnp.float32)],      # output accumulator
        compiler_params=pltpu.CompilerParams(
            dimension_semantics=("parallel", "arbitrary")),
    )(q, kv)


# ------------------------- model glue (batch-first body) -------------------------

def multi_head_attention(x_q, x_kv, p, nhead, ln, causal=False):
    """x_q: (N, Tq, E), x_kv: (N, Tk, E) -> LayerNorm(x_q + out_proj(attn)) as (N, Tq, E)."""
    N, Tq, E = x_q.shape
    Tk = x_kv.shape[1]
    dh = E // nhead
    xq_flat = x_q.reshape(N * Tq, E)
    xkv_flat = x_kv.reshape(N * Tk, E)

    q = pallas_linear(xq_flat, p["q_w"], p["q_b"])                  # (N*Tq, E)
    kv = pallas_linear(xkv_flat, p["kv_w"], p["kv_b"])              # (N*Tk, 2E) fused K/V
    o = pallas_attention(q.reshape(N, Tq, E), kv.reshape(N, Tk, 2 * E),
                         nhead, 1.0 / math.sqrt(dh), causal)        # (N, Tq, E)
    # out-projection with residual-add + LayerNorm fused in the matmul epilogue
    out = pallas_linear_res_ln(o.reshape(N * Tq, E), p["out_w"], p["out_b"],
                               xq_flat, ln["g"], ln["b"])
    return out.reshape(N, Tq, E)


def feed_forward_block(x_flat, p):
    h = pallas_linear(x_flat, p["ff1_w"], p["ff1_b"], activation="relu")
    return pallas_linear_res_ln(h, p["ff2_w"], p["ff2_b"], x_flat,
                                p["ln_ff"]["g"], p["ln_ff"]["b"])


def encoder_layer_fwd(x, p, nhead):
    N, S, E = x.shape
    x = multi_head_attention(x, x, p["self_attn"], nhead, p["ln1"])
    xf = feed_forward_block(x.reshape(N * S, E),
                            dict(ff1_w=p["ff1_w"], ff1_b=p["ff1_b"],
                                 ff2_w=p["ff2_w"], ff2_b=p["ff2_b"], ln_ff=p["ln2"]))
    return xf.reshape(N, S, E)


def decoder_layer_fwd(y, memory, p, nhead):
    N, T, E = y.shape
    y = multi_head_attention(y, y, p["self_attn"], nhead, p["ln1"], causal=True)
    y = multi_head_attention(y, memory, p["cross_attn"], nhead, p["ln2"])
    yf = feed_forward_block(y.reshape(N * T, E),
                            dict(ff1_w=p["ff1_w"], ff1_b=p["ff1_b"],
                                 ff2_w=p["ff2_w"], ff2_b=p["ff2_b"], ln_ff=p["ln3"]))
    return yf.reshape(N, T, E)


def positional_encoding_table(max_len, d_model):
    position = jnp.arange(max_len, dtype=jnp.float32)[:, None]
    div_term = jnp.exp(jnp.arange(0, d_model, 2, dtype=jnp.float32)
                       * (-math.log(10000.0) / d_model))
    pe = jnp.zeros((max_len, d_model), jnp.float32)
    pe = pe.at[:, 0::2].set(jnp.sin(position * div_term))
    pe = pe.at[:, 1::2].set(jnp.cos(position * div_term))
    return pe


def language_transformer_forward(params, src, tgt, d_model, nhead, pe):
    """src: (S, N, E) f32 (seq-first, per spec), tgt: (T, N) int32 -> logits (N, T, vocab) f32."""
    S, N, E = src.shape
    T = tgt.shape[0]
    compute_dtype = params["fc_w"].dtype   # bf16

    # Faithful to the PyTorch module: PositionalEncoding slices pe with x.size(1), which for
    # a seq-first (L, N, E) tensor is the BATCH axis -> each batch row n gets pe[n] at every
    # sequence position.  In the batch-first body this is x[n, :, :] + pe[n].
    # TODO(synk): dropout in PositionalEncoding / Transformer runs as eval-mode identity.
    pe_b = pe[:N][:, None, :]                                               # (N, 1, E)
    src_b = (src.transpose(1, 0, 2) * math.sqrt(d_model) + pe_b).astype(compute_dtype)
    tgt_emb = jnp.take(params["embed"], tgt.T, axis=0)                      # (N, T, E) gather = glue
    tgt_b = (tgt_emb * math.sqrt(d_model) + pe_b).astype(compute_dtype)

    # encoder stack + final encoder norm
    x = src_b
    for lp in params["enc"]:
        x = encoder_layer_fwd(x, lp, nhead)
    memory = pallas_layernorm(x.reshape(N * S, E),
                              params["enc_norm"]["g"],
                              params["enc_norm"]["b"]).reshape(N, S, E)

    # decoder stack (causal self-attn mask generated in-kernel) + final decoder norm
    y = tgt_b
    for lp in params["dec"]:
        y = decoder_layer_fwd(y, memory, lp, nhead)
    y = pallas_layernorm(y.reshape(N * T, E),
                         params["dec_norm"]["g"], params["dec_norm"]["b"])

    # batch-first body -> output is already (N, T, E); vocab projection in f32 logits
    logits = pallas_linear(y, params["fc_w"], params["fc_b"], out_dtype=jnp.float32)
    return logits.reshape(N, T, -1)


# ------------------------- deterministic parameter init -------------------------
# Weights are PRE-TRANSPOSED (in_features, out_features) and stored in bf16 (MXU-native);
# biases and LayerNorm params stay f32 (added/applied in the f32 epilogue).

def init_params(key, vocab_size, d_model, nhead, n_enc, n_dec, dff, dtype=jnp.bfloat16):
    keys = iter(jax.random.split(key, 512))

    def dense(shape, scale=0.02):
        return (jax.random.normal(next(keys), shape, jnp.float32) * scale).astype(dtype)

    def attn_params():
        return dict(q_w=dense((d_model, d_model)),
                    q_b=jnp.zeros((d_model,), jnp.float32),
                    kv_w=dense((d_model, 2 * d_model)),
                    kv_b=jnp.zeros((2 * d_model,), jnp.float32),
                    out_w=dense((d_model, d_model)),
                    out_b=jnp.zeros((d_model,), jnp.float32))

    def ln_params():
        return dict(g=jnp.ones((d_model,), jnp.float32),
                    b=jnp.zeros((d_model,), jnp.float32))

    def enc_layer():
        return dict(self_attn=attn_params(),
                    ff1_w=dense((d_model, dff)), ff1_b=jnp.zeros((dff,), jnp.float32),
                    ff2_w=dense((dff, d_model)), ff2_b=jnp.zeros((d_model,), jnp.float32),
                    ln1=ln_params(), ln2=ln_params())

    def dec_layer():
        d = enc_layer()
        d["cross_attn"] = attn_params()
        d["ln3"] = ln_params()
        return d

    return dict(
        embed=jax.random.normal(next(keys), (vocab_size, d_model), jnp.float32),
        enc=[enc_layer() for _ in range(n_enc)],
        dec=[dec_layer() for _ in range(n_dec)],
        enc_norm=ln_params(),
        dec_norm=ln_params(),
        fc_w=dense((d_model, vocab_size)),
        fc_b=jnp.zeros((vocab_size,), jnp.float32),
    )


# ------------------------- demo -------------------------

if __name__ == "__main__":
    vocab_size, d_model, nhead = 64, 32, 4
    num_encoder_layers, num_decoder_layers = 2, 2
    dim_feedforward, max_seq_length = 64, 100
    S, T, N = 8, 8, 2   # src seq len, tgt seq len, batch

    key = jax.random.PRNGKey(0)
    kp, ks, kt = jax.random.split(key, 3)

    params = init_params(kp, vocab_size, d_model, nhead,
                         num_encoder_layers, num_decoder_layers, dim_feedforward)
    pe = positional_encoding_table(max_seq_length, d_model)

    src = jax.random.normal(ks, (S, N, d_model), jnp.float32)   # (W, N, C)
    tgt = jax.random.randint(kt, (T, N), 0, vocab_size)         # (T, N) tokens

    fwd = jax.jit(language_transformer_forward, static_argnums=(3, 4))
    out = fwd(params, src, tgt, d_model, nhead, pe)
    out = jax.block_until_ready(out)

    assert out.shape == (N, T, vocab_size), out.shape
    assert bool(jnp.all(jnp.isfinite(out)))
    print("KERNEL_OK")
</pallas_src>

<mosaic_0001>
module attributes {stable_mosaic.version = 11 : i64} {
  func.func @_linear_kernel(%arg0: i32, %arg1: i32, %arg2: i32, %arg3: memref<16x32xbf16, #tpu.memory_space<vmem>>, %arg4: memref<32x64xbf16, #tpu.memory_space<vmem>>, %arg5: memref<1x64xf32, #tpu.memory_space<vmem>>, %arg6: memref<16x64xbf16, #tpu.memory_space<vmem>>, %arg7: memref<16x64xf32, #tpu.memory_space<vmem>>) attributes {dimension_semantics = [#tpu.dimension_semantics<parallel>, #tpu.dimension_semantics<parallel>, #tpu.dimension_semantics<arbitrary>], iteration_bounds = array<i64: 1, 1, 1>, scalar_prefetch = 0 : i64, scratch_operands = 1 : i64, tpu.core_type = #tpu.core_type<tc>, window_params = [{transform_indices = @transform_0, window_bounds = array<i64: 16, 32>}, {transform_indices = @transform_1, window_bounds = array<i64: 32, 64>}, {transform_indices = @transform_2, window_bounds = array<i64: 1, 64>}, {transform_indices = @transform_3, window_bounds = array<i64: 16, 64>}]} {
    %c0_i32 = arith.constant 0 : i32
    %0 = arith.cmpi eq, %arg2, %c0_i32 : i32
    %1 = arith.extui %0 : i1 to i32
    %c0_i32_0 = arith.constant 0 : i32
    %2 = arith.cmpi ne, %1, %c0_i32_0 : i32
    scf.if %2 {
      %cst_10 = arith.constant 0.000000e+00 : f32
      %12 = vector.broadcast %cst_10 : f32 to vector<16x64xf32>
      %c0_11 = arith.constant 0 : index
      %c0_12 = arith.constant 0 : index
      %13 = vector.load %arg7[%c0_11, %c0_12] : memref<16x64xf32, #tpu.memory_space<vmem>>, vector<16x64xf32>
      tpu.vector_store %arg7[%c0_11, %c0_12], %12 {strides = array<i32>} : memref<16x64xf32, #tpu.memory_space<vmem>>, vector<16x64xf32>,
    } else {
    }
    %c0 = arith.constant 0 : index
    %c0_1 = arith.constant 0 : index
    %3 = vector.load %arg3[%c0, %c0_1] : memref<16x32xbf16, #tpu.memory_space<vmem>>, vector<16x32xbf16>
    %c0_2 = arith.constant 0 : index
    %c0_3 = arith.constant 0 : index
    %4 = vector.load %arg7[%c0_2, %c0_3] : memref<16x64xf32, #tpu.memory_space<vmem>>, vector<16x64xf32>
    %c0_4 = arith.constant 0 : index
    %c0_5 = arith.constant 0 : index
    %5 = vector.load %arg4[%c0_4, %c0_5] : memref<32x64xbf16, #tpu.memory_space<vmem>>, vector<32x64xbf16>
    %cst = arith.constant dense<0.000000e+00> : vector<16x64xf32>
    %6 = tpu.matmul %3, %5, %cst {dimension_numbers = #tpu.dot_dimension_numbers<[1], [0], [0], [1], [0, 0, 1, 1], [], []>} : vector<16x32xbf16>, vector<32x64xbf16>, vector<16x64xf32> -> vector<16x64xf32>
    %7 = arith.addf %4, %6 : vector<16x64xf32>
    %c0_6 = arith.constant 0 : index
    %c0_7 = arith.constant 0 : index
    %8 = vector.load %arg7[%c0_6, %c0_7] : memref<16x64xf32, #tpu.memory_space<vmem>>, vector<16x64xf32>
    tpu.vector_store %arg7[%c0_6, %c0_7], %7 {strides = array<i32>} : memref<16x64xf32, #tpu.memory_space<vmem>>, vector<16x64xf32>,
    %c0_i32_8 = arith.constant 0 : i32
    %9 = arith.cmpi eq, %arg2, %c0_i32_8 : i32
    %10 = arith.extui %9 : i1 to i32
    %c0_i32_9 = arith.constant 0 : i32
    %11 = arith.cmpi ne, %10, %c0_i32_9 : i32
    scf.if %11 {
      %c0_10 = arith.constant 0 : index
      %c0_11 = arith.constant 0 : index
      %12 = vector.load %arg7[%c0_10, %c0_11] : memref<16x64xf32, #tpu.memory_space<vmem>>, vector<16x64xf32>
      %c0_12 = arith.constant 0 : index
      %c0_13 = arith.constant 0 : index
      %13 = vector.load %arg5[%c0_12, %c0_13] : memref<1x64xf32, #tpu.memory_space<vmem>>, vector<1x64xf32>
      %14 = vector.broadcast %13 : vector<1x64xf32> to vector<16x64xf32>
      %15 = arith.addf %12, %14 : vector<16x64xf32>
      %16 = arith.truncf %15 : vector<16x64xf32> to vector<16x64xbf16>
      %c0_14 = arith.constant 0 : index
      %c0_15 = arith.constant 0 : index
      %17 = vector.load %arg6[%c0_14, %c0_15] : memref<16x64xbf16, #tpu.memory_space<vmem>>, vector<16x64xbf16>
      tpu.vector_store %arg6[%c0_14, %c0_15], %16 {strides = array<i32>} : memref<16x64xbf16, #tpu.memory_space<vmem>>, vector<16x64xbf16>,
    } else {
    }
    return
  }
  func.func @transform_0(%arg0: i32, %arg1: i32, %arg2: i32) -> (i32, i32) {
    %c0_i32 = arith.constant 0 : i32
    return %arg0, %arg2 : i32, i32
  }
  func.func @transform_1(%arg0: i32, %arg1: i32, %arg2: i32) -> (i32, i32) {
    %c0_i32 = arith.constant 0 : i32
    return %arg2, %arg1 : i32, i32
  }
  func.func @transform_2(%arg0: i32, %arg1: i32, %arg2: i32) -> (i32, i32) {
    %c0_i32 = arith.constant 0 : i32
    %c0_i32_0 = arith.constant 0 : i32
    return %c0_i32, %arg1 : i32, i32
  }
  func.func @transform_3(%arg0: i32, %arg1: i32, %arg2: i32) -> (i32, i32) {
    %c0_i32 = arith.constant 0 : i32
    return %arg0, %arg1 : i32, i32
  }
}

module attributes {stable_mosaic.version = 11 : i64} {
  func.func @_linear_kernel(%arg0: i32, %arg1: i32, %arg2: i32, %arg3: memref<16x32xbf16, #tpu.memory_space<vmem>>, %arg4: memref<32x32xbf16, #tpu.memory_space<vmem>>, %arg5: memref<1x32xf32, #tpu.memory_space<vmem>>, %arg6: memref<16x32xbf16, #tpu.memory_space<vmem>>, %arg7: memref<16x32xf32, #tpu.memory_space<vmem>>) attributes {dimension_semantics = [#tpu.dimension_semantics<parallel>, #tpu.dimension_semantics<parallel>, #tpu.dimension_semantics<arbitrary>], iteration_bounds = array<i64: 1, 1, 1>, scalar_prefetch = 0 : i64, scratch_operands = 1 : i64, tpu.core_type = #tpu.core_type<tc>, window_params = [{transform_indices = @transform_0, window_bounds = array<i64: 16, 32>}, {transform_indices = @transform_1, window_bounds = array<i64: 32, 32>}, {transform_indices = @transform_2, window_bounds = array<i64: 1, 32>}, {transform_indices = @transform_3, window_bounds = array<i64: 16, 32>}]} {
    %c0_i32 = arith.constant 0 : i32
    %0 = arith.cmpi eq, %arg2, %c0_i32 : i32
    %1 = arith.extui %0 : i1 to i32
    %c0_i32_0 = arith.constant 0 : i32
    %2 = arith.cmpi ne, %1, %c0_i32_0 : i32
    scf.if %2 {
      %cst_10 = arith.constant 0.000000e+00 : f32
      %12 = vector.broadcast %cst_10 : f32 to vector<16x32xf32>
      %c0_11 = arith.constant 0 : index
      %c0_12 = arith.constant 0 : index
      %13 = vector.load %arg7[%c0_11, %c0_12] : memref<16x32xf32, #tpu.memory_space<vmem>>, vector<16x32xf32>
      tpu.vector_store %arg7[%c0_11, %c0_12], %12 {strides = array<i32>} : memref<16x32xf32, #tpu.memory_space<vmem>>, vector<16x32xf32>,
    } else {
    }
    %c0 = arith.constant 0 : index
    %c0_1 = arith.constant 0 : index
    %3 = vector.load %arg3[%c0, %c0_1] : memref<16x32xbf16, #tpu.memory_space<vmem>>, vector<16x32xbf16>
    %c0_2 = arith.constant 0 : index
    %c0_3 = arith.constant 0 : index
    %4 = vector.load %arg7[%c0_2, %c0_3] : memref<16x32xf32, #tpu.memory_space<vmem>>, vector<16x32xf32>
    %c0_4 = arith.constant 0 : index
    %c0_5 = arith.constant 0 : index
    %5 = vector.load %arg4[%c0_4, %c0_5] : memref<32x32xbf16, #tpu.memory_space<vmem>>, vector<32x32xbf16>
    %cst = arith.constant dense<0.000000e+00> : vector<16x32xf32>
    %6 = tpu.matmul %3, %5, %cst {dimension_numbers = #tpu.dot_dimension_numbers<[1], [0], [0], [1], [0, 0, 1, 1], [], []>} : vector<16x32xbf16>, vector<32x32xbf16>, vector<16x32xf32> -> vector<16x32xf32>
    %7 = arith.addf %4, %6 : vector<16x32xf32>
    %c0_6 = arith.constant 0 : index
    %c0_7 = arith.constant 0 : index
    %8 = vector.load %arg7[%c0_6, %c0_7] : memref<16x32xf32, #tpu.memory_space<vmem>>, vector<16x32xf32>
    tpu.vector_store %arg7[%c0_6, %c0_7], %7 {strides = array<i32>} : memref<16x32xf32, #tpu.memory_space<vmem>>, vector<16x32xf32>,
    %c0_i32_8 = arith.constant 0 : i32
    %9 = arith.cmpi eq, %arg2, %c0_i32_8 : i32
    %10 = arith.extui %9 : i1 to i32
    %c0_i32_9 = arith.constant 0 : i32
    %11 = arith.cmpi ne, %10, %c0_i32_9 : i32
    scf.if %11 {
      %c0_10 = arith.constant 0 : index
      %c0_11 = arith.constant 0 : index
      %12 = vector.load %arg7[%c0_10, %c0_11] : memref<16x32xf32, #tpu.memory_space<vmem>>, vector<16x32xf32>
      %c0_12 = arith.constant 0 : index
      %c0_13 = arith.constant 0 : index
      %13 = vector.load %arg5[%c0_12, %c0_13] : memref<1x32xf32, #tpu.memory_space<vmem>>, vector<1x32xf32>
      %14 = vector.broadcast %13 : vector<1x32xf32> to vector<16x32xf32>
      %15 = arith.addf %12, %14 : vector<16x32xf32>
      %16 = arith.truncf %15 : vector<16x32xf32> to vector<16x32xbf16>
      %c0_14 = arith.constant 0 : index
      %c0_15 = arith.constant 0 : index
      %17 = vector.load %arg6[%c0_14, %c0_15] : memref<16x32xbf16, #tpu.memory_space<vmem>>, vector<16x32xbf16>
      tpu.vector_store %arg6[%c0_14, %c0_15], %16 {strides = array<i32>} : memref<16x32xbf16, #tpu.memory_space<vmem>>, vector<16x32xbf16>,
    } else {
    }
    return
  }
  func.func @transform_0(%arg0: i32, %arg1: i32, %arg2: i32) -> (i32, i32) {
    %c0_i32 = arith.constant 0 : i32
    return %arg0, %arg2 : i32, i32
  }
  func.func @transform_1(%arg0: i32, %arg1: i32, %arg2: i32) -> (i32, i32) {
    %c0_i32 = arith.constant 0 : i32
    return %arg2, %arg1 : i32, i32
  }
  func.func @transform_2(%arg0: i32, %arg1: i32, %arg2: i32) -> (i32, i32) {
    %c0_i32 = arith.constant 0 : i32
    %c0_i32_0 = arith.constant 0 : i32
    return %c0_i32, %arg1 : i32, i32
  }
  func.func @transform_3(%arg0: i32, %arg1: i32, %arg2: i32) -> (i32, i32) {
    %c0_i32 = arith.constant 0 : i32
    return %arg0, %arg1 : i32, i32
  }
}

module attributes {stable_mosaic.version = 11 : i64} {
  func.func @_attn_kernel(%arg0: i32, %arg1: i32, %arg2: memref<1x8x32xbf16, #tpu.memory_space<vmem>>, %arg3: memref<1x8x64xbf16, #tpu.memory_space<vmem>>, %arg4: memref<1x8x32xbf16, #tpu.memory_space<vmem>>, %arg5: memref<8x4xf32, #tpu.memory_space<vmem>>, %arg6: memref<8x4xf32, #tpu.memory_space<vmem>>, %arg7: memref<8x32xf32, #tpu.memory_space<vmem>>) attributes {dimension_semantics = [#tpu.dimension_semantics<parallel>, #tpu.dimension_semantics<arbitrary>], iteration_bounds = array<i64: 2, 1>, scalar_prefetch = 0 : i64, scratch_operands = 3 : i64, tpu.core_type = #tpu.core_type<tc>, window_params = [{transform_indices = @transform_0, window_bounds = array<i64: 1, 8, 32>}, {transform_indices = @transform_1, window_bounds = array<i64: 1, 8, 64>}, {transform_indices = @transform_2, window_bounds = array<i64: 1, 8, 32>}]} {
    %c0_i32 = arith.constant 0 : i32
    %0 = arith.cmpi eq, %arg1, %c0_i32 : i32
    %1 = arith.extui %0 : i1 to i32
    %c0_i32_0 = arith.constant 0 : i32
    %2 = arith.cmpi ne, %1, %c0_i32_0 : i32
    scf.if %2 {
      %cst_99 = arith.constant -1.000000e+30 : f32
      %148 = vector.broadcast %cst_99 : f32 to vector<8x4xf32>
      %c0_100 = arith.constant 0 : index
      %c0_101 = arith.constant 0 : index
      %149 = vector.load %arg5[%c0_100, %c0_101] : memref<8x4xf32, #tpu.memory_space<vmem>>, vector<8x4xf32>
      tpu.vector_store %arg5[%c0_100, %c0_101], %148 {strides = array<i32>} : memref<8x4xf32, #tpu.memory_space<vmem>>, vector<8x4xf32>,
      %cst_102 = arith.constant 0.000000e+00 : f32
      %150 = vector.broadcast %cst_102 : f32 to vector<8x4xf32>
      %c0_103 = arith.constant 0 : index
      %c0_104 = arith.constant 0 : index
      %151 = vector.load %arg6[%c0_103, %c0_104] : memref<8x4xf32, #tpu.memory_space<vmem>>, vector<8x4xf32>
      tpu.vector_store %arg6[%c0_103, %c0_104], %150 {strides = array<i32>} : memref<8x4xf32, #tpu.memory_space<vmem>>, vector<8x4xf32>,
      %cst_105 = arith.constant 0.000000e+00 : f32
      %152 = vector.broadcast %cst_105 : f32 to vector<8x32xf32>
      %c0_106 = arith.constant 0 : index
      %c0_107 = arith.constant 0 : index
      %153 = vector.load %arg7[%c0_106, %c0_107] : memref<8x32xf32, #tpu.memory_space<vmem>>, vector<8x32xf32>
      tpu.vector_store %arg7[%c0_106, %c0_107], %152 {strides = array<i32>} : memref<8x32xf32, #tpu.memory_space<vmem>>, vector<8x32xf32>,
    } else {
    }
    %3 = tpu.iota {dimensions = array<i32: 0>} : vector<8x8xi32>
    %4 = tpu.iota {dimensions = array<i32: 1>} : vector<8x8xi32>
    %c8_i32 = arith.constant 8 : i32
    %5 = arith.muli %arg1, %c8_i32 : i32
    %6 = vector.broadcast %5 : i32 to vector<8x8xi32>
    %7 = arith.addi %4, %6 : vector<8x8xi32>
    %8 = arith.cmpi sle, %7, %3 : vector<8x8xi32>
    %c0 = arith.constant 0 : index
    %c0_1 = arith.constant 0 : index
    %c0_2 = arith.constant 0 : index
    %9 = vector.load %arg2[%c0, %c0_1, %c0_2] : memref<1x8x32xbf16, #tpu.memory_space<vmem>>, vector<1x8x8xbf16>
    %10 = vector.shape_cast %9 : vector<1x8x8xbf16> to vector<8x8xbf16>
    %c0_3 = arith.constant 0 : index
    %c0_4 = arith.constant 0 : index
    %c0_5 = arith.constant 0 : index
    %11 = vector.load %arg3[%c0_3, %c0_4, %c0_5] : memref<1x8x64xbf16, #tpu.memory_space<vmem>>, vector<1x8x8xbf16>
    %12 = vector.shape_cast %11 : vector<1x8x8xbf16> to vector<8x8xbf16>
    %c0_6 = arith.constant 0 : index
    %c0_7 = arith.constant 0 : index
    %c32 = arith.constant 32 : index
    %13 = vector.load %arg3[%c0_6, %c0_7, %c32] : memref<1x8x64xbf16, #tpu.memory_space<vmem>>, vector<1x8x8xbf16>
    %14 = vector.shape_cast %13 : vector<1x8x8xbf16> to vector<8x8xbf16>
    %cst = arith.constant dense<0.000000e+00> : vector<8x8xf32>
    %15 = tpu.matmul %10, %12, %cst {dimension_numbers = #tpu.dot_dimension_numbers<[1], [1], [0], [0], [0, 0, 1, 0], [], []>} : vector<8x8xbf16>, vector<8x8xbf16>, vector<8x8xf32> -> vector<8x8xf32>
    %cst_8 = arith.constant 0.353553385 : f32
    %16 = vector.broadcast %cst_8 : f32 to vector<8x8xf32>
    %17 = arith.mulf %15, %16 : vector<8x8xf32>
    %cst_9 = arith.constant -1.000000e+30 : f32
    %18 = vector.broadcast %cst_9 : f32 to vector<8x8xf32>
    %19 = arith.select %8, %17, %18 : vector<8x8xi1>, vector<8x8xf32>
    %c0_10 = arith.constant 0 : index
    %c0_11 = arith.constant 0 : index
    %20 = vector.load %arg5[%c0_10, %c0_11] : memref<8x4xf32, #tpu.memory_space<vmem>>, vector<8x1xf32>
    %cst_12 = arith.constant dense<0xFF800000> : vector<8xf32>
    %21 = vector.multi_reduction <maximumf>, %19, %cst_12 [1] : vector<8x8xf32> to vector<8xf32>
    %22 = vector.shape_cast %21 : vector<8xf32> to vector<8x1xf32>
    %23 = arith.maximumf %20, %22 : vector<8x1xf32>
    %24 = arith.subf %20, %23 : vector<8x1xf32>
    %25 = math.exp %24 : vector<8x1xf32>
    %26 = vector.broadcast %23 : vector<8x1xf32> to vector<8x8xf32>
    %27 = arith.subf %19, %26 : vector<8x8xf32>
    %28 = math.exp %27 : vector<8x8xf32>
    %c0_13 = arith.constant 0 : index
    %c0_14 = arith.constant 0 : index
    %29 = vector.load %arg6[%c0_13, %c0_14] : memref<8x4xf32, #tpu.memory_space<vmem>>, vector<8x1xf32>
    %30 = arith.mulf %25, %29 : vector<8x1xf32>
    %cst_15 = arith.constant dense<0.000000e+00> : vector<8xf32>
    %31 = vector.multi_reduction <add>, %28, %cst_15 [1] : vector<8x8xf32> to vector<8xf32>
    %32 = vector.shape_cast %31 : vector<8xf32> to vector<8x1xf32>
    %33 = arith.addf %30, %32 : vector<8x1xf32>
    %c0_16 = arith.constant 0 : index
    %c0_17 = arith.constant 0 : index
    %34 = vector.load %arg6[%c0_16, %c0_17] : memref<8x4xf32, #tpu.memory_space<vmem>>, vector<8x1xf32>
    tpu.vector_store %arg6[%c0_16, %c0_17], %33 {strides = array<i32>} : memref<8x4xf32, #tpu.memory_space<vmem>>, vector<8x1xf32>,
    %35 = arith.truncf %28 : vector<8x8xf32> to vector<8x8xbf16>
    %cst_18 = arith.constant dense<0.000000e+00> : vector<8x8xf32>
    %36 = tpu.matmul %35, %14, %cst_18 {dimension_numbers = #tpu.dot_dimension_numbers<[1], [0], [0], [1], [0, 0, 1, 1], [], []>} : vector<8x8xbf16>, vector<8x8xbf16>, vector<8x8xf32> -> vector<8x8xf32>
    %c0_19 = arith.constant 0 : index
    %c0_20 = arith.constant 0 : index
    %37 = vector.load %arg7[%c0_19, %c0_20] : memref<8x32xf32, #tpu.memory_space<vmem>>, vector<8x8xf32>
    %38 = vector.broadcast %25 : vector<8x1xf32> to vector<8x8xf32>
    %39 = arith.mulf %38, %37 : vector<8x8xf32>
    %40 = arith.addf %39, %36 : vector<8x8xf32>
    %c0_21 = arith.constant 0 : index
    %c0_22 = arith.constant 0 : index
    %41 = vector.load %arg7[%c0_21, %c0_22] : memref<8x32xf32, #tpu.memory_space<vmem>>, vector<8x8xf32>
    tpu.vector_store %arg7[%c0_21, %c0_22], %40 {strides = array<i32>} : memref<8x32xf32, #tpu.memory_space<vmem>>, vector<8x8xf32>,
    %c0_23 = arith.constant 0 : index
    %c0_24 = arith.constant 0 : index
    %42 = vector.load %arg5[%c0_23, %c0_24] : memref<8x4xf32, #tpu.memory_space<vmem>>, vector<8x1xf32>
    tpu.vector_store %arg5[%c0_23, %c0_24], %23 {strides = array<i32>} : memref<8x4xf32, #tpu.memory_space<vmem>>, vector<8x1xf32>,
    %c0_25 = arith.constant 0 : index
    %c0_26 = arith.constant 0 : index
    %c8 = arith.constant 8 : index
    %43 = vector.load %arg2[%c0_25, %c0_26, %c8] : memref<1x8x32xbf16, #tpu.memory_space<vmem>>, vector<1x8x8xbf16>
    %44 = vector.shape_cast %43 : vector<1x8x8xbf16> to vector<8x8xbf16>
    %c0_27 = arith.constant 0 : index
    %c0_28 = arith.constant 0 : index
    %c8_29 = arith.constant 8 : index
    %45 = vector.load %arg3[%c0_27, %c0_28, %c8_29] : memref<1x8x64xbf16, #tpu.memory_space<vmem>>, vector<1x8x8xbf16>
    %46 = vector.shape_cast %45 : vector<1x8x8xbf16> to vector<8x8xbf16>
    %c0_30 = arith.constant 0 : index
    %c0_31 = arith.constant 0 : index
    %c40 = arith.constant 40 : index
    %47 = vector.load %arg3[%c0_30, %c0_31, %c40] : memref<1x8x64xbf16, #tpu.memory_space<vmem>>, vector<1x8x8xbf16>
    %48 = vector.shape_cast %47 : vector<1x8x8xbf16> to vector<8x8xbf16>
    %cst_32 = arith.constant dense<0.000000e+00> : vector<8x8xf32>
    %49 = tpu.matmul %44, %46, %cst_32 {dimension_numbers = #tpu.dot_dimension_numbers<[1], [1], [0], [0], [0, 0, 1, 0], [], []>} : vector<8x8xbf16>, vector<8x8xbf16>, vector<8x8xf32> -> vector<8x8xf32>
    %cst_33 = arith.constant 0.353553385 : f32
    %50 = vector.broadcast %cst_33 : f32 to vector<8x8xf32>
    %51 = arith.mulf %49, %50 : vector<8x8xf32>
    %cst_34 = arith.constant -1.000000e+30 : f32
    %52 = vector.broadcast %cst_34 : f32 to vector<8x8xf32>
    %53 = arith.select %8, %51, %52 : vector<8x8xi1>, vector<8x8xf32>
    %c0_35 = arith.constant 0 : index
    %c1 = arith.constant 1 : index
    %54 = vector.load %arg5[%c0_35, %c1] : memref<8x4xf32, #tpu.memory_space<vmem>>, vector<8x1xf32>
    %cst_36 = arith.constant dense<0xFF800000> : vector<8xf32>
    %55 = vector.multi_reduction <maximumf>, %53, %cst_36 [1] : vector<8x8xf32> to vector<8xf32>
    %56 = vector.shape_cast %55 : vector<8xf32> to vector<8x1xf32>
    %57 = arith.maximumf %54, %56 : vector<8x1xf32>
    %58 = arith.subf %54, %57 : vector<8x1xf32>
    %59 = math.exp %58 : vector<8x1xf32>
    %60 = vector.broadcast %57 : vector<8x1xf32> to vector<8x8xf32>
    %61 = arith.subf %53, %60 : vector<8x8xf32>
    %62 = math.exp %61 : vector<8x8xf32>
    %c0_37 = arith.constant 0 : index
    %c1_38 = arith.constant 1 : index
    %63 = vector.load %arg6[%c0_37, %c1_38] : memref<8x4xf32, #tpu.memory_space<vmem>>, vector<8x1xf32>
    %64 = arith.mulf %59, %63 : vector<8x1xf32>
    %cst_39 = arith.constant dense<0.000000e+00> : vector<8xf32>
    %65 = vector.multi_reduction <add>, %62, %cst_39 [1] : vector<8x8xf32> to vector<8xf32>
    %66 = vector.shape_cast %65 : vector<8xf32> to vector<8x1xf32>
    %67 = arith.addf %64, %66 : vector<8x1xf32>
    %c0_40 = arith.constant 0 : index
    %c1_41 = arith.constant 1 : index
    %68 = vector.load %arg6[%c0_40, %c1_41] : memref<8x4xf32, #tpu.memory_space<vmem>>, vector<8x1xf32>
    tpu.vector_store %arg6[%c0_40, %c1_41], %67 {strides = array<i32>} : memref<8x4xf32, #tpu.memory_space<vmem>>, vector<8x1xf32>,
    %69 = arith.truncf %62 : vector<8x8xf32> to vector<8x8xbf16>
    %cst_42 = arith.constant dense<0.000000e+00> : vector<8x8xf32>
    %70 = tpu.matmul %69, %48, %cst_42 {dimension_numbers = #tpu.dot_dimension_numbers<[1], [0], [0], [1], [0, 0, 1, 1], [], []>} : vector<8x8xbf16>, vector<8x8xbf16>, vector<8x8xf32> -> vector<8x8xf32>
    %c0_43 = arith.constant 0 : index
    %c8_44 = arith.constant 8 : index
    %71 = vector.load %arg7[%c0_43, %c8_44] : memref<8x32xf32, #tpu.memory_space<vmem>>, vector<8x8xf32>
    %72 = vector.broadcast %59 : vector<8x1xf32> to vector<8x8xf32>
    %73 = arith.mulf %72, %71 : vector<8x8xf32>
    %74 = arith.addf %73, %70 : vector<8x8xf32>
    %c0_45 = arith.constant 0 : index
    %c8_46 = arith.constant 8 : index
    %75 = vector.load %arg7[%c0_45, %c8_46] : memref<8x32xf32, #tpu.memory_space<vmem>>, vector<8x8xf32>
    tpu.vector_store %arg7[%c0_45, %c8_46], %74 {strides = array<i32>} : memref<8x32xf32, #tpu.memory_space<vmem>>, vector<8x8xf32>,
    %c0_47 = arith.constant 0 : index
    %c1_48 = arith.constant 1 : index
    %76 = vector.load %arg5[%c0_47, %c1_48] : memref<8x4xf32, #tpu.memory_space<vmem>>, vector<8x1xf32>
    tpu.vector_store %arg5[%c0_47, %c1_48], %57 {strides = array<i32>} : memref<8x4xf32, #tpu.memory_space<vmem>>, vector<8x1xf32>,
    %c0_49 = arith.constant 0 : index
    %c0_50 = arith.constant 0 : index
    %c16 = arith.constant 16 : index
    %77 = vector.load %arg2[%c0_49, %c0_50, %c16] : memref<1x8x32xbf16, #tpu.memory_space<vmem>>, vector<1x8x8xbf16>
    %78 = vector.shape_cast %77 : vector<1x8x8xbf16> to vector<8x8xbf16>
    %c0_51 = arith.constant 0 : index
    %c0_52 = arith.constant 0 : index
    %c16_53 = arith.constant 16 : index
    %79 = vector.load %arg3[%c0_51, %c0_52, %c16_53] : memref<1x8x64xbf16, #tpu.memory_space<vmem>>, vector<1x8x8xbf16>
    %80 = vector.shape_cast %79 : vector<1x8x8xbf16> to vector<8x8xbf16>
    %c0_54 = arith.constant 0 : index
    %c0_55 = arith.constant 0 : index
    %c48 = arith.constant 48 : index
    %81 = vector.load %arg3[%c0_54, %c0_55, %c48] : memref<1x8x64xbf16, #tpu.memory_space<vmem>>, vector<1x8x8xbf16>
    %82 = vector.shape_cast %81 : vector<1x8x8xbf16> to vector<8x8xbf16>
    %cst_56 = arith.constant dense<0.000000e+00> : vector<8x8xf32>
    %83 = tpu.matmul %78, %80, %cst_56 {dimension_numbers = #tpu.dot_dimension_numbers<[1], [1], [0], [0], [0, 0, 1, 0], [], []>} : vector<8x8xbf16>, vector<8x8xbf16>, vector<8x8xf32> -> vector<8x8xf32>
    %cst_57 = arith.constant 0.353553385 : f32
    %84 = vector.broadcast %cst_57 : f32 to vector<8x8xf32>
    %85 = arith.mulf %83, %84 : vector<8x8xf32>
    %cst_58 = arith.constant -1.000000e+30 : f32
    %86 = vector.broadcast %cst_58 : f32 to vector<8x8xf32>
    %87 = arith.select %8, %85, %86 : vector<8x8xi1>, vector<8x8xf32>
    %c0_59 = arith.constant 0 : index
    %c2 = arith.constant 2 : index
    %88 = vector.load %arg5[%c0_59, %c2] : memref<8x4xf32, #tpu.memory_space<vmem>>, vector<8x1xf32>
    %cst_60 = arith.constant dense<0xFF800000> : vector<8xf32>
    %89 = vector.multi_reduction <maximumf>, %87, %cst_60 [1] : vector<8x8xf32> to vector<8xf32>
    %90 = vector.shape_cast %89 : vector<8xf32> to vector<8x1xf32>
    %91 = arith.maximumf %88, %90 : vector<8x1xf32>
    %92 = arith.subf %88, %91 : vector<8x1xf32>
    %93 = math.exp %92 : vector<8x1xf32>
    %94 = vector.broadcast %91 : vector<8x1xf32> to vector<8x8xf32>
    %95 = arith.subf %87, %94 : vector<8x8xf32>
    %96 = math.exp %95 : vector<8x8xf32>
    %c0_61 = arith.constant 0 : index
    %c2_62 = arith.constant 2 : index
    %97 = vector.load %arg6[%c0_61, %c2_62] : memref<8x4xf32, #tpu.memory_space<vmem>>, vector<8x1xf32>
    %98 = arith.mulf %93, %97 : vector<8x1xf32>
    %cst_63 = arith.constant dense<0.000000e+00> : vector<8xf32>
    %99 = vector.multi_reduction <add>, %96, %cst_63 [1] : vector<8x8xf32> to vector<8xf32>
    %100 = vector.shape_cast %99 : vector<8xf32> to vector<8x1xf32>
    %101 = arith.addf %98, %100 : vector<8x1xf32>
    %c0_64 = arith.constant 0 : index
    %c2_65 = arith.constant 2 : index
    %102 = vector.load %arg6[%c0_64, %c2_65] : memref<8x4xf32, #tpu.memory_space<vmem>>, vector<8x1xf32>
    tpu.vector_store %arg6[%c0_64, %c2_65], %101 {strides = array<i32>} : memref<8x4xf32, #tpu.memory_space<vmem>>, vector<8x1xf32>,
    %103 = arith.truncf %96 : vector<8x8xf32> to vector<8x8xbf16>
    %cst_66 = arith.constant dense<0.000000e+00> : vector<8x8xf32>
    %104 = tpu.matmul %103, %82, %cst_66 {dimension_numbers = #tpu.dot_dimension_numbers<[1], [0], [0], [1], [0, 0, 1, 1], [], []>} : vector<8x8xbf16>, vector<8x8xbf16>, vector<8x8xf32> -> vector<8x8xf32>
    %c0_67 = arith.constant 0 : index
    %c16_68 = arith.constant 16 : index
    %105 = vector.load %arg7[%c0_67, %c16_68] : memref<8x32xf32, #tpu.memory_space<vmem>>, vector<8x8xf32>
    %106 = vector.broadcast %93 : vector<8x1xf32> to vector<8x8xf32>
    %107 = arith.mulf %106, %105 : vector<8x8xf32>
    %108 = arith.addf %107, %104 : vector<8x8xf32>
    %c0_69 = arith.constant 0 : index
    %c16_70 = arith.constant 16 : index
    %109 = vector.load %arg7[%c0_69, %c16_70] : memref<8x32xf32, #tpu.memory_space<vmem>>, vector<8x8xf32>
    tpu.vector_store %arg7[%c0_69, %c16_70], %108 {strides = array<i32>} : memref<8x32xf32, #tpu.memory_space<vmem>>, vector<8x8xf32>,
    %c0_71 = arith.constant 0 : index
    %c2_72 = arith.constant 2 : index
    %110 = vector.load %arg5[%c0_71, %c2_72] : memref<8x4xf32, #tpu.memory_space<vmem>>, vector<8x1xf32>
    tpu.vector_store %arg5[%c0_71, %c2_72], %91 {strides = array<i32>} : memref<8x4xf32, #tpu.memory_space<vmem>>, vector<8x1xf32>,
    %c0_73 = arith.constant 0 : index
    %c0_74 = arith.constant 0 : index
    %c24 = arith.constant 24 : index
    %111 = vector.load %arg2[%c0_73, %c0_74, %c24] : memref<1x8x32xbf16, #tpu.memory_space<vmem>>, vector<1x8x8xbf16>
    %112 = vector.shape_cast %111 : vector<1x8x8xbf16> to vector<8x8xbf16>
    %c0_75 = arith.constant 0 : index
    %c0_76 = arith.constant 0 : index
    %c24_77 = arith.constant 24 : index
    %113 = vector.load %arg3[%c0_75, %c0_76, %c24_77] : memref<1x8x64xbf16, #tpu.memory_space<vmem>>, vector<1x8x8xbf16>
    %114 = vector.shape_cast %113 : vector<1x8x8xbf16> to vector<8x8xbf16>
    %c0_78 = arith.constant 0 : index
    %c0_79 = arith.constant 0 : index
    %c56 = arith.constant 56 : index
    %115 = vector.load %arg3[%c0_78, %c0_79, %c56] : memref<1x8x64xbf16, #tpu.memory_space<vmem>>, vector<1x8x8xbf16>
    %116 = vector.shape_cast %115 : vector<1x8x8xbf16> to vector<8x8xbf16>
    %cst_80 = arith.constant dense<0.000000e+00> : vector<8x8xf32>
    %117 = tpu.matmul %112, %114, %cst_80 {dimension_numbers = #tpu.dot_dimension_numbers<[1], [1], [0], [0], [0, 0, 1, 0], [], []>} : vector<8x8xbf16>, vector<8x8xbf16>, vector<8x8xf32> -> vector<8x8xf32>
    %cst_81 = arith.constant 0.353553385 : f32
    %118 = vector.broadcast %cst_81 : f32 to vector<8x8xf32>
    %119 = arith.mulf %117, %118 : vector<8x8xf32>
    %cst_82 = arith.constant -1.000000e+30 : f32
    %120 = vector.broadcast %cst_82 : f32 to vector<8x8xf32>
    %121 = arith.select %8, %119, %120 : vector<8x8xi1>, vector<8x8xf32>
    %c0_83 = arith.constant 0 : index
    %c3 = arith.constant 3 : index
    %122 = vector.load %arg5[%c0_83, %c3] : memref<8x4xf32, #tpu.memory_space<vmem>>, vector<8x1xf32>
    %cst_84 = arith.constant dense<0xFF800000> : vector<8xf32>
    %123 = vector.multi_reduction <maximumf>, %121, %cst_84 [1] : vector<8x8xf32> to vector<8xf32>
    %124 = vector.shape_cast %123 : vector<8xf32> to vector<8x1xf32>
    %125 = arith.maximumf %122, %124 : vector<8x1xf32>
    %126 = arith.subf %122, %125 : vector<8x1xf32>
    %127 = math.exp %126 : vector<8x1xf32>
    %128 = vector.broadcast %125 : vector<8x1xf32> to vector<8x8xf32>
    %129 = arith.subf %121, %128 : vector<8x8xf32>
    %130 = math.exp %129 : vector<8x8xf32>
    %c0_85 = arith.constant 0 : index
    %c3_86 = arith.constant 3 : index
    %131 = vector.load %arg6[%c0_85, %c3_86] : memref<8x4xf32, #tpu.memory_space<vmem>>, vector<8x1xf32>
    %132 = arith.mulf %127, %131 : vector<8x1xf32>
    %cst_87 = arith.constant dense<0.000000e+00> : vector<8xf32>
    %133 = vector.multi_reduction <add>, %130, %cst_87 [1] : vector<8x8xf32> to vector<8xf32>
    %134 = vector.shape_cast %133 : vector<8xf32> to vector<8x1xf32>
    %135 = arith.addf %132, %134 : vector<8x1xf32>
    %c0_88 = arith.constant 0 : index
    %c3_89 = arith.constant 3 : index
    %136 = vector.load %arg6[%c0_88, %c3_89] : memref<8x4xf32, #tpu.memory_space<vmem>>, vector<8x1xf32>
    tpu.vector_store %arg6[%c0_88, %c3_89], %135 {strides = array<i32>} : memref<8x4xf32, #tpu.memory_space<vmem>>, vector<8x1xf32>,
    %137 = arith.truncf %130 : vector<8x8xf32> to vector<8x8xbf16>
    %cst_90 = arith.constant dense<0.000000e+00> : vector<8x8xf32>
    %138 = tpu.matmul %137, %116, %cst_90 {dimension_numbers = #tpu.dot_dimension_numbers<[1], [0], [0], [1], [0, 0, 1, 1], [], []>} : vector<8x8xbf16>, vector<8x8xbf16>, vector<8x8xf32> -> vector<8x8xf32>
    %c0_91 = arith.constant 0 : index
    %c24_92 = arith.constant 24 : index
    %139 = vector.load %arg7[%c0_91, %c24_92] : memref<8x32xf32, #tpu.memory_space<vmem>>, vector<8x8xf32>
    %140 = vector.broadcast %127 : vector<8x1xf32> to vector<8x8xf32>
    %141 = arith.mulf %140, %139 : vector<8x8xf32>
    %142 = arith.addf %141, %138 : vector<8x8xf32>
    %c0_93 = arith.constant 0 : index
    %c24_94 = arith.constant 24 : index
    %143 = vector.load %arg7[%c0_93, %c24_94] : memref<8x32xf32, #tpu.memory_space<vmem>>, vector<8x8xf32>
    tpu.vector_store %arg7[%c0_93, %c24_94], %142 {strides = array<i32>} : memref<8x32xf32, #tpu.memory_space<vmem>>, vector<8x8xf32>,
    %c0_95 = arith.constant 0 : index
    %c3_96 = arith.constant 3 : index
    %144 = vector.load %arg5[%c0_95, %c3_96] : memref<8x4xf32, #tpu.memory_space<vmem>>, vector<8x1xf32>
    tpu.vector_store %arg5[%c0_95, %c3_96], %125 {strides = array<i32>} : memref<8x4xf32, #tpu.memory_space<vmem>>, vector<8x1xf32>,
    %c0_i32_97 = arith.constant 0 : i32
    %145 = arith.cmpi eq, %arg1, %c0_i32_97 : i32
    %146 = arith.extui %145 : i1 to i32
    %c0_i32_98 = arith.constant 0 : i32
    %147 = arith.cmpi ne, %146, %c0_i32_98 : i32
    scf.if %147 {
      %c0_99 = arith.constant 0 : index
      %c0_100 = arith.constant 0 : index
      %148 = vector.load %arg6[%c0_99, %c0_100] : memref<8x4xf32, #tpu.memory_space<vmem>>, vector<8x1xf32>
      %149 = tpu.reciprocal %148 {approx = true} : vector<8x1xf32> -> vector<8x1xf32>
      %c0_101 = arith.constant 0 : index
      %c0_102 = arith.constant 0 : index
      %150 = vector.load %arg7[%c0_101, %c0_102] : memref<8x32xf32, #tpu.memory_space<vmem>>, vector<8x8xf32>
      %151 = vector.broadcast %149 : vector<8x1xf32> to vector<8x8xf32>
      %152 = arith.mulf %150, %151 : vector<8x8xf32>
      %c0_103 = arith.constant 0 : index
      %c0_104 = arith.constant 0 : index
      %153 = vector.load %arg7[%c0_103, %c0_104] : memref<8x32xf32, #tpu.memory_space<vmem>>, vector<8x8xf32>
      tpu.vector_store %arg7[%c0_103, %c0_104], %152 {strides = array<i32>} : memref<8x32xf32, #tpu.memory_space<vmem>>, vector<8x8xf32>,
      %c0_105 = arith.constant 0 : index
      %c1_106 = arith.constant 1 : index
      %154 = vector.load %arg6[%c0_105, %c1_106] : memref<8x4xf32, #tpu.memory_space<vmem>>, vector<8x1xf32>
      %155 = tpu.reciprocal %154 {approx = true} : vector<8x1xf32> -> vector<8x1xf32>
      %c0_107 = arith.constant 0 : index
      %c8_108 = arith.constant 8 : index
      %156 = vector.load %arg7[%c0_107, %c8_108] : memref<8x32xf32, #tpu.memory_space<vmem>>, vector<8x8xf32>
      %157 = vector.broadcast %155 : vector<8x1xf32> to vector<8x8xf32>
      %158 = arith.mulf %156, %157 : vector<8x8xf32>
      %c0_109 = arith.constant 0 : index
      %c8_110 = arith.constant 8 : index
      %159 = vector.load %arg7[%c0_109, %c8_110] : memref<8x32xf32, #tpu.memory_space<vmem>>, vector<8x8xf32>
      tpu.vector_store %arg7[%c0_109, %c8_110], %158 {strides = array<i32>} : memref<8x32xf32, #tpu.memory_space<vmem>>, vector<8x8xf32>,
      %c0_111 = arith.constant 0 : index
      %c2_112 = arith.constant 2 : index
      %160 = vector.load %arg6[%c0_111, %c2_112] : memref<8x4xf32, #tpu.memory_space<vmem>>, vector<8x1xf32>
      %161 = tpu.reciprocal %160 {approx = true} : vector<8x1xf32> -> vector<8x1xf32>
      %c0_113 = arith.constant 0 : index
      %c16_114 = arith.constant 16 : index
      %162 = vector.load %arg7[%c0_113, %c16_114] : memref<8x32xf32, #tpu.memory_space<vmem>>, vector<8x8xf32>
      %163 = vector.broadcast %161 : vector<8x1xf32> to vector<8x8xf32>
      %164 = arith.mulf %162, %163 : vector<8x8xf32>
      %c0_115 = arith.constant 0 : index
      %c16_116 = arith.constant 16 : index
      %165 = vector.load %arg7[%c0_115, %c16_116] : memref<8x32xf32, #tpu.memory_space<vmem>>, vector<8x8xf32>
      tpu.vector_store %arg7[%c0_115, %c16_116], %164 {strides = array<i32>} : memref<8x32xf32, #tpu.memory_space<vmem>>, vector<8x8xf32>,
      %c0_117 = arith.constant 0 : index
      %c3_118 = arith.constant 3 : index
      %166 = vector.load %arg6[%c0_117, %c3_118] : memref<8x4xf32, #tpu.memory_space<vmem>>, vector<8x1xf32>
      %167 = tpu.reciprocal %166 {approx = true} : vector<8x1xf32> -> vector<8x1xf32>
      %c0_119 = arith.constant 0 : index
      %c24_120 = arith.constant 24 : index
      %168 = vector.load %arg7[%c0_119, %c24_120] : memref<8x32xf32, #tpu.memory_space<vmem>>, vector<8x8xf32>
      %169 = vector.broadcast %167 : vector<8x1xf32> to vector<8x8xf32>
      %170 = arith.mulf %168, %169 : vector<8x8xf32>
      %c0_121 = arith.constant 0 : index
      %c24_122 = arith.constant 24 : index
      %171 = vector.load %arg7[%c0_121, %c24_122] : memref<8x32xf32, #tpu.memory_space<vmem>>, vector<8x8xf32>
      tpu.vector_store %arg7[%c0_121, %c24_122], %170 {strides = array<i32>} : memref<8x32xf32, #tpu.memory_space<vmem>>, vector<8x8xf32>,
      %c0_123 = arith.constant 0 : index
      %c0_124 = arith.constant 0 : index
      %172 = vector.load %arg7[%c0_123, %c0_124] : memref<8x32xf32, #tpu.memory_space<vmem>>, vector<8x32xf32>
      %173 = arith.truncf %172 : vector<8x32xf32> to vector<8x32xbf16>
      %c0_125 = arith.constant 0 : index
      %c0_126 = arith.constant 0 : index
      %c0_127 = arith.constant 0 : index
      %174 = vector.load %arg4[%c0_125, %c0_126, %c0_127] : memref<1x8x32xbf16, #tpu.memory_space<vmem>>, vector<1x8x32xbf16>
      %175 = vector.shape_cast %174 : vector<1x8x32xbf16> to vector<8x32xbf16>
      %176 = vector.shape_cast %173 : vector<8x32xbf16> to vector<1x8x32xbf16>
      tpu.vector_store %arg4[%c0_125, %c0_126, %c0_127], %176 {strides = array<i32>} : memref<1x8x32xbf16, #tpu.memory_space<vmem>>, vector<1x8x32xbf16>,
    } else {
    }
    return
  }
  func.func @transform_0(%arg0: i32, %arg1: i32) -> (i32, i32, i32) {
    %c0_i32 = arith.constant 0 : i32
    %c0_i32_0 = arith.constant 0 : i32
    %c0_i32_1 = arith.constant 0 : i32
    return %arg0, %c0_i32, %c0_i32_0 : i32, i32, i32
  }
  func.func @transform_1(%arg0: i32, %arg1: i32) -> (i32, i32, i32) {
    %c0_i32 = arith.constant 0 : i32
    %c0_i32_0 = arith.constant 0 : i32
    return %arg0, %arg1, %c0_i32 : i32, i32, i32
  }
  func.func @transform_2(%arg0: i32, %arg1: i32) -> (i32, i32, i32) {
    %c0_i32 = arith.constant 0 : i32
    %c0_i32_0 = arith.constant 0 : i32
    %c0_i32_1 = arith.constant 0 : i32
    return %arg0, %c0_i32, %c0_i32_0 : i32, i32, i32
  }
}

module attributes {stable_mosaic.version = 11 : i64} {
  func.func @_linear_res_ln_kernel(%arg0: i32, %arg1: i32, %arg2: memref<16x32xbf16, #tpu.memory_space<vmem>>, %arg3: memref<32x32xbf16, #tpu.memory_space<vmem>>, %arg4: memref<1x32xf32, #tpu.memory_space<vmem>>, %arg5: memref<16x32xbf16, #tpu.memory_space<vmem>>, %arg6: memref<1x32xf32, #tpu.memory_space<vmem>>, %arg7: memref<1x32xf32, #tpu.memory_space<vmem>>, %arg8: memref<16x32xbf16, #tpu.memory_space<vmem>>, %arg9: memref<16x32xf32, #tpu.memory_space<vmem>>) attributes {dimension_semantics = [#tpu.dimension_semantics<parallel>, #tpu.dimension_semantics<arbitrary>], iteration_bounds = array<i64: 1, 1>, scalar_prefetch = 0 : i64, scratch_operands = 1 : i64, tpu.core_type = #tpu.core_type<tc>, window_params = [{transform_indices = @transform_0, window_bounds = array<i64: 16, 32>}, {transform_indices = @transform_1, window_bounds = array<i64: 32, 32>}, {pipeline_mode = #tpu.pipeline_mode<synchronous>, transform_indices = @transform_2, window_bounds = array<i64: 1, 32>}, {transform_indices = @transform_3, window_bounds = array<i64: 16, 32>}, {pipeline_mode = #tpu.pipeline_mode<synchronous>, transform_indices = @transform_4, window_bounds = array<i64: 1, 32>}, {pipeline_mode = #tpu.pipeline_mode<synchronous>, transform_indices = @transform_5, window_bounds = array<i64: 1, 32>}, {transform_indices = @transform_6, window_bounds = array<i64: 16, 32>}]} {
    %c0_i32 = arith.constant 0 : i32
    %0 = arith.cmpi eq, %arg1, %c0_i32 : i32
    %1 = arith.extui %0 : i1 to i32
    %c0_i32_0 = arith.constant 0 : i32
    %2 = arith.cmpi ne, %1, %c0_i32_0 : i32
    scf.if %2 {
      %cst_10 = arith.constant 0.000000e+00 : f32
      %12 = vector.broadcast %cst_10 : f32 to vector<16x32xf32>
      %c0_11 = arith.constant 0 : index
      %c0_12 = arith.constant 0 : index
      %13 = vector.load %arg9[%c0_11, %c0_12] : memref<16x32xf32, #tpu.memory_space<vmem>>, vector<16x32xf32>
      tpu.vector_store %arg9[%c0_11, %c0_12], %12 {strides = array<i32>} : memref<16x32xf32, #tpu.memory_space<vmem>>, vector<16x32xf32>,
    } else {
    }
    %c0 = arith.constant 0 : index
    %c0_1 = arith.constant 0 : index
    %3 = vector.load %arg2[%c0, %c0_1] : memref<16x32xbf16, #tpu.memory_space<vmem>>, vector<16x32xbf16>
    %c0_2 = arith.constant 0 : index
    %c0_3 = arith.constant 0 : index
    %4 = vector.load %arg9[%c0_2, %c0_3] : memref<16x32xf32, #tpu.memory_space<vmem>>, vector<16x32xf32>
    %c0_4 = arith.constant 0 : index
    %c0_5 = arith.constant 0 : index
    %5 = vector.load %arg3[%c0_4, %c0_5] : memref<32x32xbf16, #tpu.memory_space<vmem>>, vector<32x32xbf16>
    %cst = arith.constant dense<0.000000e+00> : vector<16x32xf32>
    %6 = tpu.matmul %3, %5, %cst {dimension_numbers = #tpu.dot_dimension_numbers<[1], [0], [0], [1], [0, 0, 1, 1], [], []>} : vector<16x32xbf16>, vector<32x32xbf16>, vector<16x32xf32> -> vector<16x32xf32>
    %7 = arith.addf %4, %6 : vector<16x32xf32>
    %c0_6 = arith.constant 0 : index
    %c0_7 = arith.constant 0 : index
    %8 = vector.load %arg9[%c0_6, %c0_7] : memref<16x32xf32, #tpu.memory_space<vmem>>, vector<16x32xf32>
    tpu.vector_store %arg9[%c0_6, %c0_7], %7 {strides = array<i32>} : memref<16x32xf32, #tpu.memory_space<vmem>>, vector<16x32xf32>,
    %c0_i32_8 = arith.constant 0 : i32
    %9 = arith.cmpi eq, %arg1, %c0_i32_8 : i32
    %10 = arith.extui %9 : i1 to i32
    %c0_i32_9 = arith.constant 0 : i32
    %11 = arith.cmpi ne, %10, %c0_i32_9 : i32
    scf.if %11 {
      %c0_10 = arith.constant 0 : index
      %c0_11 = arith.constant 0 : index
      %12 = vector.load %arg9[%c0_10, %c0_11] : memref<16x32xf32, #tpu.memory_space<vmem>>, vector<16x32xf32>
      %c0_12 = arith.constant 0 : index
      %c0_13 = arith.constant 0 : index
      %13 = vector.load %arg4[%c0_12, %c0_13] : memref<1x32xf32, #tpu.memory_space<vmem>>, vector<1x32xf32>
      %14 = vector.broadcast %13 : vector<1x32xf32> to vector<16x32xf32>
      %15 = arith.addf %12, %14 : vector<16x32xf32>
      %c0_14 = arith.constant 0 : index
      %c0_15 = arith.constant 0 : index
      %16 = vector.load %arg5[%c0_14, %c0_15] : memref<16x32xbf16, #tpu.memory_space<vmem>>, vector<16x32xbf16>
      %17 = arith.extf %16 : vector<16x32xbf16> to vector<16x32xf32>
      %18 = arith.addf %15, %17 : vector<16x32xf32>
      %cst_16 = arith.constant dense<0.000000e+00> : vector<16xf32>
      %19 = vector.multi_reduction <add>, %18, %cst_16 [1] : vector<16x32xf32> to vector<16xf32>
      %20 = vector.shape_cast %19 : vector<16xf32> to vector<16x1xf32>
      %cst_17 = arith.constant 3.200000e+01 : f32
      %21 = vector.broadcast %cst_17 : f32 to vector<16x1xf32>
      %22 = arith.divf %20, %21 : vector<16x1xf32>
      %23 = vector.broadcast %22 : vector<16x1xf32> to vector<16x32xf32>
      %24 = arith.subf %18, %23 : vector<16x32xf32>
      %25 = arith.mulf %24, %24 : vector<16x32xf32>
      %cst_18 = arith.constant dense<0.000000e+00> : vector<16xf32>
      %26 = vector.multi_reduction <add>, %25, %cst_18 [1] : vector<16x32xf32> to vector<16xf32>
      %27 = vector.shape_cast %26 : vector<16xf32> to vector<16x1xf32>
      %cst_19 = arith.constant 3.200000e+01 : f32
      %28 = vector.broadcast %cst_19 : f32 to vector<16x1xf32>
      %29 = arith.divf %27, %28 : vector<16x1xf32>
      %30 = vector.broadcast %22 : vector<16x1xf32> to vector<16x32xf32>
      %31 = arith.subf %18, %30 : vector<16x32xf32>
      %cst_20 = arith.constant 9.99999974E-6 : f32
      %32 = vector.broadcast %cst_20 : f32 to vector<16x1xf32>
      %33 = arith.addf %29, %32 : vector<16x1xf32>
      %34 = math.rsqrt %33 : vector<16x1xf32>
      %35 = vector.broadcast %34 : vector<16x1xf32> to vector<16x32xf32>
      %36 = arith.mulf %31, %35 : vector<16x32xf32>
      %c0_21 = arith.constant 0 : index
      %c0_22 = arith.constant 0 : index
      %37 = vector.load %arg6[%c0_21, %c0_22] : memref<1x32xf32, #tpu.memory_space<vmem>>, vector<1x32xf32>
      %38 = vector.broadcast %37 : vector<1x32xf32> to vector<16x32xf32>
      %39 = arith.mulf %36, %38 : vector<16x32xf32>
      %c0_23 = arith.constant 0 : index
      %c0_24 = arith.constant 0 : index
      %40 = vector.load %arg7[%c0_23, %c0_24] : memref<1x32xf32, #tpu.memory_space<vmem>>, vector<1x32xf32>
      %41 = vector.broadcast %40 : vector<1x32xf32> to vector<16x32xf32>
      %42 = arith.addf %39, %41 : vector<16x32xf32>
      %43 = arith.truncf %42 : vector<16x32xf32> to vector<16x32xbf16>
      %c0_25 = arith.constant 0 : index
      %c0_26 = arith.constant 0 : index
      %44 = vector.load %arg8[%c0_25, %c0_26] : memref<16x32xbf16, #tpu.memory_space<vmem>>, vector<16x32xbf16>
      tpu.vector_store %arg8[%c0_25, %c0_26], %43 {strides = array<i32>} : memref<16x32xbf16, #tpu.memory_space<vmem>>, vector<16x32xbf16>,
    } else {
    }
    return
  }
  func.func @transform_0(%arg0: i32, %arg1: i32) -> (i32, i32) {
    %c0_i32 = arith.constant 0 : i32
    return %arg0, %arg1 : i32, i32
  }
  func.func @transform_1(%arg0: i32, %arg1: i32) -> (i32, i32) {
    %c0_i32 = arith.constant 0 : i32
    %c0_i32_0 = arith.constant 0 : i32
    return %arg1, %c0_i32 : i32, i32
  }
  func.func @transform_2(%arg0: i32, %arg1: i32) -> (i32, i32) {
    %c0_i32 = arith.constant 0 : i32
    %c0_i32_0 = arith.constant 0 : i32
    %c0_i32_1 = arith.constant 0 : i32
    return %c0_i32, %c0_i32_0 : i32, i32
  }
  func.func @transform_3(%arg0: i32, %arg1: i32) -> (i32, i32) {
    %c0_i32 = arith.constant 0 : i32
    %c0_i32_0 = arith.constant 0 : i32
    return %arg0, %c0_i32 : i32, i32
  }
  func.func @transform_4(%arg0: i32, %arg1: i32) -> (i32, i32) {
    %c0_i32 = arith.constant 0 : i32
    %c0_i32_0 = arith.constant 0 : i32
    %c0_i32_1 = arith.constant 0 : i32
    return %c0_i32, %c0_i32_0 : i32, i32
  }
  func.func @transform_5(%arg0: i32, %arg1: i32) -> (i32, i32) {
    %c0_i32 = arith.constant 0 : i32
    %c0_i32_0 = arith.constant 0 : i32
    %c0_i32_1 = arith.constant 0 : i32
    return %c0_i32, %c0_i32_0 : i32, i32
  }
  func.func @transform_6(%arg0: i32, %arg1: i32) -> (i32, i32) {
    %c0_i32 = arith.constant 0 : i32
    %c0_i32_0 = arith.constant 0 : i32
    return %arg0, %c0_i32 : i32, i32
  }
}

module attributes {stable_mosaic.version = 11 : i64} {
  func.func @_linear_kernel(%arg0: i32, %arg1: i32, %arg2: i32, %arg3: memref<16x32xbf16, #tpu.memory_space<vmem>>, %arg4: memref<32x64xbf16, #tpu.memory_space<vmem>>, %arg5: memref<1x64xf32, #tpu.memory_space<vmem>>, %arg6: memref<16x64xbf16, #tpu.memory_space<vmem>>, %arg7: memref<16x64xf32, #tpu.memory_space<vmem>>) attributes {dimension_semantics = [#tpu.dimension_semantics<parallel>, #tpu.dimension_semantics<parallel>, #tpu.dimension_semantics<arbitrary>], iteration_bounds = array<i64: 1, 1, 1>, scalar_prefetch = 0 : i64, scratch_operands = 1 : i64, tpu.core_type = #tpu.core_type<tc>, window_params = [{transform_indices = @transform_0, window_bounds = array<i64: 16, 32>}, {transform_indices = @transform_1, window_bounds = array<i64: 32, 64>}, {transform_indices = @transform_2, window_bounds = array<i64: 1, 64>}, {transform_indices = @transform_3, window_bounds = array<i64: 16, 64>}]} {
    %c0_i32 = arith.constant 0 : i32
    %0 = arith.cmpi eq, %arg2, %c0_i32 : i32
    %1 = arith.extui %0 : i1 to i32
    %c0_i32_0 = arith.constant 0 : i32
    %2 = arith.cmpi ne, %1, %c0_i32_0 : i32
    scf.if %2 {
      %cst_10 = arith.constant 0.000000e+00 : f32
      %12 = vector.broadcast %cst_10 : f32 to vector<16x64xf32>
      %c0_11 = arith.constant 0 : index
      %c0_12 = arith.constant 0 : index
      %13 = vector.load %arg7[%c0_11, %c0_12] : memref<16x64xf32, #tpu.memory_space<vmem>>, vector<16x64xf32>
      tpu.vector_store %arg7[%c0_11, %c0_12], %12 {strides = array<i32>} : memref<16x64xf32, #tpu.memory_space<vmem>>, vector<16x64xf32>,
    } else {
    }
    %c0 = arith.constant 0 : index
    %c0_1 = arith.constant 0 : index
    %3 = vector.load %arg3[%c0, %c0_1] : memref<16x32xbf16, #tpu.memory_space<vmem>>, vector<16x32xbf16>
    %c0_2 = arith.constant 0 : index
    %c0_3 = arith.constant 0 : index
    %4 = vector.load %arg7[%c0_2, %c0_3] : memref<16x64xf32, #tpu.memory_space<vmem>>, vector<16x64xf32>
    %c0_4 = arith.constant 0 : index
    %c0_5 = arith.constant 0 : index
    %5 = vector.load %arg4[%c0_4, %c0_5] : memref<32x64xbf16, #tpu.memory_space<vmem>>, vector<32x64xbf16>
    %cst = arith.constant dense<0.000000e+00> : vector<16x64xf32>
    %6 = tpu.matmul %3, %5, %cst {dimension_numbers = #tpu.dot_dimension_numbers<[1], [0], [0], [1], [0, 0, 1, 1], [], []>} : vector<16x32xbf16>, vector<32x64xbf16>, vector<16x64xf32> -> vector<16x64xf32>
    %7 = arith.addf %4, %6 : vector<16x64xf32>
    %c0_6 = arith.constant 0 : index
    %c0_7 = arith.constant 0 : index
    %8 = vector.load %arg7[%c0_6, %c0_7] : memref<16x64xf32, #tpu.memory_space<vmem>>, vector<16x64xf32>
    tpu.vector_store %arg7[%c0_6, %c0_7], %7 {strides = array<i32>} : memref<16x64xf32, #tpu.memory_space<vmem>>, vector<16x64xf32>,
    %c0_i32_8 = arith.constant 0 : i32
    %9 = arith.cmpi eq, %arg2, %c0_i32_8 : i32
    %10 = arith.extui %9 : i1 to i32
    %c0_i32_9 = arith.constant 0 : i32
    %11 = arith.cmpi ne, %10, %c0_i32_9 : i32
    scf.if %11 {
      %c0_10 = arith.constant 0 : index
      %c0_11 = arith.constant 0 : index
      %12 = vector.load %arg7[%c0_10, %c0_11] : memref<16x64xf32, #tpu.memory_space<vmem>>, vector<16x64xf32>
      %c0_12 = arith.constant 0 : index
      %c0_13 = arith.constant 0 : index
      %13 = vector.load %arg5[%c0_12, %c0_13] : memref<1x64xf32, #tpu.memory_space<vmem>>, vector<1x64xf32>
      %14 = vector.broadcast %13 : vector<1x64xf32> to vector<16x64xf32>
      %15 = arith.addf %12, %14 : vector<16x64xf32>
      %cst_14 = arith.constant 0.000000e+00 : f32
      %16 = vector.broadcast %cst_14 : f32 to vector<16x64xf32>
      %17 = arith.maximumf %15, %16 : vector<16x64xf32>
      %18 = arith.truncf %17 : vector<16x64xf32> to vector<16x64xbf16>
      %c0_15 = arith.constant 0 : index
      %c0_16 = arith.constant 0 : index
      %19 = vector.load %arg6[%c0_15, %c0_16] : memref<16x64xbf16, #tpu.memory_space<vmem>>, vector<16x64xbf16>
      tpu.vector_store %arg6[%c0_15, %c0_16], %18 {strides = array<i32>} : memref<16x64xbf16, #tpu.memory_space<vmem>>, vector<16x64xbf16>,
    } else {
    }
    return
  }
  func.func @transform_0(%arg0: i32, %arg1: i32, %arg2: i32) -> (i32, i32) {
    %c0_i32 = arith.constant 0 : i32
    return %arg0, %arg2 : i32, i32
  }
  func.func @transform_1(%arg0: i32, %arg1: i32, %arg2: i32) -> (i32, i32) {
    %c0_i32 = arith.constant 0 : i32
    return %arg2, %arg1 : i32, i32
  }
  func.func @transform_2(%arg0: i32, %arg1: i32, %arg2: i32) -> (i32, i32) {
    %c0_i32 = arith.constant 0 : i32
    %c0_i32_0 = arith.constant 0 : i32
    return %c0_i32, %arg1 : i32, i32
  }
  func.func @transform_3(%arg0: i32, %arg1: i32, %arg2: i32) -> (i32, i32) {
    %c0_i32 = arith.constant 0 : i32
    return %arg0, %arg1 : i32, i32
  }
}

module attributes {stable_mosaic.version = 11 : i64} {
  func.func @_attn_kernel(%arg0: i32, %arg1: i32, %arg2: memref<1x8x32xbf16, #tpu.memory_space<vmem>>, %arg3: memref<1x8x64xbf16, #tpu.memory_space<vmem>>, %arg4: memref<1x8x32xbf16, #tpu.memory_space<vmem>>, %arg5: memref<8x4xf32, #tpu.memory_space<vmem>>, %arg6: memref<8x4xf32, #tpu.memory_space<vmem>>, %arg7: memref<8x32xf32, #tpu.memory_space<vmem>>) attributes {dimension_semantics = [#tpu.dimension_semantics<parallel>, #tpu.dimension_semantics<arbitrary>], iteration_bounds = array<i64: 2, 1>, scalar_prefetch = 0 : i64, scratch_operands = 3 : i64, tpu.core_type = #tpu.core_type<tc>, window_params = [{transform_indices = @transform_0, window_bounds = array<i64: 1, 8, 32>}, {transform_indices = @transform_1, window_bounds = array<i64: 1, 8, 64>}, {transform_indices = @transform_2, window_bounds = array<i64: 1, 8, 32>}]} {
    %c0_i32 = arith.constant 0 : i32
    %0 = arith.cmpi eq, %arg1, %c0_i32 : i32
    %1 = arith.extui %0 : i1 to i32
    %c0_i32_0 = arith.constant 0 : i32
    %2 = arith.cmpi ne, %1, %c0_i32_0 : i32
    scf.if %2 {
      %cst_95 = arith.constant -1.000000e+30 : f32
      %134 = vector.broadcast %cst_95 : f32 to vector<8x4xf32>
      %c0_96 = arith.constant 0 : index
      %c0_97 = arith.constant 0 : index
      %135 = vector.load %arg5[%c0_96, %c0_97] : memref<8x4xf32, #tpu.memory_space<vmem>>, vector<8x4xf32>
      tpu.vector_store %arg5[%c0_96, %c0_97], %134 {strides = array<i32>} : memref<8x4xf32, #tpu.memory_space<vmem>>, vector<8x4xf32>,
      %cst_98 = arith.constant 0.000000e+00 : f32
      %136 = vector.broadcast %cst_98 : f32 to vector<8x4xf32>
      %c0_99 = arith.constant 0 : index
      %c0_100 = arith.constant 0 : index
      %137 = vector.load %arg6[%c0_99, %c0_100] : memref<8x4xf32, #tpu.memory_space<vmem>>, vector<8x4xf32>
      tpu.vector_store %arg6[%c0_99, %c0_100], %136 {strides = array<i32>} : memref<8x4xf32, #tpu.memory_space<vmem>>, vector<8x4xf32>,
      %cst_101 = arith.constant 0.000000e+00 : f32
      %138 = vector.broadcast %cst_101 : f32 to vector<8x32xf32>
      %c0_102 = arith.constant 0 : index
      %c0_103 = arith.constant 0 : index
      %139 = vector.load %arg7[%c0_102, %c0_103] : memref<8x32xf32, #tpu.memory_space<vmem>>, vector<8x32xf32>
      tpu.vector_store %arg7[%c0_102, %c0_103], %138 {strides = array<i32>} : memref<8x32xf32, #tpu.memory_space<vmem>>, vector<8x32xf32>,
    } else {
    }
    %c0 = arith.constant 0 : index
    %c0_1 = arith.constant 0 : index
    %c0_2 = arith.constant 0 : index
    %3 = vector.load %arg2[%c0, %c0_1, %c0_2] : memref<1x8x32xbf16, #tpu.memory_space<vmem>>, vector<1x8x8xbf16>
    %4 = vector.shape_cast %3 : vector<1x8x8xbf16> to vector<8x8xbf16>
    %c0_3 = arith.constant 0 : index
    %c0_4 = arith.constant 0 : index
    %c0_5 = arith.constant 0 : index
    %5 = vector.load %arg3[%c0_3, %c0_4, %c0_5] : memref<1x8x64xbf16, #tpu.memory_space<vmem>>, vector<1x8x8xbf16>
    %6 = vector.shape_cast %5 : vector<1x8x8xbf16> to vector<8x8xbf16>
    %c0_6 = arith.constant 0 : index
    %c0_7 = arith.constant 0 : index
    %c32 = arith.constant 32 : index
    %7 = vector.load %arg3[%c0_6, %c0_7, %c32] : memref<1x8x64xbf16, #tpu.memory_space<vmem>>, vector<1x8x8xbf16>
    %8 = vector.shape_cast %7 : vector<1x8x8xbf16> to vector<8x8xbf16>
    %cst = arith.constant dense<0.000000e+00> : vector<8x8xf32>
    %9 = tpu.matmul %4, %6, %cst {dimension_numbers = #tpu.dot_dimension_numbers<[1], [1], [0], [0], [0, 0, 1, 0], [], []>} : vector<8x8xbf16>, vector<8x8xbf16>, vector<8x8xf32> -> vector<8x8xf32>
    %cst_8 = arith.constant 0.353553385 : f32
    %10 = vector.broadcast %cst_8 : f32 to vector<8x8xf32>
    %11 = arith.mulf %9, %10 : vector<8x8xf32>
    %c0_9 = arith.constant 0 : index
    %c0_10 = arith.constant 0 : index
    %12 = vector.load %arg5[%c0_9, %c0_10] : memref<8x4xf32, #tpu.memory_space<vmem>>, vector<8x1xf32>
    %cst_11 = arith.constant dense<0xFF800000> : vector<8xf32>
    %13 = vector.multi_reduction <maximumf>, %11, %cst_11 [1] : vector<8x8xf32> to vector<8xf32>
    %14 = vector.shape_cast %13 : vector<8xf32> to vector<8x1xf32>
    %15 = arith.maximumf %12, %14 : vector<8x1xf32>
    %16 = arith.subf %12, %15 : vector<8x1xf32>
    %17 = math.exp %16 : vector<8x1xf32>
    %18 = vector.broadcast %15 : vector<8x1xf32> to vector<8x8xf32>
    %19 = arith.subf %11, %18 : vector<8x8xf32>
    %20 = math.exp %19 : vector<8x8xf32>
    %c0_12 = arith.constant 0 : index
    %c0_13 = arith.constant 0 : index
    %21 = vector.load %arg6[%c0_12, %c0_13] : memref<8x4xf32, #tpu.memory_space<vmem>>, vector<8x1xf32>
    %22 = arith.mulf %17, %21 : vector<8x1xf32>
    %cst_14 = arith.constant dense<0.000000e+00> : vector<8xf32>
    %23 = vector.multi_reduction <add>, %20, %cst_14 [1] : vector<8x8xf32> to vector<8xf32>
    %24 = vector.shape_cast %23 : vector<8xf32> to vector<8x1xf32>
    %25 = arith.addf %22, %24 : vector<8x1xf32>
    %c0_15 = arith.constant 0 : index
    %c0_16 = arith.constant 0 : index
    %26 = vector.load %arg6[%c0_15, %c0_16] : memref<8x4xf32, #tpu.memory_space<vmem>>, vector<8x1xf32>
    tpu.vector_store %arg6[%c0_15, %c0_16], %25 {strides = array<i32>} : memref<8x4xf32, #tpu.memory_space<vmem>>, vector<8x1xf32>,
    %27 = arith.truncf %20 : vector<8x8xf32> to vector<8x8xbf16>
    %cst_17 = arith.constant dense<0.000000e+00> : vector<8x8xf32>
    %28 = tpu.matmul %27, %8, %cst_17 {dimension_numbers = #tpu.dot_dimension_numbers<[1], [0], [0], [1], [0, 0, 1, 1], [], []>} : vector<8x8xbf16>, vector<8x8xbf16>, vector<8x8xf32> -> vector<8x8xf32>
    %c0_18 = arith.constant 0 : index
    %c0_19 = arith.constant 0 : index
    %29 = vector.load %arg7[%c0_18, %c0_19] : memref<8x32xf32, #tpu.memory_space<vmem>>, vector<8x8xf32>
    %30 = vector.broadcast %17 : vector<8x1xf32> to vector<8x8xf32>
    %31 = arith.mulf %30, %29 : vector<8x8xf32>
    %32 = arith.addf %31, %28 : vector<8x8xf32>
    %c0_20 = arith.constant 0 : index
    %c0_21 = arith.constant 0 : index
    %33 = vector.load %arg7[%c0_20, %c0_21] : memref<8x32xf32, #tpu.memory_space<vmem>>, vector<8x8xf32>
    tpu.vector_store %arg7[%c0_20, %c0_21], %32 {strides = array<i32>} : memref<8x32xf32, #tpu.memory_space<vmem>>, vector<8x8xf32>,
    %c0_22 = arith.constant 0 : index
    %c0_23 = arith.constant 0 : index
    %34 = vector.load %arg5[%c0_22, %c0_23] : memref<8x4xf32, #tpu.memory_space<vmem>>, vector<8x1xf32>
    tpu.vector_store %arg5[%c0_22, %c0_23], %15 {strides = array<i32>} : memref<8x4xf32, #tpu.memory_space<vmem>>, vector<8x1xf32>,
    %c0_24 = arith.constant 0 : index
    %c0_25 = arith.constant 0 : index
    %c8 = arith.constant 8 : index
    %35 = vector.load %arg2[%c0_24, %c0_25, %c8] : memref<1x8x32xbf16, #tpu.memory_space<vmem>>, vector<1x8x8xbf16>
    %36 = vector.shape_cast %35 : vector<1x8x8xbf16> to vector<8x8xbf16>
    %c0_26 = arith.constant 0 : index
    %c0_27 = arith.constant 0 : index
    %c8_28 = arith.constant 8 : index
    %37 = vector.load %arg3[%c0_26, %c0_27, %c8_28] : memref<1x8x64xbf16, #tpu.memory_space<vmem>>, vector<1x8x8xbf16>
    %38 = vector.shape_cast %37 : vector<1x8x8xbf16> to vector<8x8xbf16>
    %c0_29 = arith.constant 0 : index
    %c0_30 = arith.constant 0 : index
    %c40 = arith.constant 40 : index
    %39 = vector.load %arg3[%c0_29, %c0_30, %c40] : memref<1x8x64xbf16, #tpu.memory_space<vmem>>, vector<1x8x8xbf16>
    %40 = vector.shape_cast %39 : vector<1x8x8xbf16> to vector<8x8xbf16>
    %cst_31 = arith.constant dense<0.000000e+00> : vector<8x8xf32>
    %41 = tpu.matmul %36, %38, %cst_31 {dimension_numbers = #tpu.dot_dimension_numbers<[1], [1], [0], [0], [0, 0, 1, 0], [], []>} : vector<8x8xbf16>, vector<8x8xbf16>, vector<8x8xf32> -> vector<8x8xf32>
    %cst_32 = arith.constant 0.353553385 : f32
    %42 = vector.broadcast %cst_32 : f32 to vector<8x8xf32>
    %43 = arith.mulf %41, %42 : vector<8x8xf32>
    %c0_33 = arith.constant 0 : index
    %c1 = arith.constant 1 : index
    %44 = vector.load %arg5[%c0_33, %c1] : memref<8x4xf32, #tpu.memory_space<vmem>>, vector<8x1xf32>
    %cst_34 = arith.constant dense<0xFF800000> : vector<8xf32>
    %45 = vector.multi_reduction <maximumf>, %43, %cst_34 [1] : vector<8x8xf32> to vector<8xf32>
    %46 = vector.shape_cast %45 : vector<8xf32> to vector<8x1xf32>
    %47 = arith.maximumf %44, %46 : vector<8x1xf32>
    %48 = arith.subf %44, %47 : vector<8x1xf32>
    %49 = math.exp %48 : vector<8x1xf32>
    %50 = vector.broadcast %47 : vector<8x1xf32> to vector<8x8xf32>
    %51 = arith.subf %43, %50 : vector<8x8xf32>
    %52 = math.exp %51 : vector<8x8xf32>
    %c0_35 = arith.constant 0 : index
    %c1_36 = arith.constant 1 : index
    %53 = vector.load %arg6[%c0_35, %c1_36] : memref<8x4xf32, #tpu.memory_space<vmem>>, vector<8x1xf32>
    %54 = arith.mulf %49, %53 : vector<8x1xf32>
    %cst_37 = arith.constant dense<0.000000e+00> : vector<8xf32>
    %55 = vector.multi_reduction <add>, %52, %cst_37 [1] : vector<8x8xf32> to vector<8xf32>
    %56 = vector.shape_cast %55 : vector<8xf32> to vector<8x1xf32>
    %57 = arith.addf %54, %56 : vector<8x1xf32>
    %c0_38 = arith.constant 0 : index
    %c1_39 = arith.constant 1 : index
    %58 = vector.load %arg6[%c0_38, %c1_39] : memref<8x4xf32, #tpu.memory_space<vmem>>, vector<8x1xf32>
    tpu.vector_store %arg6[%c0_38, %c1_39], %57 {strides = array<i32>} : memref<8x4xf32, #tpu.memory_space<vmem>>, vector<8x1xf32>,
    %59 = arith.truncf %52 : vector<8x8xf32> to vector<8x8xbf16>
    %cst_40 = arith.constant dense<0.000000e+00> : vector<8x8xf32>
    %60 = tpu.matmul %59, %40, %cst_40 {dimension_numbers = #tpu.dot_dimension_numbers<[1], [0], [0], [1], [0, 0, 1, 1], [], []>} : vector<8x8xbf16>, vector<8x8xbf16>, vector<8x8xf32> -> vector<8x8xf32>
    %c0_41 = arith.constant 0 : index
    %c8_42 = arith.constant 8 : index
    %61 = vector.load %arg7[%c0_41, %c8_42] : memref<8x32xf32, #tpu.memory_space<vmem>>, vector<8x8xf32>
    %62 = vector.broadcast %49 : vector<8x1xf32> to vector<8x8xf32>
    %63 = arith.mulf %62, %61 : vector<8x8xf32>
    %64 = arith.addf %63, %60 : vector<8x8xf32>
    %c0_43 = arith.constant 0 : index
    %c8_44 = arith.constant 8 : index
    %65 = vector.load %arg7[%c0_43, %c8_44] : memref<8x32xf32, #tpu.memory_space<vmem>>, vector<8x8xf32>
    tpu.vector_store %arg7[%c0_43, %c8_44], %64 {strides = array<i32>} : memref<8x32xf32, #tpu.memory_space<vmem>>, vector<8x8xf32>,
    %c0_45 = arith.constant 0 : index
    %c1_46 = arith.constant 1 : index
    %66 = vector.load %arg5[%c0_45, %c1_46] : memref<8x4xf32, #tpu.memory_space<vmem>>, vector<8x1xf32>
    tpu.vector_store %arg5[%c0_45, %c1_46], %47 {strides = array<i32>} : memref<8x4xf32, #tpu.memory_space<vmem>>, vector<8x1xf32>,
    %c0_47 = arith.constant 0 : index
    %c0_48 = arith.constant 0 : index
    %c16 = arith.constant 16 : index
    %67 = vector.load %arg2[%c0_47, %c0_48, %c16] : memref<1x8x32xbf16, #tpu.memory_space<vmem>>, vector<1x8x8xbf16>
    %68 = vector.shape_cast %67 : vector<1x8x8xbf16> to vector<8x8xbf16>
    %c0_49 = arith.constant 0 : index
    %c0_50 = arith.constant 0 : index
    %c16_51 = arith.constant 16 : index
    %69 = vector.load %arg3[%c0_49, %c0_50, %c16_51] : memref<1x8x64xbf16, #tpu.memory_space<vmem>>, vector<1x8x8xbf16>
    %70 = vector.shape_cast %69 : vector<1x8x8xbf16> to vector<8x8xbf16>
    %c0_52 = arith.constant 0 : index
    %c0_53 = arith.constant 0 : index
    %c48 = arith.constant 48 : index
    %71 = vector.load %arg3[%c0_52, %c0_53, %c48] : memref<1x8x64xbf16, #tpu.memory_space<vmem>>, vector<1x8x8xbf16>
    %72 = vector.shape_cast %71 : vector<1x8x8xbf16> to vector<8x8xbf16>
    %cst_54 = arith.constant dense<0.000000e+00> : vector<8x8xf32>
    %73 = tpu.matmul %68, %70, %cst_54 {dimension_numbers = #tpu.dot_dimension_numbers<[1], [1], [0], [0], [0, 0, 1, 0], [], []>} : vector<8x8xbf16>, vector<8x8xbf16>, vector<8x8xf32> -> vector<8x8xf32>
    %cst_55 = arith.constant 0.353553385 : f32
    %74 = vector.broadcast %cst_55 : f32 to vector<8x8xf32>
    %75 = arith.mulf %73, %74 : vector<8x8xf32>
    %c0_56 = arith.constant 0 : index
    %c2 = arith.constant 2 : index
    %76 = vector.load %arg5[%c0_56, %c2] : memref<8x4xf32, #tpu.memory_space<vmem>>, vector<8x1xf32>
    %cst_57 = arith.constant dense<0xFF800000> : vector<8xf32>
    %77 = vector.multi_reduction <maximumf>, %75, %cst_57 [1] : vector<8x8xf32> to vector<8xf32>
    %78 = vector.shape_cast %77 : vector<8xf32> to vector<8x1xf32>
    %79 = arith.maximumf %76, %78 : vector<8x1xf32>
    %80 = arith.subf %76, %79 : vector<8x1xf32>
    %81 = math.exp %80 : vector<8x1xf32>
    %82 = vector.broadcast %79 : vector<8x1xf32> to vector<8x8xf32>
    %83 = arith.subf %75, %82 : vector<8x8xf32>
    %84 = math.exp %83 : vector<8x8xf32>
    %c0_58 = arith.constant 0 : index
    %c2_59 = arith.constant 2 : index
    %85 = vector.load %arg6[%c0_58, %c2_59] : memref<8x4xf32, #tpu.memory_space<vmem>>, vector<8x1xf32>
    %86 = arith.mulf %81, %85 : vector<8x1xf32>
    %cst_60 = arith.constant dense<0.000000e+00> : vector<8xf32>
    %87 = vector.multi_reduction <add>, %84, %cst_60 [1] : vector<8x8xf32> to vector<8xf32>
    %88 = vector.shape_cast %87 : vector<8xf32> to vector<8x1xf32>
    %89 = arith.addf %86, %88 : vector<8x1xf32>
    %c0_61 = arith.constant 0 : index
    %c2_62 = arith.constant 2 : index
    %90 = vector.load %arg6[%c0_61, %c2_62] : memref<8x4xf32, #tpu.memory_space<vmem>>, vector<8x1xf32>
    tpu.vector_store %arg6[%c0_61, %c2_62], %89 {strides = array<i32>} : memref<8x4xf32, #tpu.memory_space<vmem>>, vector<8x1xf32>,
    %91 = arith.truncf %84 : vector<8x8xf32> to vector<8x8xbf16>
    %cst_63 = arith.constant dense<0.000000e+00> : vector<8x8xf32>
    %92 = tpu.matmul %91, %72, %cst_63 {dimension_numbers = #tpu.dot_dimension_numbers<[1], [0], [0], [1], [0, 0, 1, 1], [], []>} : vector<8x8xbf16>, vector<8x8xbf16>, vector<8x8xf32> -> vector<8x8xf32>
    %c0_64 = arith.constant 0 : index
    %c16_65 = arith.constant 16 : index
    %93 = vector.load %arg7[%c0_64, %c16_65] : memref<8x32xf32, #tpu.memory_space<vmem>>, vector<8x8xf32>
    %94 = vector.broadcast %81 : vector<8x1xf32> to vector<8x8xf32>
    %95 = arith.mulf %94, %93 : vector<8x8xf32>
    %96 = arith.addf %95, %92 : vector<8x8xf32>
    %c0_66 = arith.constant 0 : index
    %c16_67 = arith.constant 16 : index
    %97 = vector.load %arg7[%c0_66, %c16_67] : memref<8x32xf32, #tpu.memory_space<vmem>>, vector<8x8xf32>
    tpu.vector_store %arg7[%c0_66, %c16_67], %96 {strides = array<i32>} : memref<8x32xf32, #tpu.memory_space<vmem>>, vector<8x8xf32>,
    %c0_68 = arith.constant 0 : index
    %c2_69 = arith.constant 2 : index
    %98 = vector.load %arg5[%c0_68, %c2_69] : memref<8x4xf32, #tpu.memory_space<vmem>>, vector<8x1xf32>
    tpu.vector_store %arg5[%c0_68, %c2_69], %79 {strides = array<i32>} : memref<8x4xf32, #tpu.memory_space<vmem>>, vector<8x1xf32>,
    %c0_70 = arith.constant 0 : index
    %c0_71 = arith.constant 0 : index
    %c24 = arith.constant 24 : index
    %99 = vector.load %arg2[%c0_70, %c0_71, %c24] : memref<1x8x32xbf16, #tpu.memory_space<vmem>>, vector<1x8x8xbf16>
    %100 = vector.shape_cast %99 : vector<1x8x8xbf16> to vector<8x8xbf16>
    %c0_72 = arith.constant 0 : index
    %c0_73 = arith.constant 0 : index
    %c24_74 = arith.constant 24 : index
    %101 = vector.load %arg3[%c0_72, %c0_73, %c24_74] : memref<1x8x64xbf16, #tpu.memory_space<vmem>>, vector<1x8x8xbf16>
    %102 = vector.shape_cast %101 : vector<1x8x8xbf16> to vector<8x8xbf16>
    %c0_75 = arith.constant 0 : index
    %c0_76 = arith.constant 0 : index
    %c56 = arith.constant 56 : index
    %103 = vector.load %arg3[%c0_75, %c0_76, %c56] : memref<1x8x64xbf16, #tpu.memory_space<vmem>>, vector<1x8x8xbf16>
    %104 = vector.shape_cast %103 : vector<1x8x8xbf16> to vector<8x8xbf16>
    %cst_77 = arith.constant dense<0.000000e+00> : vector<8x8xf32>
    %105 = tpu.matmul %100, %102, %cst_77 {dimension_numbers = #tpu.dot_dimension_numbers<[1], [1], [0], [0], [0, 0, 1, 0], [], []>} : vector<8x8xbf16>, vector<8x8xbf16>, vector<8x8xf32> -> vector<8x8xf32>
    %cst_78 = arith.constant 0.353553385 : f32
    %106 = vector.broadcast %cst_78 : f32 to vector<8x8xf32>
    %107 = arith.mulf %105, %106 : vector<8x8xf32>
    %c0_79 = arith.constant 0 : index
    %c3 = arith.constant 3 : index
    %108 = vector.load %arg5[%c0_79, %c3] : memref<8x4xf32, #tpu.memory_space<vmem>>, vector<8x1xf32>
    %cst_80 = arith.constant dense<0xFF800000> : vector<8xf32>
    %109 = vector.multi_reduction <maximumf>, %107, %cst_80 [1] : vector<8x8xf32> to vector<8xf32>
    %110 = vector.shape_cast %109 : vector<8xf32> to vector<8x1xf32>
    %111 = arith.maximumf %108, %110 : vector<8x1xf32>
    %112 = arith.subf %108, %111 : vector<8x1xf32>
    %113 = math.exp %112 : vector<8x1xf32>
    %114 = vector.broadcast %111 : vector<8x1xf32> to vector<8x8xf32>
    %115 = arith.subf %107, %114 : vector<8x8xf32>
    %116 = math.exp %115 : vector<8x8xf32>
    %c0_81 = arith.constant 0 : index
    %c3_82 = arith.constant 3 : index
    %117 = vector.load %arg6[%c0_81, %c3_82] : memref<8x4xf32, #tpu.memory_space<vmem>>, vector<8x1xf32>
    %118 = arith.mulf %113, %117 : vector<8x1xf32>
    %cst_83 = arith.constant dense<0.000000e+00> : vector<8xf32>
    %119 = vector.multi_reduction <add>, %116, %cst_83 [1] : vector<8x8xf32> to vector<8xf32>
    %120 = vector.shape_cast %119 : vector<8xf32> to vector<8x1xf32>
    %121 = arith.addf %118, %120 : vector<8x1xf32>
    %c0_84 = arith.constant 0 : index
    %c3_85 = arith.constant 3 : index
    %122 = vector.load %arg6[%c0_84, %c3_85] : memref<8x4xf32, #tpu.memory_space<vmem>>, vector<8x1xf32>
    tpu.vector_store %arg6[%c0_84, %c3_85], %121 {strides = array<i32>} : memref<8x4xf32, #tpu.memory_space<vmem>>, vector<8x1xf32>,
    %123 = arith.truncf %116 : vector<8x8xf32> to vector<8x8xbf16>
    %cst_86 = arith.constant dense<0.000000e+00> : vector<8x8xf32>
    %124 = tpu.matmul %123, %104, %cst_86 {dimension_numbers = #tpu.dot_dimension_numbers<[1], [0], [0], [1], [0, 0, 1, 1], [], []>} : vector<8x8xbf16>, vector<8x8xbf16>, vector<8x8xf32> -> vector<8x8xf32>
    %c0_87 = arith.constant 0 : index
    %c24_88 = arith.constant 24 : index
    %125 = vector.load %arg7[%c0_87, %c24_88] : memref<8x32xf32, #tpu.memory_space<vmem>>, vector<8x8xf32>
    %126 = vector.broadcast %113 : vector<8x1xf32> to vector<8x8xf32>
    %127 = arith.mulf %126, %125 : vector<8x8xf32>
    %128 = arith.addf %127, %124 : vector<8x8xf32>
    %c0_89 = arith.constant 0 : index
    %c24_90 = arith.constant 24 : index
    %129 = vector.load %arg7[%c0_89, %c24_90] : memref<8x32xf32, #tpu.memory_space<vmem>>, vector<8x8xf32>
    tpu.vector_store %arg7[%c0_89, %c24_90], %128 {strides = array<i32>} : memref<8x32xf32, #tpu.memory_space<vmem>>, vector<8x8xf32>,
    %c0_91 = arith.constant 0 : index
    %c3_92 = arith.constant 3 : index
    %130 = vector.load %arg5[%c0_91, %c3_92] : memref<8x4xf32, #tpu.memory_space<vmem>>, vector<8x1xf32>
    tpu.vector_store %arg5[%c0_91, %c3_92], %111 {strides = array<i32>} : memref<8x4xf32, #tpu.memory_space<vmem>>, vector<8x1xf32>,
    %c0_i32_93 = arith.constant 0 : i32
    %131 = arith.cmpi eq, %arg1, %c0_i32_93 : i32
    %132 = arith.extui %131 : i1 to i32
    %c0_i32_94 = arith.constant 0 : i32
    %133 = arith.cmpi ne, %132, %c0_i32_94 : i32
    scf.if %133 {
      %c0_95 = arith.constant 0 : index
      %c0_96 = arith.constant 0 : index
      %134 = vector.load %arg6[%c0_95, %c0_96] : memref<8x4xf32, #tpu.memory_space<vmem>>, vector<8x1xf32>
      %135 = tpu.reciprocal %134 {approx = true} : vector<8x1xf32> -> vector<8x1xf32>
      %c0_97 = arith.constant 0 : index
      %c0_98 = arith.constant 0 : index
      %136 = vector.load %arg7[%c0_97, %c0_98] : memref<8x32xf32, #tpu.memory_space<vmem>>, vector<8x8xf32>
      %137 = vector.broadcast %135 : vector<8x1xf32> to vector<8x8xf32>
      %138 = arith.mulf %136, %137 : vector<8x8xf32>
      %c0_99 = arith.constant 0 : index
      %c0_100 = arith.constant 0 : index
      %139 = vector.load %arg7[%c0_99, %c0_100] : memref<8x32xf32, #tpu.memory_space<vmem>>, vector<8x8xf32>
      tpu.vector_store %arg7[%c0_99, %c0_100], %138 {strides = array<i32>} : memref<8x32xf32, #tpu.memory_space<vmem>>, vector<8x8xf32>,
      %c0_101 = arith.constant 0 : index
      %c1_102 = arith.constant 1 : index
      %140 = vector.load %arg6[%c0_101, %c1_102] : memref<8x4xf32, #tpu.memory_space<vmem>>, vector<8x1xf32>
      %141 = tpu.reciprocal %140 {approx = true} : vector<8x1xf32> -> vector<8x1xf32>
      %c0_103 = arith.constant 0 : index
      %c8_104 = arith.constant 8 : index
      %142 = vector.load %arg7[%c0_103, %c8_104] : memref<8x32xf32, #tpu.memory_space<vmem>>, vector<8x8xf32>
      %143 = vector.broadcast %141 : vector<8x1xf32> to vector<8x8xf32>
      %144 = arith.mulf %142, %143 : vector<8x8xf32>
      %c0_105 = arith.constant 0 : index
      %c8_106 = arith.constant 8 : index
      %145 = vector.load %arg7[%c0_105, %c8_106] : memref<8x32xf32, #tpu.memory_space<vmem>>, vector<8x8xf32>
      tpu.vector_store %arg7[%c0_105, %c8_106], %144 {strides = array<i32>} : memref<8x32xf32, #tpu.memory_space<vmem>>, vector<8x8xf32>,
      %c0_107 = arith.constant 0 : index
      %c2_108 = arith.constant 2 : index
      %146 = vector.load %arg6[%c0_107, %c2_108] : memref<8x4xf32, #tpu.memory_space<vmem>>, vector<8x1xf32>
      %147 = tpu.reciprocal %146 {approx = true} : vector<8x1xf32> -> vector<8x1xf32>
      %c0_109 = arith.constant 0 : index
      %c16_110 = arith.constant 16 : index
      %148 = vector.load %arg7[%c0_109, %c16_110] : memref<8x32xf32, #tpu.memory_space<vmem>>, vector<8x8xf32>
      %149 = vector.broadcast %147 : vector<8x1xf32> to vector<8x8xf32>
      %150 = arith.mulf %148, %149 : vector<8x8xf32>
      %c0_111 = arith.constant 0 : index
      %c16_112 = arith.constant 16 : index
      %151 = vector.load %arg7[%c0_111, %c16_112] : memref<8x32xf32, #tpu.memory_space<vmem>>, vector<8x8xf32>
      tpu.vector_store %arg7[%c0_111, %c16_112], %150 {strides = array<i32>} : memref<8x32xf32, #tpu.memory_space<vmem>>, vector<8x8xf32>,
      %c0_113 = arith.constant 0 : index
      %c3_114 = arith.constant 3 : index
      %152 = vector.load %arg6[%c0_113, %c3_114] : memref<8x4xf32, #tpu.memory_space<vmem>>, vector<8x1xf32>
      %153 = tpu.reciprocal %152 {approx = true} : vector<8x1xf32> -> vector<8x1xf32>
      %c0_115 = arith.constant 0 : index
      %c24_116 = arith.constant 24 : index
      %154 = vector.load %arg7[%c0_115, %c24_116] : memref<8x32xf32, #tpu.memory_space<vmem>>, vector<8x8xf32>
      %155 = vector.broadcast %153 : vector<8x1xf32> to vector<8x8xf32>
      %156 = arith.mulf %154, %155 : vector<8x8xf32>
      %c0_117 = arith.constant 0 : index
      %c24_118 = arith.constant 24 : index
      %157 = vector.load %arg7[%c0_117, %c24_118] : memref<8x32xf32, #tpu.memory_space<vmem>>, vector<8x8xf32>
      tpu.vector_store %arg7[%c0_117, %c24_118], %156 {strides = array<i32>} : memref<8x32xf32, #tpu.memory_space<vmem>>, vector<8x8xf32>,
      %c0_119 = arith.constant 0 : index
      %c0_120 = arith.constant 0 : index
      %158 = vector.load %arg7[%c0_119, %c0_120] : memref<8x32xf32, #tpu.memory_space<vmem>>, vector<8x32xf32>
      %159 = arith.truncf %158 : vector<8x32xf32> to vector<8x32xbf16>
      %c0_121 = arith.constant 0 : index
      %c0_122 = arith.constant 0 : index
      %c0_123 = arith.constant 0 : index
      %160 = vector.load %arg4[%c0_121, %c0_122, %c0_123] : memref<1x8x32xbf16, #tpu.memory_space<vmem>>, vector<1x8x32xbf16>
      %161 = vector.shape_cast %160 : vector<1x8x32xbf16> to vector<8x32xbf16>
      %162 = vector.shape_cast %159 : vector<8x32xbf16> to vector<1x8x32xbf16>
      tpu.vector_store %arg4[%c0_121, %c0_122, %c0_123], %162 {strides = array<i32>} : memref<1x8x32xbf16, #tpu.memory_space<vmem>>, vector<1x8x32xbf16>,
    } else {
    }
    return
  }
  func.func @transform_0(%arg0: i32, %arg1: i32) -> (i32, i32, i32) {
    %c0_i32 = arith.constant 0 : i32
    %c0_i32_0 = arith.constant 0 : i32
    %c0_i32_1 = arith.constant 0 : i32
    return %arg0, %c0_i32, %c0_i32_0 : i32, i32, i32
  }
  func.func @transform_1(%arg0: i32, %arg1: i32) -> (i32, i32, i32) {
    %c0_i32 = arith.constant 0 : i32
    %c0_i32_0 = arith.constant 0 : i32
    return %arg0, %arg1, %c0_i32 : i32, i32, i32
  }
  func.func @transform_2(%arg0: i32, %arg1: i32) -> (i32, i32, i32) {
    %c0_i32 = arith.constant 0 : i32
    %c0_i32_0 = arith.constant 0 : i32
    %c0_i32_1 = arith.constant 0 : i32
    return %arg0, %c0_i32, %c0_i32_0 : i32, i32, i32
  }
}

module attributes {stable_mosaic.version = 11 : i64} {
  func.func @_linear_res_ln_kernel(%arg0: i32, %arg1: i32, %arg2: memref<16x64xbf16, #tpu.memory_space<vmem>>, %arg3: memref<64x32xbf16, #tpu.memory_space<vmem>>, %arg4: memref<1x32xf32, #tpu.memory_space<vmem>>, %arg5: memref<16x32xbf16, #tpu.memory_space<vmem>>, %arg6: memref<1x32xf32, #tpu.memory_space<vmem>>, %arg7: memref<1x32xf32, #tpu.memory_space<vmem>>, %arg8: memref<16x32xbf16, #tpu.memory_space<vmem>>, %arg9: memref<16x32xf32, #tpu.memory_space<vmem>>) attributes {dimension_semantics = [#tpu.dimension_semantics<parallel>, #tpu.dimension_semantics<arbitrary>], iteration_bounds = array<i64: 1, 1>, scalar_prefetch = 0 : i64, scratch_operands = 1 : i64, tpu.core_type = #tpu.core_type<tc>, window_params = [{transform_indices = @transform_0, window_bounds = array<i64: 16, 64>}, {transform_indices = @transform_1, window_bounds = array<i64: 64, 32>}, {pipeline_mode = #tpu.pipeline_mode<synchronous>, transform_indices = @transform_2, window_bounds = array<i64: 1, 32>}, {transform_indices = @transform_3, window_bounds = array<i64: 16, 32>}, {pipeline_mode = #tpu.pipeline_mode<synchronous>, transform_indices = @transform_4, window_bounds = array<i64: 1, 32>}, {pipeline_mode = #tpu.pipeline_mode<synchronous>, transform_indices = @transform_5, window_bounds = array<i64: 1, 32>}, {transform_indices = @transform_6, window_bounds = array<i64: 16, 32>}]} {
    %c0_i32 = arith.constant 0 : i32
    %0 = arith.cmpi eq, %arg1, %c0_i32 : i32
    %1 = arith.extui %0 : i1 to i32
    %c0_i32_0 = arith.constant 0 : i32
    %2 = arith.cmpi ne, %1, %c0_i32_0 : i32
    scf.if %2 {
      %cst_10 = arith.constant 0.000000e+00 : f32
      %12 = vector.broadcast %cst_10 : f32 to vector<16x32xf32>
      %c0_11 = arith.constant 0 : index
      %c0_12 = arith.constant 0 : index
      %13 = vector.load %arg9[%c0_11, %c0_12] : memref<16x32xf32, #tpu.memory_space<vmem>>, vector<16x32xf32>
      tpu.vector_store %arg9[%c0_11, %c0_12], %12 {strides = array<i32>} : memref<16x32xf32, #tpu.memory_space<vmem>>, vector<16x32xf32>,
    } else {
    }
    %c0 = arith.constant 0 : index
    %c0_1 = arith.constant 0 : index
    %3 = vector.load %arg2[%c0, %c0_1] : memref<16x64xbf16, #tpu.memory_space<vmem>>, vector<16x64xbf16>
    %c0_2 = arith.constant 0 : index
    %c0_3 = arith.constant 0 : index
    %4 = vector.load %arg9[%c0_2, %c0_3] : memref<16x32xf32, #tpu.memory_space<vmem>>, vector<16x32xf32>
    %c0_4 = arith.constant 0 : index
    %c0_5 = arith.constant 0 : index
    %5 = vector.load %arg3[%c0_4, %c0_5] : memref<64x32xbf16, #tpu.memory_space<vmem>>, vector<64x32xbf16>
    %cst = arith.constant dense<0.000000e+00> : vector<16x32xf32>
    %6 = tpu.matmul %3, %5, %cst {dimension_numbers = #tpu.dot_dimension_numbers<[1], [0], [0], [1], [0, 0, 1, 1], [], []>} : vector<16x64xbf16>, vector<64x32xbf16>, vector<16x32xf32> -> vector<16x32xf32>
    %7 = arith.addf %4, %6 : vector<16x32xf32>
    %c0_6 = arith.constant 0 : index
    %c0_7 = arith.constant 0 : index
    %8 = vector.load %arg9[%c0_6, %c0_7] : memref<16x32xf32, #tpu.memory_space<vmem>>, vector<16x32xf32>
    tpu.vector_store %arg9[%c0_6, %c0_7], %7 {strides = array<i32>} : memref<16x32xf32, #tpu.memory_space<vmem>>, vector<16x32xf32>,
    %c0_i32_8 = arith.constant 0 : i32
    %9 = arith.cmpi eq, %arg1, %c0_i32_8 : i32
    %10 = arith.extui %9 : i1 to i32
    %c0_i32_9 = arith.constant 0 : i32
    %11 = arith.cmpi ne, %10, %c0_i32_9 : i32
    scf.if %11 {
      %c0_10 = arith.constant 0 : index
      %c0_11 = arith.constant 0 : index
      %12 = vector.load %arg9[%c0_10, %c0_11] : memref<16x32xf32, #tpu.memory_space<vmem>>, vector<16x32xf32>
      %c0_12 = arith.constant 0 : index
      %c0_13 = arith.constant 0 : index
      %13 = vector.load %arg4[%c0_12, %c0_13] : memref<1x32xf32, #tpu.memory_space<vmem>>, vector<1x32xf32>
      %14 = vector.broadcast %13 : vector<1x32xf32> to vector<16x32xf32>
      %15 = arith.addf %12, %14 : vector<16x32xf32>
      %c0_14 = arith.constant 0 : index
      %c0_15 = arith.constant 0 : index
      %16 = vector.load %arg5[%c0_14, %c0_15] : memref<16x32xbf16, #tpu.memory_space<vmem>>, vector<16x32xbf16>
      %17 = arith.extf %16 : vector<16x32xbf16> to vector<16x32xf32>
      %18 = arith.addf %15, %17 : vector<16x32xf32>
      %cst_16 = arith.constant dense<0.000000e+00> : vector<16xf32>
      %19 = vector.multi_reduction <add>, %18, %cst_16 [1] : vector<16x32xf32> to vector<16xf32>
      %20 = vector.shape_cast %19 : vector<16xf32> to vector<16x1xf32>
      %cst_17 = arith.constant 3.200000e+01 : f32
      %21 = vector.broadcast %cst_17 : f32 to vector<16x1xf32>
      %22 = arith.divf %20, %21 : vector<16x1xf32>
      %23 = vector.broadcast %22 : vector<16x1xf32> to vector<16x32xf32>
      %24 = arith.subf %18, %23 : vector<16x32xf32>
      %25 = arith.mulf %24, %24 : vector<16x32xf32>
      %cst_18 = arith.constant dense<0.000000e+00> : vector<16xf32>
      %26 = vector.multi_reduction <add>, %25, %cst_18 [1] : vector<16x32xf32> to vector<16xf32>
      %27 = vector.shape_cast %26 : vector<16xf32> to vector<16x1xf32>
      %cst_19 = arith.constant 3.200000e+01 : f32
      %28 = vector.broadcast %cst_19 : f32 to vector<16x1xf32>
      %29 = arith.divf %27, %28 : vector<16x1xf32>
      %30 = vector.broadcast %22 : vector<16x1xf32> to vector<16x32xf32>
      %31 = arith.subf %18, %30 : vector<16x32xf32>
      %cst_20 = arith.constant 9.99999974E-6 : f32
      %32 = vector.broadcast %cst_20 : f32 to vector<16x1xf32>
      %33 = arith.addf %29, %32 : vector<16x1xf32>
      %34 = math.rsqrt %33 : vector<16x1xf32>
      %35 = vector.broadcast %34 : vector<16x1xf32> to vector<16x32xf32>
      %36 = arith.mulf %31, %35 : vector<16x32xf32>
      %c0_21 = arith.constant 0 : index
      %c0_22 = arith.constant 0 : index
      %37 = vector.load %arg6[%c0_21, %c0_22] : memref<1x32xf32, #tpu.memory_space<vmem>>, vector<1x32xf32>
      %38 = vector.broadcast %37 : vector<1x32xf32> to vector<16x32xf32>
      %39 = arith.mulf %36, %38 : vector<16x32xf32>
      %c0_23 = arith.constant 0 : index
      %c0_24 = arith.constant 0 : index
      %40 = vector.load %arg7[%c0_23, %c0_24] : memref<1x32xf32, #tpu.memory_space<vmem>>, vector<1x32xf32>
      %41 = vector.broadcast %40 : vector<1x32xf32> to vector<16x32xf32>
      %42 = arith.addf %39, %41 : vector<16x32xf32>
      %43 = arith.truncf %42 : vector<16x32xf32> to vector<16x32xbf16>
      %c0_25 = arith.constant 0 : index
      %c0_26 = arith.constant 0 : index
      %44 = vector.load %arg8[%c0_25, %c0_26] : memref<16x32xbf16, #tpu.memory_space<vmem>>, vector<16x32xbf16>
      tpu.vector_store %arg8[%c0_25, %c0_26], %43 {strides = array<i32>} : memref<16x32xbf16, #tpu.memory_space<vmem>>, vector<16x32xbf16>,
    } else {
    }
    return
  }
  func.func @transform_0(%arg0: i32, %arg1: i32) -> (i32, i32) {
    %c0_i32 = arith.constant 0 : i32
    return %arg0, %arg1 : i32, i32
  }
  func.func @transform_1(%arg0: i32, %arg1: i32) -> (i32, i32) {
    %c0_i32 = arith.constant 0 : i32
    %c0_i32_0 = arith.constant 0 : i32
    return %arg1, %c0_i32 : i32, i32
  }
  func.func @transform_2(%arg0: i32, %arg1: i32) -> (i32, i32) {
    %c0_i32 = arith.constant 0 : i32
    %c0_i32_0 = arith.constant 0 : i32
    %c0_i32_1 = arith.constant 0 : i32
    return %c0_i32, %c0_i32_0 : i32, i32
  }
  func.func @transform_3(%arg0: i32, %arg1: i32) -> (i32, i32) {
    %c0_i32 = arith.constant 0 : i32
    %c0_i32_0 = arith.constant 0 : i32
    return %arg0, %c0_i32 : i32, i32
  }
  func.func @transform_4(%arg0: i32, %arg1: i32) -> (i32, i32) {
    %c0_i32 = arith.constant 0 : i32
    %c0_i32_0 = arith.constant 0 : i32
    %c0_i32_1 = arith.constant 0 : i32
    return %c0_i32, %c0_i32_0 : i32, i32
  }
  func.func @transform_5(%arg0: i32, %arg1: i32) -> (i32, i32) {
    %c0_i32 = arith.constant 0 : i32
    %c0_i32_0 = arith.constant 0 : i32
    %c0_i32_1 = arith.constant 0 : i32
    return %c0_i32, %c0_i32_0 : i32, i32
  }
  func.func @transform_6(%arg0: i32, %arg1: i32) -> (i32, i32) {
    %c0_i32 = arith.constant 0 : i32
    %c0_i32_0 = arith.constant 0 : i32
    return %arg0, %c0_i32 : i32, i32
  }
}

module attributes {stable_mosaic.version = 11 : i64} {
  func.func @_ln_kernel(%arg0: i32, %arg1: memref<16x32xbf16, #tpu.memory_space<vmem>>, %arg2: memref<1x32xf32, #tpu.memory_space<vmem>>, %arg3: memref<1x32xf32, #tpu.memory_space<vmem>>, %arg4: memref<16x32xbf16, #tpu.memory_space<vmem>>) attributes {dimension_semantics = [#tpu.dimension_semantics<parallel>], iteration_bounds = array<i64: 1>, scalar_prefetch = 0 : i64, scratch_operands = 0 : i64, tpu.core_type = #tpu.core_type<tc>, window_params = [{transform_indices = @transform_0, window_bounds = array<i64: 16, 32>}, {pipeline_mode = #tpu.pipeline_mode<synchronous>, transform_indices = @transform_1, window_bounds = array<i64: 1, 32>}, {pipeline_mode = #tpu.pipeline_mode<synchronous>, transform_indices = @transform_2, window_bounds = array<i64: 1, 32>}, {transform_indices = @transform_3, window_bounds = array<i64: 16, 32>}]} {
    %c0 = arith.constant 0 : index
    %c0_0 = arith.constant 0 : index
    %0 = vector.load %arg1[%c0, %c0_0] : memref<16x32xbf16, #tpu.memory_space<vmem>>, vector<16x32xbf16>
    %1 = arith.extf %0 : vector<16x32xbf16> to vector<16x32xf32>
    %cst = arith.constant dense<0.000000e+00> : vector<16xf32>
    %2 = vector.multi_reduction <add>, %1, %cst [1] : vector<16x32xf32> to vector<16xf32>
    %3 = vector.shape_cast %2 : vector<16xf32> to vector<16x1xf32>
    %cst_1 = arith.constant 3.200000e+01 : f32
    %4 = vector.broadcast %cst_1 : f32 to vector<16x1xf32>
    %5 = arith.divf %3, %4 : vector<16x1xf32>
    %6 = vector.broadcast %5 : vector<16x1xf32> to vector<16x32xf32>
    %7 = arith.subf %1, %6 : vector<16x32xf32>
    %8 = arith.mulf %7, %7 : vector<16x32xf32>
    %cst_2 = arith.constant dense<0.000000e+00> : vector<16xf32>
    %9 = vector.multi_reduction <add>, %8, %cst_2 [1] : vector<16x32xf32> to vector<16xf32>
    %10 = vector.shape_cast %9 : vector<16xf32> to vector<16x1xf32>
    %cst_3 = arith.constant 3.200000e+01 : f32
    %11 = vector.broadcast %cst_3 : f32 to vector<16x1xf32>
    %12 = arith.divf %10, %11 : vector<16x1xf32>
    %13 = vector.broadcast %5 : vector<16x1xf32> to vector<16x32xf32>
    %14 = arith.subf %1, %13 : vector<16x32xf32>
    %cst_4 = arith.constant 9.99999974E-6 : f32
    %15 = vector.broadcast %cst_4 : f32 to vector<16x1xf32>
    %16 = arith.addf %12, %15 : vector<16x1xf32>
    %17 = math.rsqrt %16 : vector<16x1xf32>
    %18 = vector.broadcast %17 : vector<16x1xf32> to vector<16x32xf32>
    %19 = arith.mulf %14, %18 : vector<16x32xf32>
    %c0_5 = arith.constant 0 : index
    %c0_6 = arith.constant 0 : index
    %20 = vector.load %arg2[%c0_5, %c0_6] : memref<1x32xf32, #tpu.memory_space<vmem>>, vector<1x32xf32>
    %21 = vector.broadcast %20 : vector<1x32xf32> to vector<16x32xf32>
    %22 = arith.mulf %19, %21 : vector<16x32xf32>
    %c0_7 = arith.constant 0 : index
    %c0_8 = arith.constant 0 : index
    %23 = vector.load %arg3[%c0_7, %c0_8] : memref<1x32xf32, #tpu.memory_space<vmem>>, vector<1x32xf32>
    %24 = vector.broadcast %23 : vector<1x32xf32> to vector<16x32xf32>
    %25 = arith.addf %22, %24 : vector<16x32xf32>
    %26 = arith.truncf %25 : vector<16x32xf32> to vector<16x32xbf16>
    %c0_9 = arith.constant 0 : index
    %c0_10 = arith.constant 0 : index
    %27 = vector.load %arg4[%c0_9, %c0_10] : memref<16x32xbf16, #tpu.memory_space<vmem>>, vector<16x32xbf16>
    tpu.vector_store %arg4[%c0_9, %c0_10], %26 {strides = array<i32>} : memref<16x32xbf16, #tpu.memory_space<vmem>>, vector<16x32xbf16>,
    return
  }
  func.func @transform_0(%arg0: i32) -> (i32, i32) {
    %c0_i32 = arith.constant 0 : i32
    %c0_i32_0 = arith.constant 0 : i32
    return %arg0, %c0_i32 : i32, i32
  }
  func.func @transform_1(%arg0: i32) -> (i32, i32) {
    %c0_i32 = arith.constant 0 : i32
    %c0_i32_0 = arith.constant 0 : i32
    %c0_i32_1 = arith.constant 0 : i32
    return %c0_i32, %c0_i32_0 : i32, i32
  }
  func.func @transform_2(%arg0: i32) -> (i32, i32) {
    %c0_i32 = arith.constant 0 : i32
    %c0_i32_0 = arith.constant 0 : i32
    %c0_i32_1 = arith.constant 0 : i32
    return %c0_i32, %c0_i32_0 : i32, i32
  }
  func.func @transform_3(%arg0: i32) -> (i32, i32) {
    %c0_i32 = arith.constant 0 : i32
    %c0_i32_0 = arith.constant 0 : i32
    return %arg0, %c0_i32 : i32, i32
  }
}

module attributes {stable_mosaic.version = 11 : i64} {
  func.func @_linear_kernel(%arg0: i32, %arg1: i32, %arg2: i32, %arg3: memref<16x32xbf16, #tpu.memory_space<vmem>>, %arg4: memref<32x64xbf16, #tpu.memory_space<vmem>>, %arg5: memref<1x64xf32, #tpu.memory_space<vmem>>, %arg6: memref<16x64xf32, #tpu.memory_space<vmem>>, %arg7: memref<16x64xf32, #tpu.memory_space<vmem>>) attributes {dimension_semantics = [#tpu.dimension_semantics<parallel>, #tpu.dimension_semantics<parallel>, #tpu.dimension_semantics<arbitrary>], iteration_bounds = array<i64: 1, 1, 1>, scalar_prefetch = 0 : i64, scratch_operands = 1 : i64, tpu.core_type = #tpu.core_type<tc>, window_params = [{transform_indices = @transform_0, window_bounds = array<i64: 16, 32>}, {transform_indices = @transform_1, window_bounds = array<i64: 32, 64>}, {transform_indices = @transform_2, window_bounds = array<i64: 1, 64>}, {transform_indices = @transform_3, window_bounds = array<i64: 16, 64>}]} {
    %c0_i32 = arith.constant 0 : i32
    %0 = arith.cmpi eq, %arg2, %c0_i32 : i32
    %1 = arith.extui %0 : i1 to i32
    %c0_i32_0 = arith.constant 0 : i32
    %2 = arith.cmpi ne, %1, %c0_i32_0 : i32
    scf.if %2 {
      %cst_10 = arith.constant 0.000000e+00 : f32
      %12 = vector.broadcast %cst_10 : f32 to vector<16x64xf32>
      %c0_11 = arith.constant 0 : index
      %c0_12 = arith.constant 0 : index
      %13 = vector.load %arg7[%c0_11, %c0_12] : memref<16x64xf32, #tpu.memory_space<vmem>>, vector<16x64xf32>
      tpu.vector_store %arg7[%c0_11, %c0_12], %12 {strides = array<i32>} : memref<16x64xf32, #tpu.memory_space<vmem>>, vector<16x64xf32>,
    } else {
    }
    %c0 = arith.constant 0 : index
    %c0_1 = arith.constant 0 : index
    %3 = vector.load %arg3[%c0, %c0_1] : memref<16x32xbf16, #tpu.memory_space<vmem>>, vector<16x32xbf16>
    %c0_2 = arith.constant 0 : index
    %c0_3 = arith.constant 0 : index
    %4 = vector.load %arg7[%c0_2, %c0_3] : memref<16x64xf32, #tpu.memory_space<vmem>>, vector<16x64xf32>
    %c0_4 = arith.constant 0 : index
    %c0_5 = arith.constant 0 : index
    %5 = vector.load %arg4[%c0_4, %c0_5] : memref<32x64xbf16, #tpu.memory_space<vmem>>, vector<32x64xbf16>
    %cst = arith.constant dense<0.000000e+00> : vector<16x64xf32>
    %6 = tpu.matmul %3, %5, %cst {dimension_numbers = #tpu.dot_dimension_numbers<[1], [0], [0], [1], [0, 0, 1, 1], [], []>} : vector<16x32xbf16>, vector<32x64xbf16>, vector<16x64xf32> -> vector<16x64xf32>
    %7 = arith.addf %4, %6 : vector<16x64xf32>
    %c0_6 = arith.constant 0 : index
    %c0_7 = arith.constant 0 : index
    %8 = vector.load %arg7[%c0_6, %c0_7] : memref<16x64xf32, #tpu.memory_space<vmem>>, vector<16x64xf32>
    tpu.vector_store %arg7[%c0_6, %c0_7], %7 {strides = array<i32>} : memref<16x64xf32, #tpu.memory_space<vmem>>, vector<16x64xf32>,
    %c0_i32_8 = arith.constant 0 : i32
    %9 = arith.cmpi eq, %arg2, %c0_i32_8 : i32
    %10 = arith.extui %9 : i1 to i32
    %c0_i32_9 = arith.constant 0 : i32
    %11 = arith.cmpi ne, %10, %c0_i32_9 : i32
    scf.if %11 {
      %c0_10 = arith.constant 0 : index
      %c0_11 = arith.constant 0 : index
      %12 = vector.load %arg7[%c0_10, %c0_11] : memref<16x64xf32, #tpu.memory_space<vmem>>, vector<16x64xf32>
      %c0_12 = arith.constant 0 : index
      %c0_13 = arith.constant 0 : index
      %13 = vector.load %arg5[%c0_12, %c0_13] : memref<1x64xf32, #tpu.memory_space<vmem>>, vector<1x64xf32>
      %14 = vector.broadcast %13 : vector<1x64xf32> to vector<16x64xf32>
      %15 = arith.addf %12, %14 : vector<16x64xf32>
      %c0_14 = arith.constant 0 : index
      %c0_15 = arith.constant 0 : index
      %16 = vector.load %arg6[%c0_14, %c0_15] : memref<16x64xf32, #tpu.memory_space<vmem>>, vector<16x64xf32>
      tpu.vector_store %arg6[%c0_14, %c0_15], %15 {strides = array<i32>} : memref<16x64xf32, #tpu.memory_space<vmem>>, vector<16x64xf32>,
    } else {
    }
    return
  }
  func.func @transform_0(%arg0: i32, %arg1: i32, %arg2: i32) -> (i32, i32) {
    %c0_i32 = arith.constant 0 : i32
    return %arg0, %arg2 : i32, i32
  }
  func.func @transform_1(%arg0: i32, %arg1: i32, %arg2: i32) -> (i32, i32) {
    %c0_i32 = arith.constant 0 : i32
    return %arg2, %arg1 : i32, i32
  }
  func.func @transform_2(%arg0: i32, %arg1: i32, %arg2: i32) -> (i32, i32) {
    %c0_i32 = arith.constant 0 : i32
    %c0_i32_0 = arith.constant 0 : i32
    return %c0_i32, %arg1 : i32, i32
  }
  func.func @transform_3(%arg0: i32, %arg1: i32, %arg2: i32) -> (i32, i32) {
    %c0_i32 = arith.constant 0 : i32
    return %arg0, %arg1 : i32, i32
  }
}

</mosaic_0001>

<llo_original>
// kernel: language_transformer_forward.48
$region0: #{language_transformer_forward.48}
  #allocation0 [shape = 'u32[]', space=smem, size = 0x4, offset = 0x4, fixed_abs, tag = 'smem constant byte address 0x4 - core index']
  #allocation1 [shape = 'u32[144,128]{1,0:T(1,128)}', space=vmem, size = 0x12000, scoped, tag = 'internal scratch']
  #allocation2 [shape = 'f32[16,32]{1,0:T(8,128)}', space=vmem, size = 0x2000, scoped, tag = 'scratch operand']
  %s0 = inlined_call_operand.vmem [shape: bf16[16,32], index: 0, kind: input, shape index: {}]
  %s1 = inlined_call_operand.vmem [shape: bf16[32,32], index: 1, kind: input, shape index: {}]
  %s2 = inlined_call_operand.vmem [shape: f32[1,32], index: 2, kind: input, shape index: {}]
  %s3 = inlined_call_operand.vmem [shape: bf16[16,32], index: 3, kind: output, shape index: {}]
  %s4 = sld [smem:[#allocation0]]
  $region30: #{language_transformer_forward.48} parent=0
    _
  %s6 = ssub.s32 1, %s4
  %s7 = scalar_select 0, %s6, %s4
  // Predicated region
  $region2: #{language_transformer_forward.48} parent=0 // pred_check
    _
  $region3: #{language_transformer_forward.48} parent=0 // pred_check_branch
    %9 = sbr.rel (0) target = $region5
  $region4: #{language_transformer_forward.48} parent=0 // pred_region
    _
  $region5: #{language_transformer_forward.48} parent=0 // pred_fallthru
    _
  // Predicated region
  $region6: #{language_transformer_forward.48} parent=0 // pred_check
    _
  $region7: #{language_transformer_forward.48} parent=0 // pred_check_branch
    %11 = sbr.rel (0) target = $region9
  $region8: #{language_transformer_forward.48} parent=0 // pred_region
    _
  $region9: #{language_transformer_forward.48} parent=0 // pred_fallthru
    _
  // Predicated region
  $region10: #{language_transformer_forward.48} parent=0 // pred_check
    _
  $region11: #{language_transformer_forward.48} parent=0 // pred_check_branch
    %13 = sbr.rel (0) target = $region13
  $region12: #{language_transformer_forward.48} parent=0 // pred_region
    _
  $region13: #{language_transformer_forward.48} parent=0 // pred_fallthru
    _
  %p15 = scmp.eq.s32.totalorder 0, 0
  // Predicated region
  $region14: #{language_transformer_forward.48} parent=0 // pred_check
    %p16 = pneg %p15
  $region15: #{language_transformer_forward.48} parent=0 // pred_check_branch
    %18 = sbr.rel (%p16) target = $region17
  $region16: #{language_transformer_forward.48} parent=0 // pred_region
    %vm19 = vcmask 261120
    %20 = vst.msk [vmem:[#allocation2] sm:$0xff] %vm19, 0.0
    %21 = vst.msk [vmem:[#allocation2 + $0x8] sm:$0xff] %vm19, 0.0
  $region17: #{language_transformer_forward.48} parent=0 // pred_fallthru
    _
  %v22 = vld [vmem:[%s0] sm:$0xf]
  %v23 = vld [vmem:[%s0 + $0x4] sm:$0xf]
  %v24 = vld [vmem:[#allocation2] sm:$0xff]
  %v25 = vld [vmem:[#allocation2 + $0x8] sm:$0xff]
  %v26 = vld [vmem:[%s1] sm:$0xf]
  %v27 = vld [vmem:[%s1 + $0x4] sm:$0xf]
  %v28 = vld [vmem:[%s1 + $0x8] sm:$0xf]
  %v29 = vld [vmem:[%s1 + $0xc] sm:$0xf]
  %v32 = vunpack.c.l.b16 %v22
  %v33 = vunpack.c.l.b16 %v23
  %v34 = vpack.c.b16 %v33, %v32
  %v39 = vunpack.c.l.b16 %v26
  %v40 = vunpack.c.l.b16 %v27
  %v41 = vunpack.c.l.b16 %v28
  %v42 = vunpack.c.l.b16 %v29
  %v43 = vpack.c.b16 %v40, %v39
  %v44 = vpack.c.b16 %v42, %v41
  %vm47 = vcmask 261120
  %v49 = vsel %vm47, %v34, 0
  %51 = vmatprep.subr.bf16.mxu0 0
  %52 = vmatpush1.bf16.msra.mxu0 %v43
  %53 = vmatprep.subr.bf16.mxu0 0
  %54 = vmatpush1.bf16.msra.mxu0 %v44
  %55 = vmatprep.subr.bf16.mxu0 0
  %56 = vmatpush1.bf16.msra.mxu0 0
  %57 = vmatprep.subr.bf16.mxu0 0
  %58 = vmatpush1.bf16.msra.mxu0 0
  %59 = vmatprep.subr.bf16.mxu0 0
  %60 = vmatpush1.bf16.msra.mxu0 0
  %61 = vmatprep.subr.bf16.mxu0 0
  %62 = vmatpush1.bf16.msra.mxu0 0
  %63 = vmatprep.subr.bf16.mxu0 0
  %64 = vmatpush1.bf16.msra.mxu0 0
  %65 = vmatprep.subr.bf16.mxu0 0
  %66 = vmatpush1.bf16.msra.mxu0 0
  %67 = vmatprep.subr.bf16.mxu0 0
  %68 = vmatpush1.bf16.msra.mxu0 0
  %69 = vmatprep.subr.bf16.mxu0 0
  %70 = vmatpush1.bf16.msra.mxu0 0
  %71 = vmatprep.subr.bf16.mxu0 0
  %72 = vmatpush1.bf16.msra.mxu0 0
  %73 = vmatprep.subr.bf16.mxu0 0
  %74 = vmatpush1.bf16.msra.mxu0 0
  %75 = vmatprep.subr.bf16.mxu0 0
  %76 = vmatpush1.bf16.msra.mxu0 0
  %77 = vmatprep.subr.bf16.mxu0 0
  %78 = vmatpush1.bf16.msra.mxu0 0
  %79 = vmatprep.subr.bf16.mxu0 0
  %80 = vmatpush1.bf16.msra.mxu0 0
  %81 = vmatprep.subr.bf16.mxu0 0
  %82 = vmatpush1.bf16.msra.mxu0 0
  %83 = vmatprep.mubr.bf16.mxu0 0
  %84 = vmatmul.mubr.bf16.gmra.mrb[0].mxu0 %v49
  %v85 = vpop.f32.mrb[0].mxu0
  %v86 = vadd.f32 0.0, %v85
  %v87 = vpop.f32.mrb[0].mxu0
  %v88 = vpop.f32.mrb[0].mxu0
  %v89 = vadd.f32 0.0, %v88
  %v90 = vpop.f32.mrb[0].mxu0
  %91 = vdwg.mxu0
  %v92 = vadd.f32 %v24, %v86
  %v93 = vadd.f32 %v25, %v89
  %94 = vst.msk [vmem:[#allocation2] sm:$0xff] %vm47, %v92
  %95 = vst.msk [vmem:[#allocation2 + $0x8] sm:$0xff] %vm47, %v93
  // Predicated region
  $region18: #{language_transformer_forward.48} parent=0 // pred_check
    %p96 = pneg %p15
  $region19: #{language_transformer_forward.48} parent=0 // pred_check_branch
    %98 = sbr.rel (%p96) target = $region21
  $region20: #{language_transformer_forward.48} parent=0 // pred_region
    %v99 = vld [vmem:[#allocation2] sm:$0xff]
    %v100 = vld [vmem:[#allocation2 + $0x8] sm:$0xff]
    %v101 = vld [vmem:[%s2] sm:$0x1]
    %v103 = vlaneseq
    %v104 = vshrl.u32 %v103, 7
    %v105 = vsub.s32 0, %v104
    %v106 = vrot.slane %v101, %v105
    %v108 = vadd.f32 %v99, %v106
    %v109 = vadd.f32 %v100, %v106
    %v110 = vpack.c.bf16 %v109, %v108
    %v112 = vunpack.c.l.b16 %v110
    %v113 = vunpack.c.h.b16 %v110
    %v114 = vpack.c.b16 %v112, %v112
    %v115 = vpack.c.b16 %v113, %v113
    %vm118 = vcmask 257024
    %119 = vst.msk [vmem:[%s3] sm:$0xf] %vm118, %v114
    %120 = vst.msk [vmem:[%s3 + $0x4] sm:$0xf] %vm118, %v115
  $region21: #{language_transformer_forward.48} parent=0 // pred_fallthru
    _
  // Predicated region
  $region22: #{language_transformer_forward.48} parent=0 // pred_check
    _
  $region23: #{language_transformer_forward.48} parent=0 // pred_check_branch
    %122 = sbr.rel (0) target = $region25
  $region24: #{language_transformer_forward.48} parent=0 // pred_region
    _
  $region25: #{language_transformer_forward.48} parent=0 // pred_fallthru
    _
  // Predicated region
  $region26: #{language_transformer_forward.48} parent=0 // pred_check
    _
  $region27: #{language_transformer_forward.48} parent=0 // pred_check_branch
    %124 = sbr.rel (0) target = $region29
  $region28: #{language_transformer_forward.48} parent=0 // pred_region
    _
  $region29: #{language_transformer_forward.48} parent=0 // pred_fallthru
    _

// kernel: language_transformer_forward.49
$region0: #{language_transformer_forward.49}
  #allocation0 [shape = 'u32[]', space=smem, size = 0x4, offset = 0x4, fixed_abs, tag = 'smem constant byte address 0x4 - core index']
  #allocation1 [shape = 'u32[144,128]{1,0:T(1,128)}', space=vmem, size = 0x12000, scoped, tag = 'internal scratch']
  #allocation2 [shape = 'f32[16,64]{1,0:T(8,128)}', space=vmem, size = 0x2000, scoped, tag = 'scratch operand']
  %s0 = inlined_call_operand.vmem [shape: bf16[16,32], index: 0, kind: input, shape index: {}]
  %s1 = inlined_call_operand.vmem [shape: bf16[32,64], index: 1, kind: input, shape index: {}]
  %s2 = inlined_call_operand.vmem [shape: f32[1,64], index: 2, kind: input, shape index: {}]
  %s3 = inlined_call_operand.vmem [shape: bf16[16,64], index: 3, kind: output, shape index: {}]
  %s4 = sld [smem:[#allocation0]]
  $region30: #{language_transformer_forward.49} parent=0
    _
  %s6 = ssub.s32 1, %s4
  %s7 = scalar_select 0, %s6, %s4
  // Predicated region
  $region2: #{language_transformer_forward.49} parent=0 // pred_check
    _
  $region3: #{language_transformer_forward.49} parent=0 // pred_check_branch
    %9 = sbr.rel (0) target = $region5
  $region4: #{language_transformer_forward.49} parent=0 // pred_region
    _
  $region5: #{language_transformer_forward.49} parent=0 // pred_fallthru
    _
  // Predicated region
  $region6: #{language_transformer_forward.49} parent=0 // pred_check
    _
  $region7: #{language_transformer_forward.49} parent=0 // pred_check_branch
    %11 = sbr.rel (0) target = $region9
  $region8: #{language_transformer_forward.49} parent=0 // pred_region
    _
  $region9: #{language_transformer_forward.49} parent=0 // pred_fallthru
    _
  // Predicated region
  $region10: #{language_transformer_forward.49} parent=0 // pred_check
    _
  $region11: #{language_transformer_forward.49} parent=0 // pred_check_branch
    %13 = sbr.rel (0) target = $region13
  $region12: #{language_transformer_forward.49} parent=0 // pred_region
    _
  $region13: #{language_transformer_forward.49} parent=0 // pred_fallthru
    _
  %p15 = scmp.eq.s32.totalorder 0, 0
  // Predicated region
  $region14: #{language_transformer_forward.49} parent=0 // pred_check
    %p16 = pneg %p15
  $region15: #{language_transformer_forward.49} parent=0 // pred_check_branch
    %18 = sbr.rel (%p16) target = $region17
  $region16: #{language_transformer_forward.49} parent=0 // pred_region
    %vm19 = vcmask 523264
    %20 = vst.msk [vmem:[#allocation2] sm:$0xff] %vm19, 0.0
    %21 = vst.msk [vmem:[#allocation2 + $0x8] sm:$0xff] %vm19, 0.0
  $region17: #{language_transformer_forward.49} parent=0 // pred_fallthru
    _
  %v22 = vld [vmem:[%s0] sm:$0xf]
  %v23 = vld [vmem:[%s0 + $0x4] sm:$0xf]
  %v24 = vld [vmem:[#allocation2] sm:$0xff]
  %v25 = vld [vmem:[#allocation2 + $0x8] sm:$0xff]
  %v26 = vld [vmem:[%s1] sm:$0xf]
  %v27 = vld [vmem:[%s1 + $0x4] sm:$0xf]
  %v28 = vld [vmem:[%s1 + $0x8] sm:$0xf]
  %v29 = vld [vmem:[%s1 + $0xc] sm:$0xf]
  %v32 = vunpack.c.l.b16 %v22
  %v33 = vunpack.c.l.b16 %v23
  %v34 = vpack.c.b16 %v33, %v32
  %v39 = vunpack.c.l.b16 %v26
  %v40 = vunpack.c.l.b16 %v27
  %v41 = vunpack.c.l.b16 %v28
  %v42 = vunpack.c.l.b16 %v29
  %v43 = vpack.c.b16 %v40, %v39
  %v44 = vpack.c.b16 %v42, %v41
  %vm47 = vcmask 261120
  %v49 = vsel %vm47, %v34, 0
  %51 = vmatprep.subr.bf16.mxu0 0
  %52 = vmatpush1.bf16.msra.mxu0 %v43
  %53 = vmatprep.subr.bf16.mxu0 0
  %54 = vmatpush1.bf16.msra.mxu0 %v44
  %55 = vmatprep.subr.bf16.mxu0 0
  %56 = vmatpush1.bf16.msra.mxu0 0
  %57 = vmatprep.subr.bf16.mxu0 0
  %58 = vmatpush1.bf16.msra.mxu0 0
  %59 = vmatprep.subr.bf16.mxu0 0
  %60 = vmatpush1.bf16.msra.mxu0 0
  %61 = vmatprep.subr.bf16.mxu0 0
  %62 = vmatpush1.bf16.msra.mxu0 0
  %63 = vmatprep.subr.bf16.mxu0 0
  %64 = vmatpush1.bf16.msra.mxu0 0
  %65 = vmatprep.subr.bf16.mxu0 0
  %66 = vmatpush1.bf16.msra.mxu0 0
  %67 = vmatprep.subr.bf16.mxu0 0
  %68 = vmatpush1.bf16.msra.mxu0 0
  %69 = vmatprep.subr.bf16.mxu0 0
  %70 = vmatpush1.bf16.msra.mxu0 0
  %71 = vmatprep.subr.bf16.mxu0 0
  %72 = vmatpush1.bf16.msra.mxu0 0
  %73 = vmatprep.subr.bf16.mxu0 0
  %74 = vmatpush1.bf16.msra.mxu0 0
  %75 = vmatprep.subr.bf16.mxu0 0
  %76 = vmatpush1.bf16.msra.mxu0 0
  %77 = vmatprep.subr.bf16.mxu0 0
  %78 = vmatpush1.bf16.msra.mxu0 0
  %79 = vmatprep.subr.bf16.mxu0 0
  %80 = vmatpush1.bf16.msra.mxu0 0
  %81 = vmatprep.subr.bf16.mxu0 0
  %82 = vmatpush1.bf16.msra.mxu0 0
  %83 = vmatprep.mubr.bf16.mxu0 0
  %84 = vmatmul.mubr.bf16.gmra.mrb[0].mxu0 %v49
  %v85 = vpop.f32.mrb[0].mxu0
  %v86 = vadd.f32 0.0, %v85
  %v87 = vpop.f32.mrb[0].mxu0
  %v88 = vpop.f32.mrb[0].mxu0
  %v89 = vadd.f32 0.0, %v88
  %v90 = vpop.f32.mrb[0].mxu0
  %91 = vdwg.mxu0
  %v92 = vadd.f32 %v24, %v86
  %v93 = vadd.f32 %v25, %v89
  %vm94 = vcmask 523264
  %95 = vst.msk [vmem:[#allocation2] sm:$0xff] %vm94, %v92
  %96 = vst.msk [vmem:[#allocation2 + $0x8] sm:$0xff] %vm94, %v93
  // Predicated region
  $region18: #{language_transformer_forward.49} parent=0 // pred_check
    %p97 = pneg %p15
  $region19: #{language_transformer_forward.49} parent=0 // pred_check_branch
    %99 = sbr.rel (%p97) target = $region21
  $region20: #{language_transformer_forward.49} parent=0 // pred_region
    %v100 = vld [vmem:[#allocation2] sm:$0xff]
    %v101 = vld [vmem:[#allocation2 + $0x8] sm:$0xff]
    %v102 = vld [vmem:[%s2] sm:$0x1]
    %v104 = vlaneseq
    %v105 = vshrl.u32 %v104, 7
    %v106 = vsub.s32 0, %v105
    %v107 = vrot.slane %v102, %v106
    %v109 = vadd.f32 %v100, %v107
    %v110 = vadd.f32 %v101, %v107
    %v111 = vpack.c.bf16 %v110, %v109
    %v113 = vunpack.c.l.b16 %v111
    %v114 = vunpack.c.h.b16 %v111
    %v115 = vpack.c.b16 %v113, %v113
    %v116 = vpack.c.b16 %v114, %v114
    %vm119 = vcmask 519168
    %120 = vst.msk [vmem:[%s3] sm:$0xf] %vm119, %v115
    %121 = vst.msk [vmem:[%s3 + $0x4] sm:$0xf] %vm119, %v116
  $region21: #{language_transformer_forward.49} parent=0 // pred_fallthru
    _
  // Predicated region
  $region22: #{language_transformer_forward.49} parent=0 // pred_check
    _
  $region23: #{language_transformer_forward.49} parent=0 // pred_check_branch
    %123 = sbr.rel (0) target = $region25
  $region24: #{language_transformer_forward.49} parent=0 // pred_region
    _
  $region25: #{language_transformer_forward.49} parent=0 // pred_fallthru
    _
  // Predicated region
  $region26: #{language_transformer_forward.49} parent=0 // pred_check
    _
  $region27: #{language_transformer_forward.49} parent=0 // pred_check_branch
    %125 = sbr.rel (0) target = $region29
  $region28: #{language_transformer_forward.49} parent=0 // pred_region
    _
  $region29: #{language_transformer_forward.49} parent=0 // pred_fallthru
    _

// kernel: language_transformer_forward.51
$region0: #{language_transformer_forward.51}
  #allocation0 [shape = 'u32[]', space=smem, size = 0x4, offset = 0x4, fixed_abs, tag = 'smem constant byte address 0x4 - core index']
  #allocation1 [shape = 'u32[144,128]{1,0:T(1,128)}', space=vmem, size = 0x12000, scoped, tag = 'internal scratch']
  #allocation2 [shape = 'f32[16,32]{1,0:T(8,128)}', space=vmem, size = 0x2000, scoped, tag = 'scratch operand']
  %s0 = inlined_call_operand.vmem [shape: bf16[16,32], index: 0, kind: input, shape index: {}]
  %s1 = inlined_call_operand.vmem [shape: bf16[32,32], index: 1, kind: input, shape index: {}]
  %s2 = inlined_call_operand.vmem [shape: f32[1,32], index: 2, kind: input, shape index: {}]
  %s3 = inlined_call_operand.vmem [shape: bf16[16,32], index: 3, kind: input, shape index: {}]
  %s4 = inlined_call_operand.vmem [shape: f32[1,32], index: 4, kind: input, shape index: {}]
  %s5 = inlined_call_operand.vmem [shape: f32[1,32], index: 5, kind: input, shape index: {}]
  %s6 = inlined_call_operand.vmem [shape: bf16[16,32], index: 6, kind: output, shape index: {}]
  %s7 = sld [smem:[#allocation0]]
  $region42: #{language_transformer_forward.51} parent=0
    _
  %s9 = ssub.s32 1, %s7
  %s10 = scalar_select 0, %s9, %s7
  // Predicated region
  $region2: #{language_transformer_forward.51} parent=0 // pred_check
    _
  $region3: #{language_transformer_forward.51} parent=0 // pred_check_branch
    %12 = sbr.rel (0) target = $region5
  $region4: #{language_transformer_forward.51} parent=0 // pred_region
    _
  $region5: #{language_transformer_forward.51} parent=0 // pred_fallthru
    _
  // Predicated region
  $region6: #{language_transformer_forward.51} parent=0 // pred_check
    _
  $region7: #{language_transformer_forward.51} parent=0 // pred_check_branch
    %14 = sbr.rel (0) target = $region9
  $region8: #{language_transformer_forward.51} parent=0 // pred_region
    _
  $region9: #{language_transformer_forward.51} parent=0 // pred_fallthru
    _
  // Predicated region
  $region10: #{language_transformer_forward.51} parent=0 // pred_check
    _
  $region11: #{language_transformer_forward.51} parent=0 // pred_check_branch
    %16 = sbr.rel (0) target = $region13
  $region12: #{language_transformer_forward.51} parent=0 // pred_region
    _
  $region13: #{language_transformer_forward.51} parent=0 // pred_fallthru
    _
  // Predicated region
  $region14: #{language_transformer_forward.51} parent=0 // pred_check
    _
  $region15: #{language_transformer_forward.51} parent=0 // pred_check_branch
    %18 = sbr.rel (0) target = $region17
  $region16: #{language_transformer_forward.51} parent=0 // pred_region
    _
  $region17: #{language_transformer_forward.51} parent=0 // pred_fallthru
    _
  // Predicated region
  $region18: #{language_transformer_forward.51} parent=0 // pred_check
    _
  $region19: #{language_transformer_forward.51} parent=0 // pred_check_branch
    %20 = sbr.rel (0) target = $region21
  $region20: #{language_transformer_forward.51} parent=0 // pred_region
    _
  $region21: #{language_transformer_forward.51} parent=0 // pred_fallthru
    _
  // Predicated region
  $region22: #{language_transformer_forward.51} parent=0 // pred_check
    _
  $region23: #{language_transformer_forward.51} parent=0 // pred_check_branch
    %22 = sbr.rel (0) target = $region25
  $region24: #{language_transformer_forward.51} parent=0 // pred_region
    _
  $region25: #{language_transformer_forward.51} parent=0 // pred_fallthru
    _
  %p24 = scmp.eq.s32.totalorder 0, 0
  // Predicated region
  $region26: #{language_transformer_forward.51} parent=0 // pred_check
    %p25 = pneg %p24
  $region27: #{language_transformer_forward.51} parent=0 // pred_check_branch
    %27 = sbr.rel (%p25) target = $region29
  $region28: #{language_transformer_forward.51} parent=0 // pred_region
    %vm28 = vcmask 261120
    %29 = vst.msk [vmem:[#allocation2] sm:$0xff] %vm28, 0.0
    %30 = vst.msk [vmem:[#allocation2 + $0x8] sm:$0xff] %vm28, 0.0
  $region29: #{language_transformer_forward.51} parent=0 // pred_fallthru
    _
  %v31 = vld [vmem:[%s0] sm:$0xf]
  %v32 = vld [vmem:[%s0 + $0x4] sm:$0xf]
  %v33 = vld [vmem:[#allocation2] sm:$0xff]
  %v34 = vld [vmem:[#allocation2 + $0x8] sm:$0xff]
  %v35 = vld [vmem:[%s1] sm:$0xf]
  %v36 = vld [vmem:[%s1 + $0x4] sm:$0xf]
  %v37 = vld [vmem:[%s1 + $0x8] sm:$0xf]
  %v38 = vld [vmem:[%s1 + $0xc] sm:$0xf]
  %v41 = vunpack.c.l.b16 %v31
  %v42 = vunpack.c.l.b16 %v32
  %v43 = vpack.c.b16 %v42, %v41
  %v48 = vunpack.c.l.b16 %v35
  %v49 = vunpack.c.l.b16 %v36
  %v50 = vunpack.c.l.b16 %v37
  %v51 = vunpack.c.l.b16 %v38
  %v52 = vpack.c.b16 %v49, %v48
  %v53 = vpack.c.b16 %v51, %v50
  %vm56 = vcmask 261120
  %v58 = vsel %vm56, %v43, 0
  %60 = vmatprep.subr.bf16.mxu0 0
  %61 = vmatpush1.bf16.msra.mxu0 %v52
  %62 = vmatprep.subr.bf16.mxu0 0
  %63 = vmatpush1.bf16.msra.mxu0 %v53
  %64 = vmatprep.subr.bf16.mxu0 0
  %65 = vmatpush1.bf16.msra.mxu0 0
  %66 = vmatprep.subr.bf16.mxu0 0
  %67 = vmatpush1.bf16.msra.mxu0 0
  %68 = vmatprep.subr.bf16.mxu0 0
  %69 = vmatpush1.bf16.msra.mxu0 0
  %70 = vmatprep.subr.bf16.mxu0 0
  %71 = vmatpush1.bf16.msra.mxu0 0
  %72 = vmatprep.subr.bf16.mxu0 0
  %73 = vmatpush1.bf16.msra.mxu0 0
  %74 = vmatprep.subr.bf16.mxu0 0
  %75 = vmatpush1.bf16.msra.mxu0 0
  %76 = vmatprep.subr.bf16.mxu0 0
  %77 = vmatpush1.bf16.msra.mxu0 0
  %78 = vmatprep.subr.bf16.mxu0 0
  %79 = vmatpush1.bf16.msra.mxu0 0
  %80 = vmatprep.subr.bf16.mxu0 0
  %81 = vmatpush1.bf16.msra.mxu0 0
  %82 = vmatprep.subr.bf16.mxu0 0
  %83 = vmatpush1.bf16.msra.mxu0 0
  %84 = vmatprep.subr.bf16.mxu0 0
  %85 = vmatpush1.bf16.msra.mxu0 0
  %86 = vmatprep.subr.bf16.mxu0 0
  %87 = vmatpush1.bf16.msra.mxu0 0
  %88 = vmatprep.subr.bf16.mxu0 0
  %89 = vmatpush1.bf16.msra.mxu0 0
  %90 = vmatprep.subr.bf16.mxu0 0
  %91 = vmatpush1.bf16.msra.mxu0 0
  %92 = vmatprep.mubr.bf16.mxu0 0
  %93 = vmatmul.mubr.bf16.gmra.mrb[0].mxu0 %v58
  %v94 = vpop.f32.mrb[0].mxu0
  %v95 = vadd.f32 0.0, %v94
  %v96 = vpop.f32.mrb[0].mxu0
  %v97 = vpop.f32.mrb[0].mxu0
  %v98 = vadd.f32 0.0, %v97
  %v99 = vpop.f32.mrb[0].mxu0
  %100 = vdwg.mxu0
  %v101 = vadd.f32 %v33, %v95
  %v102 = vadd.f32 %v34, %v98
  %103 = vst.msk [vmem:[#allocation2] sm:$0xff] %vm56, %v101
  %104 = vst.msk [vmem:[#allocation2 + $0x8] sm:$0xff] %vm56, %v102
  // Predicated region
  $region30: #{language_transformer_forward.51} parent=0 // pred_check
    %p105 = pneg %p24
  $region31: #{language_transformer_forward.51} parent=0 // pred_check_branch
    %107 = sbr.rel (%p105) target = $region33
  $region32: #{language_transformer_forward.51} parent=0 // pred_region
    %v108 = vld [vmem:[#allocation2] sm:$0xff]
    %v109 = vld [vmem:[#allocation2 + $0x8] sm:$0xff]
    %v110 = vld [vmem:[%s2] sm:$0x1]
    %v112 = vlaneseq
    %v113 = vshrl.u32 %v112, 7
    %v114 = vsub.s32 0, %v113
    %v115 = vrot.slane %v110, %v114
    %v117 = vadd.f32 %v108, %v115
    %v118 = vadd.f32 %v109, %v115
    %v119 = vld [vmem:[%s3] sm:$0xf]
    %v120 = vld [vmem:[%s3 + $0x4] sm:$0xf]
    %v121 = vunpack.c.l.bf16 %v119
    %v122 = vunpack.c.l.bf16 %v120
    %v123 = vadd.f32 %v117, %v121
    %v124 = vadd.f32 %v118, %v122
    %v125 = vsel %vm56, %v123, 0.0
    %126 = vadd.xlane.f32.xlu0 %v125
    %v127 = vpop.xlane.xlu0 %126
    %v128 = vsel %vm56, %v124, 0.0
    %129 = vadd.xlane.f32.xlu0 %v128
    %v130 = vpop.xlane.xlu0 %129
    %v131 = vrcp.pop 32.0
    %v132 = vmul.f32 %v127, %v131
    %v133 = vmul.f32 %v130, %v131
    %v134 = vsub.f32 %v123, %v132
    %v135 = vsub.f32 %v124, %v133
    %v136 = vmul.f32 %v134, %v134
    %v137 = vmul.f32 %v135, %v135
    %v138 = vsel %vm56, %v136, 0.0
    %139 = vadd.xlane.f32.xlu0 %v138
    %v140 = vpop.xlane.xlu0 %139
    %v141 = vsel %vm56, %v137, 0.0
    %142 = vadd.xlane.f32.xlu0 %v141
    %v143 = vpop.xlane.xlu0 %142
    %v144 = vmul.f32 %v140, %v131
    %v145 = vmul.f32 %v143, %v131
    %v146 = vadd.f32 %v144, 1e-05
    %v147 = vadd.f32 %v145, 1e-05
    %v148 = vrsqrt.pop %v146
    %v149 = vrsqrt.pop %v147
    %v150 = vmul.f32 %v134, %v148
    %v151 = vmul.f32 %v135, %v149
    %v152 = vld [vmem:[%s4] sm:$0x1]
    %v154 = vlaneseq
    %v155 = vshrl.u32 %v154, 7
    %v156 = vsub.s32 0, %v155
    %v157 = vrot.slane %v152, %v156
    %v159 = vmul.f32 %v150, %v157
    %v160 = vmul.f32 %v151, %v157
    %v161 = vld [vmem:[%s5] sm:$0x1]
    %v163 = vlaneseq
    %v164 = vshrl.u32 %v163, 7
    %v165 = vsub.s32 0, %v164
    %v166 = vrot.slane %v161, %v165
    %v168 = vadd.f32 %v159, %v166
    %v169 = vadd.f32 %v160, %v166
    %v170 = vpack.c.bf16 %v169, %v168
    %v172 = vunpack.c.l.b16 %v170
    %v173 = vunpack.c.h.b16 %v170
    %v174 = vpack.c.b16 %v172, %v172
    %v175 = vpack.c.b16 %v173, %v173
    %vm178 = vcmask 257024
    %179 = vst.msk [vmem:[%s6] sm:$0xf] %vm178, %v174
    %180 = vst.msk [vmem:[%s6 + $0x4] sm:$0xf] %vm178, %v175
  $region33: #{language_transformer_forward.51} parent=0 // pred_fallthru
    _
  // Predicated region
  $region34: #{language_transformer_forward.51} parent=0 // pred_check
    _
  $region35: #{language_transformer_forward.51} parent=0 // pred_check_branch
    %182 = sbr.rel (0) target = $region37
  $region36: #{language_transformer_forward.51} parent=0 // pred_region
    _
  $region37: #{language_transformer_forward.51} parent=0 // pred_fallthru
    _
  // Predicated region
  $region38: #{language_transformer_forward.51} parent=0 // pred_check
    _
  $region39: #{language_transformer_forward.51} parent=0 // pred_check_branch
    %184 = sbr.rel (0) target = $region41
  $region40: #{language_transformer_forward.51} parent=0 // pred_region
    _
  $region41: #{language_transformer_forward.51} parent=0 // pred_fallthru
    _

// kernel: language_transformer_forward.50
$region0: #{language_transformer_forward.50}
  #allocation0 [shape = 'u32[]', space=smem, size = 0x4, offset = 0x4, fixed_abs, tag = 'smem constant byte address 0x4 - core index']
  #allocation1 [shape = 'u32[144,128]{1,0:T(1,128)}', space=vmem, size = 0x12000, scoped, tag = 'internal scratch']
  #allocation2 [shape = 'f32[8,4]{1,0:T(8,128)}', space=vmem, size = 0x1000, scoped, tag = 'scratch operand']
  #allocation3 [shape = 'f32[8,4]{1,0:T(8,128)}', space=vmem, size = 0x1000, scoped, tag = 'scratch operand']
  #allocation4 [shape = 'f32[8,32]{1,0:T(8,128)}', space=vmem, size = 0x1000, scoped, tag = 'scratch operand']
  %s0 = inlined_call_operand.vmem [shape: bf16[2,8,32], index: 0, kind: input, shape index: {}]
  %s1 = inlined_call_operand.vmem [shape: bf16[2,8,64], index: 1, kind: input, shape index: {}]
  %s2 = inlined_call_operand.vmem [shape: bf16[2,8,32], index: 2, kind: output, shape index: {}]
  %s3 = sld [smem:[#allocation0]]
  $region49: #{language_transformer_forward.50} parent=0
    _
  %s5 = ssub.s32 1, %s3
  %s6 = scalar_select 0, %s5, %s3
  loop: start=0, step=1, limit=4
  $region2: #{language_transformer_forward.50} parent=0 // loop_pre_header
    _
  $region3: #{language_transformer_forward.50} parent=0 // loop_header
    %s8 = sphi 0, %s12
    %p9 = scmp.ge.s32.totalorder %s8, 4
    %s15 = sphi 0, %s27
    %s16 = sphi 0, %s23
    %s17 = sphi 0, %s15
    %s18 = sphi 0, %s16
    %s19 = sphi 0, %s17
    %s20 = sphi 0, %s18
    %s30 = sphi 0, %s32
    %s33 = sphi 0, %s30
    %s34 = sphi 0, %s33
    %s50 = sphi 0, %s34
    %s58 = sphi 0, %s60
    %s61 = sphi 0, %s58
    %s62 = sphi 0, %s61
    %s78 = sphi 0, %s62
    %s84 = sphi 0, %s86
    %s87 = sphi 0, %s84
    %s88 = sphi 0, %s87
    %s104 = sphi 0, %s88
  $region4: #{language_transformer_forward.50} parent=0 // loop_header_branch
    %11 = sbr.rel (%p9) target = $region8
  $region5: #{language_transformer_forward.50} parent=0 // loop_body
    %s13 = ssub.s32 %s8, 1
    %s14 = ssub.s32 %s8, 2
    %s21 = sadd.s32 1, %s16
    %p22 = scmp.ge.s32.totalorder %s21, 1
    %s23 = scalar_select %p22, 0, %s21
    %s24 = sadd.s32 1, %s15
    %s25 = scalar_select %p22, %s24, %s15
    %p26 = scmp.ge.s32.totalorder %s25, 2
    %s27 = scalar_select %p26, 0, %s25
    %s28 = ssub.s32 %s15, %s27
    %p29 = scmp.eq.s32.totalorder %s28, 0
    %s31 = sadd.s32 %s30, 1
    %s32 = scalar_select %p29, %s30, %s31
    %p35 = pneg %p29
    %p36 = scmp.eq.s32.totalorder %s8, 1
    %p37 = por %p35, %p36
    %p38 = scmp.ne.s32.totalorder %s30, %s33
    %p39 = scmp.eq.s32.totalorder %s8, 0
    %p40 = por %p38, %p39
    %p41 = scmp.ne.s32.totalorder %s30, %s33
    %p42 = scmp.eq.s32.totalorder %s13, 1
    %p43 = por %p41, %p42
    %p44 = scmp.ne.s32.totalorder %s33, %s34
    %p45 = scmp.eq.s32.totalorder %s13, 0
    %p46 = por %p44, %p45
    %p47 = scmp.ne.s32.totalorder %s33, %s34
    %p48 = scmp.eq.s32.totalorder %s14, 1
    %p49 = por %p47, %p48
    %p51 = scmp.ne.s32.totalorder %s34, %s50
    %p52 = scmp.eq.s32.totalorder %s14, 0
    %p53 = por %p51, %p52
    %s54 = ssub.s32 %s15, %s27
    %s55 = ssub.s32 %s16, %s23
    %s56 = sor.u32 %s54, %s55
    %p57 = scmp.eq.s32.totalorder %s56, 0
    %s59 = sadd.s32 %s58, 1
    %s60 = scalar_select %p57, %s58, %s59
    %p63 = pneg %p57
    %p64 = scmp.eq.s32.totalorder %s8, 1
    %p65 = por %p63, %p64
    %p66 = scmp.ne.s32.totalorder %s58, %s61
    %p67 = scmp.eq.s32.totalorder %s8, 0
    %p68 = por %p66, %p67
    %p69 = scmp.ne.s32.totalorder %s58, %s61
    %p70 = scmp.eq.s32.totalorder %s13, 1
    %p71 = por %p69, %p70
    %p72 = scmp.ne.s32.totalorder %s61, %s62
    %p73 = scmp.eq.s32.totalorder %s13, 0
    %p74 = por %p72, %p73
    %p75 = scmp.ne.s32.totalorder %s61, %s62
    %p76 = scmp.eq.s32.totalorder %s14, 1
    %p77 = por %p75, %p76
    %p79 = scmp.ne.s32.totalorder %s62, %s78
    %p80 = scmp.eq.s32.totalorder %s14, 0
    %p81 = por %p79, %p80
    %s82 = ssub.s32 %s15, %s27
    %p83 = scmp.eq.s32.totalorder %s82, 0
    %s85 = sadd.s32 %s84, 1
    %s86 = scalar_select %p83, %s84, %s85
    %p89 = pneg %p83
    %p90 = scmp.eq.s32.totalorder %s8, 1
    %p91 = por %p89, %p90
    %p92 = scmp.ne.s32.totalorder %s84, %s87
    %p93 = scmp.eq.s32.totalorder %s8, 0
    %p94 = por %p92, %p93
    %p95 = scmp.ne.s32.totalorder %s84, %s87
    %p96 = scmp.eq.s32.totalorder %s13, 1
    %p97 = por %p95, %p96
    %p98 = scmp.ne.s32.totalorder %s87, %s88
    %p99 = scmp.eq.s32.totalorder %s13, 0
    %p100 = por %p98, %p99
    %p101 = scmp.ne.s32.totalorder %s87, %s88
    %p102 = scmp.eq.s32.totalorder %s14, 1
    %p103 = por %p101, %p102
    %p105 = scmp.ne.s32.totalorder %s88, %s104
    %p106 = scmp.eq.s32.totalorder %s14, 0
    %p107 = por %p105, %p106
    %p108 = scmp.le.s32.totalorder 1, %s8
    %p109 = scmp.lt.s32.totalorder %s8, 3
    %p110 = pnand %p108, %p109
    %p111 = pneg %p110
    // Predicated region
    $region9: #{language_transformer_forward.50} parent=5 // pred_check
      _
    $region10: #{language_transformer_forward.50} parent=5 // pred_check_branch
      %113 = sbr.rel (%p110) target = $region12
    $region11: #{language_transformer_forward.50} parent=5 // pred_region
      %s114 = ssub.s32 %s8, 1
    $region12: #{language_transformer_forward.50} parent=5 // pred_fallthru
      _
    %p115 = scmp.lt.s32.totalorder %s8, 2
    // Predicated region
    $region13: #{language_transformer_forward.50} parent=5 // pred_check
      %p116 = pneg %p115
    $region14: #{language_transformer_forward.50} parent=5 // pred_check_branch
      %118 = sbr.rel (%p116) target = $region16
    $region15: #{language_transformer_forward.50} parent=5 // pred_region
      // Predicated region
      $region17: #{language_transformer_forward.50} parent=15 // pred_check
        %p119 = pneg %p40
      $region18: #{language_transformer_forward.50} parent=15 // pred_check_branch
        %121 = sbr.rel (%p119) target = $region20
      $region19: #{language_transformer_forward.50} parent=15 // pred_region
        %p122 = scmp.lt.s32.totalorder %s15, 1
        %s123 = scalar_select %p122, %s15, 1
        %s124 = smul.addr %s123, 4
        %s125 = scalar_lea.vmem %s0, %s124
      $region20: #{language_transformer_forward.50} parent=15 // pred_fallthru
        _
      // Predicated region
      $region21: #{language_transformer_forward.50} parent=15 // pred_check
        %p126 = pneg %p68
      $region22: #{language_transformer_forward.50} parent=15 // pred_check_branch
        %128 = sbr.rel (%p126) target = $region24
      $region23: #{language_transformer_forward.50} parent=15 // pred_region
        %p129 = scmp.lt.s32.totalorder %s15, 1
        %s130 = scalar_select %p129, %s15, 1
        %p131 = scmp.lt.s32.totalorder %s16, 0
        %s132 = scalar_select %p131, %s16, 0
        %s133 = sadd.s32 %s132, %s130
        %s134 = smul.addr %s133, 4
        %s135 = scalar_lea.vmem %s1, %s134
      $region24: #{language_transformer_forward.50} parent=15 // pred_fallthru
        _
    $region16: #{language_transformer_forward.50} parent=5 // pred_fallthru
      _
    %p136 = scmp.le.s32.totalorder 1, %s8
    %p137 = scmp.lt.s32.totalorder %s8, 3
    %p138 = pnand %p136, %p137
    %p139 = pneg %p138
    // Predicated region
    $region25: #{language_transformer_forward.50} parent=5 // pred_check
      _
    $region26: #{language_transformer_forward.50} parent=5 // pred_check_branch
      %141 = sbr.rel (%p138) target = $region28
    $region27: #{language_transformer_forward.50} parent=5 // pred_region
      %s142 = ssub.s32 %s8, 1
      %p143 = scmp.lt.s32.totalorder %s17, 1
      %s144 = scalar_select %p143, %s17, 1
      %s145 = smul.addr %s144, 4
      %s146 = scalar_lea.vmem %s0, %s145
      %p147 = pneg %p46
      %p148 = pneg %p43
      %p149 = scmp.lt.s32.totalorder %s17, 1
      %s150 = scalar_select %p149, %s17, 1
      %p151 = scmp.lt.s32.totalorder %s18, 0
      %s152 = scalar_select %p151, %s18, 0
      %s153 = sadd.s32 %s152, %s150
      %s154 = smul.addr %s153, 4
      %s155 = scalar_lea.vmem %s1, %s154
      %p156 = pneg %p74
      %p157 = pneg %p71
      %p158 = pneg %p100
      %p159 = pneg %p97
      %p160 = scmp.lt.s32.totalorder %s17, 1
      %s161 = scalar_select %p160, %s17, 1
      %s162 = smul.addr %s161, 4
      %s163 = scalar_lea.vmem %s2, %s162
      %p164 = scmp.lt.s32.totalorder %s17, 1
      %s165 = scalar_select %p164, %s17, 1
      %s166 = smul.addr %s165, 4
      %s167 = scalar_lea.vmem %s0, %s166
      %p168 = scmp.lt.s32.totalorder %s17, 1
      %s169 = scalar_select %p168, %s17, 1
      %p170 = scmp.lt.s32.totalorder %s18, 0
      %s171 = scalar_select %p170, %s18, 0
      %s172 = sadd.s32 %s171, %s169
      %s173 = smul.addr %s172, 4
      %s174 = scalar_lea.vmem %s1, %s173
      %p175 = scmp.lt.s32.totalorder %s17, 1
      %s176 = scalar_select %p175, %s17, 1
      %s177 = smul.addr %s176, 4
      %s178 = scalar_lea.vmem %s2, %s177
      %p180 = scmp.eq.s32.totalorder %s18, 0
      // Predicated region
      $region29: #{language_transformer_forward.50} parent=27 // pred_check
        %p181 = pneg %p180
      $region30: #{language_transformer_forward.50} parent=27 // pred_check_branch
        %183 = sbr.rel (%p181) target = $region32
      $region31: #{language_transformer_forward.50} parent=27 // pred_region
        %vm184 = vcmask 31744
        %185 = vst.msk [vmem:[#allocation2] sm:$0xff] %vm184, -1e+30
        %186 = vst.msk [vmem:[#allocation3] sm:$0xff] %vm184, 0.0
        %vm187 = vcmask 261120
        %188 = vst.msk [vmem:[#allocation4] sm:$0xff] %vm187, 0.0
      $region32: #{language_transformer_forward.50} parent=27 // pred_fallthru
        _
      %v189 = vlaneseq
      %v190 = vshrl.u32 %v189, 7
      %v191 = vlaneseq
      %v192 = vand.u32 %v191, 127
      %s193 = smul.u32 %s18, 8
      %v194 = vstv %s193
      %v195 = vadd.s32 %v192, %v194
      %vm196 = vcmp.le.s32.totalorder %v195, %v190
      %v197 = vld [vmem:[%s167] sm:$0xf]
      %v198 = vld [vmem:[%s174] sm:$0xf]
      %vm199 = vcmask 64512
      %v201 = vsel %vm199, %v197, 0
      %v204 = vsel %vm199, %v198, 0
      %206 = vmatprep.subr.bf16.mxu0 0
      %207 = vmatpush1.bf16.xpose.msra.mxu0 %v204
      %208 = vmatprep.subr.bf16.mxu0 0
      %209 = vmatpush1.bf16.xpose.msra.mxu0 0
      %210 = vmatprep.subr.bf16.mxu0 0
      %211 = vmatpush1.bf16.xpose.msra.mxu0 0
      %212 = vmatprep.subr.bf16.mxu0 0
      %213 = vmatpush1.bf16.xpose.msra.mxu0 0
      %214 = vmatprep.subr.bf16.mxu0 0
      %215 = vmatpush1.bf16.xpose.msra.mxu0 0
      %216 = vmatprep.subr.bf16.mxu0 0
      %217 = vmatpush1.bf16.xpose.msra.mxu0 0
      %218 = vmatprep.subr.bf16.mxu0 0
      %219 = vmatpush1.bf16.xpose.msra.mxu0 0
      %220 = vmatprep.subr.bf16.mxu0 0
      %221 = vmatpush1.bf16.xpose.msra.mxu0 0
      %222 = vmatprep.subr.bf16.mxu0 0
      %223 = vmatpush1.bf16.xpose.msra.mxu0 0
      %224 = vmatprep.subr.bf16.mxu0 0
      %225 = vmatpush1.bf16.xpose.msra.mxu0 0
      %226 = vmatprep.subr.bf16.mxu0 0
      %227 = vmatpush1.bf16.xpose.msra.mxu0 0
      %228 = vmatprep.subr.bf16.mxu0 0
      %229 = vmatpush1.bf16.xpose.msra.mxu0 0
      %230 = vmatprep.subr.bf16.mxu0 0
      %231 = vmatpush1.bf16.xpose.msra.mxu0 0
      %232 = vmatprep.subr.bf16.mxu0 0
      %233 = vmatpush1.bf16.xpose.msra.mxu0 0
      %234 = vmatprep.subr.bf16.mxu0 0
      %235 = vmatpush1.bf16.xpose.msra.mxu0 0
      %236 = vmatprep.subr.bf16.mxu0 0
      %237 = vmatpush1.bf16.xpose.msra.mxu0 0
      %238 = vmatprep.mubr.bf16.mxu0 0
      %239 = vmatmul.mubr.bf16.gmra.mrb[0].mxu0 %v201
      %v240 = vpop.f32.mrb[0].mxu0
      %v241 = vadd.f32 0.0, %v240
      %v242 = vpop.f32.mrb[0].mxu0
      %v243 = vpop.f32.mrb[0].mxu0
      %v244 = vpop.f32.mrb[0].mxu0
      %245 = vdwg.mxu0
      %v246 = vmul.f32 %v241, 0.35355338
      %v247 = vsel %vm196, %v246, -1e+30
      %v248 = vld [vmem:[#allocation2] sm:$0xff]
      %v249 = vsel %vm199, %v247, -inf
      %250 = vmax.xlane.f32.xlu0 %v249
      %v251 = vpop.xlane.xlu0 %250
      %v252 = vmax.f32 %v248, %v251
      %v253 = vsub.f32 %v248, %v252
      %v254 = vmul.f32 %v253, 1.442695
      %v255 = vpow.pop %v254
      %257 = vset.pattern.permute.xlu0 0
      %258 = vperm.xlu0 %257, %v252
      %v259 = vpop.permute.xlu0 %258
      %v261 = vsub.f32 %v247, %v259
      %v262 = vmul.f32 %v261, 1.442695
      %v263 = vpow.pop %v262
      %v264 = vld [vmem:[#allocation3] sm:$0xff]
      %v265 = vmul.f32 %v255, %v264
      %v266 = vsel %vm199, %v263, 0.0
      %267 = vadd.xlane.f32.xlu0 %v266
      %v268 = vpop.xlane.xlu0 %267
      %v269 = vadd.f32 %v265, %v268
      %vm270 = vcmask 7168
      %271 = vst.msk [vmem:[#allocation3] sm:$0xff] %vm270, %v269
      %v272 = vpack.c.bf16 %v263, %v263
      %v274 = vunpack.c.l.b16 %v198
      %v275 = vpack.c.b16 %v274, %v274
      %276 = vrot.lane.b32.xlu0 %v275, 96
      %v277 = vpop.permute.xlu0 %276
      %v279 = vsel %vm199, %v272, 0
      %vm281 = vcmask 1043456
      %v283 = vsel %vm281, %v277, 0
      %285 = vmatprep.subr.bf16.mxu0 0
      %286 = vmatpush1.bf16.msra.mxu0 %v283
      %287 = vmatprep.subr.bf16.mxu0 0
      %288 = vmatpush1.bf16.msra.mxu0 0
      %289 = vmatprep.subr.bf16.mxu0 0
      %290 = vmatpush1.bf16.msra.mxu0 0
      %291 = vmatprep.subr.bf16.mxu0 0
      %292 = vmatpush1.bf16.msra.mxu0 0
      %293 = vmatprep.subr.bf16.mxu0 0
      %294 = vmatpush1.bf16.msra.mxu0 0
      %295 = vmatprep.subr.bf16.mxu0 0
      %296 = vmatpush1.bf16.msra.mxu0 0
      %297 = vmatprep.subr.bf16.mxu0 0
      %298 = vmatpush1.bf16.msra.mxu0 0
      %299 = vmatprep.subr.bf16.mxu0 0
      %300 = vmatpush1.bf16.msra.mxu0 0
      %301 = vmatprep.subr.bf16.mxu0 0
      %302 = vmatpush1.bf16.msra.mxu0 0
      %303 = vmatprep.subr.bf16.mxu0 0
      %304 = vmatpush1.bf16.msra.mxu0 0
      %305 = vmatprep.subr.bf16.mxu0 0
      %306 = vmatpush1.bf16.msra.mxu0 0
      %307 = vmatprep.subr.bf16.mxu0 0
      %308 = vmatpush1.bf16.msra.mxu0 0
      %309 = vmatprep.subr.bf16.mxu0 0
      %310 = vmatpush1.bf16.msra.mxu0 0
      %311 = vmatprep.subr.bf16.mxu0 0
      %312 = vmatpush1.bf16.msra.mxu0 0
      %313 = vmatprep.subr.bf16.mxu0 0
      %314 = vmatpush1.bf16.msra.mxu0 0
      %315 = vmatprep.subr.bf16.mxu0 0
      %316 = vmatpush1.bf16.msra.mxu0 0
      %317 = vmatprep.mubr.bf16.mxu0 0
      %318 = vmatmul.mubr.bf16.gmra.mrb[0].mxu0 %v279
      %v319 = vpop.f32.mrb[0].mxu0
      %v320 = vadd.f32 0.0, %v319
      %v321 = vpop.f32.mrb[0].mxu0
      %v322 = vpop.f32.mrb[0].mxu0
      %v323 = vpop.f32.mrb[0].mxu0
      %324 = vdwg.mxu0
      %v325 = vld [vmem:[#allocation4] sm:$0xff]
      %327 = vset.pattern.permute.xlu0 0
      %328 = vperm.xlu0 %327, %v255
      %v329 = vpop.permute.xlu0 %328
      %v331 = vmul.f32 %v329, %v325
      %v332 = vadd.f32 %v331, %v320
      %333 = vst.msk [vmem:[#allocation4] sm:$0xff] %vm199, %v332
      %334 = vst.msk [vmem:[#allocation2] sm:$0xff] %vm270, %v252
      %v335 = vld [vmem:[%s167] sm:$0xf]
      %v336 = vld [vmem:[%s174] sm:$0xf]
      %v338 = vunpack.c.l.b16 %v335
      %v339 = vpack.c.b16 %v338, %v338
      %340 = vrot.lane.b32.xlu0 %v339, 120
      %v341 = vpop.permute.xlu0 %340
      %v343 = vunpack.c.l.b16 %v336
      %v344 = vpack.c.b16 %v343, %v343
      %345 = vrot.lane.b32.xlu0 %v344, 120
      %v346 = vpop.permute.xlu0 %345
      %v348 = vsel %vm199, %v341, 0
      %v351 = vsel %vm199, %v346, 0
      %353 = vmatprep.subr.bf16.mxu0 0
      %354 = vmatpush1.bf16.xpose.msra.mxu0 %v351
      %355 = vmatprep.subr.bf16.mxu0 0
      %356 = vmatpush1.bf16.xpose.msra.mxu0 0
      %357 = vmatprep.subr.bf16.mxu0 0
      %358 = vmatpush1.bf16.xpose.msra.mxu0 0
      %359 = vmatprep.subr.bf16.mxu0 0
      %360 = vmatpush1.bf16.xpose.msra.mxu0 0
      %361 = vmatprep.subr.bf16.mxu0 0
      %362 = vmatpush1.bf16.xpose.msra.mxu0 0
      %363 = vmatprep.subr.bf16.mxu0 0
      %364 = vmatpush1.bf16.xpose.msra.mxu0 0
      %365 = vmatprep.subr.bf16.mxu0 0
      %366 = vmatpush1.bf16.xpose.msra.mxu0 0
      %367 = vmatprep.subr.bf16.mxu0 0
      %368 = vmatpush1.bf16.xpose.msra.mxu0 0
      %369 = vmatprep.subr.bf16.mxu0 0
      %370 = vmatpush1.bf16.xpose.msra.mxu0 0
      %371 = vmatprep.subr.bf16.mxu0 0
      %372 = vmatpush1.bf16.xpose.msra.mxu0 0
      %373 = vmatprep.subr.bf16.mxu0 0
      %374 = vmatpush1.bf16.xpose.msra.mxu0 0
      %375 = vmatprep.subr.bf16.mxu0 0
      %376 = vmatpush1.bf16.xpose.msra.mxu0 0
      %377 = vmatprep.subr.bf16.mxu0 0
      %378 = vmatpush1.bf16.xpose.msra.mxu0 0
      %379 = vmatprep.subr.bf16.mxu0 0
      %380 = vmatpush1.bf16.xpose.msra.mxu0 0
      %381 = vmatprep.subr.bf16.mxu0 0
      %382 = vmatpush1.bf16.xpose.msra.mxu0 0
      %383 = vmatprep.subr.bf16.mxu0 0
      %384 = vmatpush1.bf16.xpose.msra.mxu0 0
      %385 = vmatprep.mubr.bf16.mxu0 0
      %386 = vmatmul.mubr.bf16.gmra.mrb[0].mxu0 %v348
      %v387 = vpop.f32.mrb[0].mxu0
      %v388 = vadd.f32 0.0, %v387
      %v389 = vpop.f32.mrb[0].mxu0
      %v390 = vpop.f32.mrb[0].mxu0
      %v391 = vpop.f32.mrb[0].mxu0
      %392 = vdwg.mxu0
      %v393 = vmul.f32 %v388, 0.35355338
      %v394 = vsel %vm196, %v393, -1e+30
      %v395 = vld [vmem:[#allocation2] sm:$0xff]
      %v396 = vsel %vm199, %v394, -inf
      %397 = vmax.xlane.f32.xlu0 %v396
      %v398 = vpop.xlane.xlu0 %397
      %v399 = vmax.f32 %v395, %v398
      %v400 = vsub.f32 %v395, %v399
      %v401 = vmul.f32 %v400, 1.442695
      %v402 = vpow.pop %v401
      %404 = vset.pattern.permute.xlu0 1
      %405 = vperm.xlu0 %404, %v399
      %v406 = vpop.permute.xlu0 %405
      %v408 = vsub.f32 %v394, %v406
      %v409 = vmul.f32 %v408, 1.442695
      %v410 = vpow.pop %v409
      %v411 = vld [vmem:[#allocation3] sm:$0xff]
      %v412 = vmul.f32 %v402, %v411
      %v413 = vsel %vm199, %v410, 0.0
      %414 = vadd.xlane.f32.xlu0 %v413
      %v415 = vpop.xlane.xlu0 %414
      %v416 = vadd.f32 %v412, %v415
      %vm417 = vcmask 15368
      %418 = vst.msk [vmem:[#allocation3] sm:$0xff] %vm417, %v416
      %v419 = vpack.c.bf16 %v410, %v410
      %420 = vrot.lane.b32.xlu0 %v344, 88
      %v421 = vpop.permute.xlu0 %420
      %v423 = vsel %vm199, %v419, 0
      %v426 = vsel %vm281, %v421, 0
      %428 = vmatprep.subr.bf16.mxu0 0
      %429 = vmatpush1.bf16.msra.mxu0 %v426
      %430 = vmatprep.subr.bf16.mxu0 0
      %431 = vmatpush1.bf16.msra.mxu0 0
      %432 = vmatprep.subr.bf16.mxu0 0
      %433 = vmatpush1.bf16.msra.mxu0 0
      %434 = vmatprep.subr.bf16.mxu0 0
      %435 = vmatpush1.bf16.msra.mxu0 0
      %436 = vmatprep.subr.bf16.mxu0 0
      %437 = vmatpush1.bf16.msra.mxu0 0
      %438 = vmatprep.subr.bf16.mxu0 0
      %439 = vmatpush1.bf16.msra.mxu0 0
      %440 = vmatprep.subr.bf16.mxu0 0
      %441 = vmatpush1.bf16.msra.mxu0 0
      %442 = vmatprep.subr.bf16.mxu0 0
      %443 = vmatpush1.bf16.msra.mxu0 0
      %444 = vmatprep.subr.bf16.mxu0 0
      %445 = vmatpush1.bf16.msra.mxu0 0
      %446 = vmatprep.subr.bf16.mxu0 0
      %447 = vmatpush1.bf16.msra.mxu0 0
      %448 = vmatprep.subr.bf16.mxu0 0
      %449 = vmatpush1.bf16.msra.mxu0 0
      %450 = vmatprep.subr.bf16.mxu0 0
      %451 = vmatpush1.bf16.msra.mxu0 0
      %452 = vmatprep.subr.bf16.mxu0 0
      %453 = vmatpush1.bf16.msra.mxu0 0
      %454 = vmatprep.subr.bf16.mxu0 0
      %455 = vmatpush1.bf16.msra.mxu0 0
      %456 = vmatprep.subr.bf16.mxu0 0
      %457 = vmatpush1.bf16.msra.mxu0 0
      %458 = vmatprep.subr.bf16.mxu0 0
      %459 = vmatpush1.bf16.msra.mxu0 0
      %460 = vmatprep.mubr.bf16.mxu0 0
      %461 = vmatmul.mubr.bf16.gmra.mrb[0].mxu0 %v423
      %v462 = vpop.f32.mrb[0].mxu0
      %v463 = vadd.f32 0.0, %v462
      %v464 = vpop.f32.mrb[0].mxu0
      %v465 = vpop.f32.mrb[0].mxu0
      %v466 = vpop.f32.mrb[0].mxu0
      %467 = vdwg.mxu0
      %v468 = vld [vmem:[#allocation4] sm:$0xff]
      %470 = vset.pattern.permute.xlu0 1
      %471 = vperm.xlu0 %470, %v402
      %v472 = vpop.permute.xlu0 %471
      %v474 = vmul.f32 %v472, %v468
      %476 = vrot.lane.b32.xlu0 %v463, 8
      %v477 = vpop.permute.xlu0 %476
      %v479 = vadd.f32 %v474, %v477
      %vm480 = vcmask 130112
      %481 = vst.msk [vmem:[#allocation4] sm:$0xff] %vm480, %v479
      %482 = vst.msk [vmem:[#allocation2] sm:$0xff] %vm417, %v399
      %v483 = vld [vmem:[%s167] sm:$0xf]
      %v484 = vld [vmem:[%s174] sm:$0xf]
      %v486 = vunpack.c.l.b16 %v483
      %v487 = vpack.c.b16 %v486, %v486
      %488 = vrot.lane.b32.xlu0 %v487, 112
      %v489 = vpop.permute.xlu0 %488
      %v491 = vunpack.c.l.b16 %v484
      %v492 = vpack.c.b16 %v491, %v491
      %493 = vrot.lane.b32.xlu0 %v492, 112
      %v494 = vpop.permute.xlu0 %493
      %v496 = vsel %vm199, %v489, 0
      %v499 = vsel %vm199, %v494, 0
      %501 = vmatprep.subr.bf16.mxu0 0
      %502 = vmatpush1.bf16.xpose.msra.mxu0 %v499
      %503 = vmatprep.subr.bf16.mxu0 0
      %504 = vmatpush1.bf16.xpose.msra.mxu0 0
      %505 = vmatprep.subr.bf16.mxu0 0
      %506 = vmatpush1.bf16.xpose.msra.mxu0 0
      %507 = vmatprep.subr.bf16.mxu0 0
      %508 = vmatpush1.bf16.xpose.msra.mxu0 0
      %509 = vmatprep.subr.bf16.mxu0 0
      %510 = vmatpush1.bf16.xpose.msra.mxu0 0
      %511 = vmatprep.subr.bf16.mxu0 0
      %512 = vmatpush1.bf16.xpose.msra.mxu0 0
      %513 = vmatprep.subr.bf16.mxu0 0
      %514 = vmatpush1.bf16.xpose.msra.mxu0 0
      %515 = vmatprep.subr.bf16.mxu0 0
      %516 = vmatpush1.bf16.xpose.msra.mxu0 0
      %517 = vmatprep.subr.bf16.mxu0 0
      %518 = vmatpush1.bf16.xpose.msra.mxu0 0
      %519 = vmatprep.subr.bf16.mxu0 0
      %520 = vmatpush1.bf16.xpose.msra.mxu0 0
      %521 = vmatprep.subr.bf16.mxu0 0
      %522 = vmatpush1.bf16.xpose.msra.mxu0 0
      %523 = vmatprep.subr.bf16.mxu0 0
      %524 = vmatpush1.bf16.xpose.msra.mxu0 0
      %525 = vmatprep.subr.bf16.mxu0 0
      %526 = vmatpush1.bf16.xpose.msra.mxu0 0
      %527 = vmatprep.subr.bf16.mxu0 0
      %528 = vmatpush1.bf16.xpose.msra.mxu0 0
      %529 = vmatprep.subr.bf16.mxu0 0
      %530 = vmatpush1.bf16.xpose.msra.mxu0 0
      %531 = vmatprep.subr.bf16.mxu0 0
      %532 = vmatpush1.bf16.xpose.msra.mxu0 0
      %533 = vmatprep.mubr.bf16.mxu0 0
      %534 = vmatmul.mubr.bf16.gmra.mrb[0].mxu0 %v496
      %v535 = vpop.f32.mrb[0].mxu0
      %v536 = vadd.f32 0.0, %v535
      %v537 = vpop.f32.mrb[0].mxu0
      %v538 = vpop.f32.mrb[0].mxu0
      %v539 = vpop.f32.mrb[0].mxu0
      %540 = vdwg.mxu0
      %v541 = vmul.f32 %v536, 0.35355338
      %v542 = vsel %vm196, %v541, -1e+30
      %v543 = vld [vmem:[#allocation2] sm:$0xff]
      %v544 = vsel %vm199, %v542, -inf
      %545 = vmax.xlane.f32.xlu0 %v544
      %v546 = vpop.xlane.xlu0 %545
      %v547 = vmax.f32 %v543, %v546
      %v548 = vsub.f32 %v543, %v547
      %v549 = vmul.f32 %v548, 1.442695
      %v550 = vpow.pop %v549
      %552 = vset.pattern.permute.xlu0 2
      %553 = vperm.xlu0 %552, %v547
      %v554 = vpop.permute.xlu0 %553
      %v556 = vsub.f32 %v542, %v554
      %v557 = vmul.f32 %v556, 1.442695
      %v558 = vpow.pop %v557
      %v559 = vld [vmem:[#allocation3] sm:$0xff]
      %v560 = vmul.f32 %v550, %v559
      %v561 = vsel %vm199, %v558, 0.0
      %562 = vadd.xlane.f32.xlu0 %v561
      %v563 = vpop.xlane.xlu0 %562
      %v564 = vadd.f32 %v560, %v563
      %vm565 = vcmask 23568
      %566 = vst.msk [vmem:[#allocation3] sm:$0xff] %vm565, %v564
      %v567 = vpack.c.bf16 %v558, %v558
      %568 = vrot.lane.b32.xlu0 %v492, 80
      %v569 = vpop.permute.xlu0 %568
      %v571 = vsel %vm199, %v567, 0
      %v574 = vsel %vm281, %v569, 0
      %576 = vmatprep.subr.bf16.mxu0 0
      %577 = vmatpush1.bf16.msra.mxu0 %v574
      %578 = vmatprep.subr.bf16.mxu0 0
      %579 = vmatpush1.bf16.msra.mxu0 0
      %580 = vmatprep.subr.bf16.mxu0 0
      %581 = vmatpush1.bf16.msra.mxu0 0
      %582 = vmatprep.subr.bf16.mxu0 0
      %583 = vmatpush1.bf16.msra.mxu0 0
      %584 = vmatprep.subr.bf16.mxu0 0
      %585 = vmatpush1.bf16.msra.mxu0 0
      %586 = vmatprep.subr.bf16.mxu0 0
      %587 = vmatpush1.bf16.msra.mxu0 0
      %588 = vmatprep.subr.bf16.mxu0 0
      %589 = vmatpush1.bf16.msra.mxu0 0
      %590 = vmatprep.subr.bf16.mxu0 0
      %591 = vmatpush1.bf16.msra.mxu0 0
      %592 = vmatprep.subr.bf16.mxu0 0
      %593 = vmatpush1.bf16.msra.mxu0 0
      %594 = vmatprep.subr.bf16.mxu0 0
      %595 = vmatpush1.bf16.msra.mxu0 0
      %596 = vmatprep.subr.bf16.mxu0 0
      %597 = vmatpush1.bf16.msra.mxu0 0
      %598 = vmatprep.subr.bf16.mxu0 0
      %599 = vmatpush1.bf16.msra.mxu0 0
      %600 = vmatprep.subr.bf16.mxu0 0
      %601 = vmatpush1.bf16.msra.mxu0 0
      %602 = vmatprep.subr.bf16.mxu0 0
      %603 = vmatpush1.bf16.msra.mxu0 0
      %604 = vmatprep.subr.bf16.mxu0 0
      %605 = vmatpush1.bf16.msra.mxu0 0
      %606 = vmatprep.subr.bf16.mxu0 0
      %607 = vmatpush1.bf16.msra.mxu0 0
      %608 = vmatprep.mubr.bf16.mxu0 0
      %609 = vmatmul.mubr.bf16.gmra.mrb[0].mxu0 %v571
      %v610 = vpop.f32.mrb[0].mxu0
      %v611 = vadd.f32 0.0, %v610
      %v612 = vpop.f32.mrb[0].mxu0
      %v613 = vpop.f32.mrb[0].mxu0
      %v614 = vpop.f32.mrb[0].mxu0
      %615 = vdwg.mxu0
      %v616 = vld [vmem:[#allocation4] sm:$0xff]
      %618 = vset.pattern.permute.xlu0 2
      %619 = vperm.xlu0 %618, %v550
      %v620 = vpop.permute.xlu0 %619
      %v622 = vmul.f32 %v620, %v616
      %624 = vrot.lane.b32.xlu0 %v611, 16
      %v625 = vpop.permute.xlu0 %624
      %v627 = vadd.f32 %v622, %v625
      %vm628 = vcmask 195712
      %629 = vst.msk [vmem:[#allocation4] sm:$0xff] %vm628, %v627
      %630 = vst.msk [vmem:[#allocation2] sm:$0xff] %vm565, %v547
      %v631 = vld [vmem:[%s167] sm:$0xf]
      %v632 = vld [vmem:[%s174] sm:$0xf]
      %v634 = vunpack.c.l.b16 %v631
      %v635 = vpack.c.b16 %v634, %v634
      %636 = vrot.lane.b32.xlu0 %v635, 104
      %v637 = vpop.permute.xlu0 %636
      %v639 = vunpack.c.l.b16 %v632
      %v640 = vpack.c.b16 %v639, %v639
      %641 = vrot.lane.b32.xlu0 %v640, 104
      %v642 = vpop.permute.xlu0 %641
      %v644 = vsel %vm199, %v637, 0
      %v647 = vsel %vm199, %v642, 0
      %649 = vmatprep.subr.bf16.mxu0 0
      %650 = vmatpush1.bf16.xpose.msra.mxu0 %v647
      %651 = vmatprep.subr.bf16.mxu0 0
      %652 = vmatpush1.bf16.xpose.msra.mxu0 0
      %653 = vmatprep.subr.bf16.mxu0 0
      %654 = vmatpush1.bf16.xpose.msra.mxu0 0
      %655 = vmatprep.subr.bf16.mxu0 0
      %656 = vmatpush1.bf16.xpose.msra.mxu0 0
      %657 = vmatprep.subr.bf16.mxu0 0
      %658 = vmatpush1.bf16.xpose.msra.mxu0 0
      %659 = vmatprep.subr.bf16.mxu0 0
      %660 = vmatpush1.bf16.xpose.msra.mxu0 0
      %661 = vmatprep.subr.bf16.mxu0 0
      %662 = vmatpush1.bf16.xpose.msra.mxu0 0
      %663 = vmatprep.subr.bf16.mxu0 0
      %664 = vmatpush1.bf16.xpose.msra.mxu0 0
      %665 = vmatprep.subr.bf16.mxu0 0
      %666 = vmatpush1.bf16.xpose.msra.mxu0 0
      %667 = vmatprep.subr.bf16.mxu0 0
      %668 = vmatpush1.bf16.xpose.msra.mxu0 0
      %669 = vmatprep.subr.bf16.mxu0 0
      %670 = vmatpush1.bf16.xpose.msra.mxu0 0
      %671 = vmatprep.subr.bf16.mxu0 0
      %672 = vmatpush1.bf16.xpose.msra.mxu0 0
      %673 = vmatprep.subr.bf16.mxu0 0
      %674 = vmatpush1.bf16.xpose.msra.mxu0 0
      %675 = vmatprep.subr.bf16.mxu0 0
      %676 = vmatpush1.bf16.xpose.msra.mxu0 0
      %677 = vmatprep.subr.bf16.mxu0 0
      %678 = vmatpush1.bf16.xpose.msra.mxu0 0
      %679 = vmatprep.subr.bf16.mxu0 0
      %680 = vmatpush1.bf16.xpose.msra.mxu0 0
      %681 = vmatprep.mubr.bf16.mxu0 0
      %682 = vmatmul.mubr.bf16.gmra.mrb[0].mxu0 %v644
      %v683 = vpop.f32.mrb[0].mxu0
      %v684 = vadd.f32 0.0, %v683
      %v685 = vpop.f32.mrb[0].mxu0
      %v686 = vpop.f32.mrb[0].mxu0
      %v687 = vpop.f32.mrb[0].mxu0
      %688 = vdwg.mxu0
      %v689 = vmul.f32 %v684, 0.35355338
      %v690 = vsel %vm196, %v689, -1e+30
      %v691 = vld [vmem:[#allocation2] sm:$0xff]
      %v692 = vsel %vm199, %v690, -inf
      %693 = vmax.xlane.f32.xlu0 %v692
      %v694 = vpop.xlane.xlu0 %693
      %v695 = vmax.f32 %v691, %v694
      %v696 = vsub.f32 %v691, %v695
      %v697 = vmul.f32 %v696, 1.442695
      %v698 = vpow.pop %v697
      %700 = vset.pattern.permute.xlu0 3
      %701 = vperm.xlu0 %700, %v695
      %v702 = vpop.permute.xlu0 %701
      %v704 = vsub.f32 %v690, %v702
      %v705 = vmul.f32 %v704, 1.442695
      %v706 = vpow.pop %v705
      %v707 = vld [vmem:[#allocation3] sm:$0xff]
      %v708 = vmul.f32 %v698, %v707
      %v709 = vsel %vm199, %v706, 0.0
      %710 = vadd.xlane.f32.xlu0 %v709
      %v711 = vpop.xlane.xlu0 %710
      %v712 = vadd.f32 %v708, %v711
      %vm713 = vcmask 31768
      %714 = vst.msk [vmem:[#allocation3] sm:$0xff] %vm713, %v712
      %v715 = vpack.c.bf16 %v706, %v706
      %716 = vrot.lane.b32.xlu0 %v640, 72
      %v717 = vpop.permute.xlu0 %716
      %v719 = vsel %vm199, %v715, 0
      %v722 = vsel %vm281, %v717, 0
      %724 = vmatprep.subr.bf16.mxu0 0
      %725 = vmatpush1.bf16.msra.mxu0 %v722
      %726 = vmatprep.subr.bf16.mxu0 0
      %727 = vmatpush1.bf16.msra.mxu0 0
      %728 = vmatprep.subr.bf16.mxu0 0
      %729 = vmatpush1.bf16.msra.mxu0 0
      %730 = vmatprep.subr.bf16.mxu0 0
      %731 = vmatpush1.bf16.msra.mxu0 0
      %732 = vmatprep.subr.bf16.mxu0 0
      %733 = vmatpush1.bf16.msra.mxu0 0
      %734 = vmatprep.subr.bf16.mxu0 0
      %735 = vmatpush1.bf16.msra.mxu0 0
      %736 = vmatprep.subr.bf16.mxu0 0
      %737 = vmatpush1.bf16.msra.mxu0 0
      %738 = vmatprep.subr.bf16.mxu0 0
      %739 = vmatpush1.bf16.msra.mxu0 0
      %740 = vmatprep.subr.bf16.mxu0 0
      %741 = vmatpush1.bf16.msra.mxu0 0
      %742 = vmatprep.subr.bf16.mxu0 0
      %743 = vmatpush1.bf16.msra.mxu0 0
      %744 = vmatprep.subr.bf16.mxu0 0
      %745 = vmatpush1.bf16.msra.mxu0 0
      %746 = vmatprep.subr.bf16.mxu0 0
      %747 = vmatpush1.bf16.msra.mxu0 0
      %748 = vmatprep.subr.bf16.mxu0 0
      %749 = vmatpush1.bf16.msra.mxu0 0
      %750 = vmatprep.subr.bf16.mxu0 0
      %751 = vmatpush1.bf16.msra.mxu0 0
      %752 = vmatprep.subr.bf16.mxu0 0
      %753 = vmatpush1.bf16.msra.mxu0 0
      %754 = vmatprep.subr.bf16.mxu0 0
      %755 = vmatpush1.bf16.msra.mxu0 0
      %756 = vmatprep.mubr.bf16.mxu0 0
      %757 = vmatmul.mubr.bf16.gmra.mrb[0].mxu0 %v719
      %v758 = vpop.f32.mrb[0].mxu0
      %v759 = vadd.f32 0.0, %v758
      %v760 = vpop.f32.mrb[0].mxu0
      %v761 = vpop.f32.mrb[0].mxu0
      %v762 = vpop.f32.mrb[0].mxu0
      %763 = vdwg.mxu0
      %v764 = vld [vmem:[#allocation4] sm:$0xff]
      %766 = vset.pattern.permute.xlu0 3
      %767 = vperm.xlu0 %766, %v698
      %v768 = vpop.permute.xlu0 %767
      %v770 = vmul.f32 %v768, %v764
      %772 = vrot.lane.b32.xlu0 %v759, 24
      %v773 = vpop.permute.xlu0 %772
      %v775 = vadd.f32 %v770, %v773
      %vm776 = vcmask 261312
      %777 = vst.msk [vmem:[#allocation4] sm:$0xff] %vm776, %v775
      %778 = vst.msk [vmem:[#allocation2] sm:$0xff] %vm713, %v695
      // Predicated region
      $region33: #{language_transformer_forward.50} parent=27 // pred_check
        %p779 = pneg %p180
      $region34: #{language_transformer_forward.50} parent=27 // pred_check_branch
        %781 = sbr.rel (%p779) target = $region36
      $region35: #{language_transformer_forward.50} parent=27 // pred_region
        %v782 = vld [vmem:[#allocation3] sm:$0xff]
        %v783 = vrcp.pop %v782
        %v784 = vld [vmem:[#allocation4] sm:$0xff]
        %786 = vset.pattern.permute.xlu0 0
        %787 = vperm.xlu0 %786, %v783
        %v788 = vpop.permute.xlu0 %787
        %v790 = vmul.f32 %v784, %v788
        %791 = vst.msk [vmem:[#allocation4] sm:$0xff] %vm199, %v790
        %v792 = vld [vmem:[#allocation3] sm:$0xff]
        %v793 = vrcp.pop %v792
        %v794 = vld [vmem:[#allocation4] sm:$0xff]
        %796 = vset.pattern.permute.xlu0 1
        %797 = vperm.xlu0 %796, %v793
        %v798 = vpop.permute.xlu0 %797
        %v800 = vmul.f32 %v794, %v798
        %801 = vst.msk [vmem:[#allocation4] sm:$0xff] %vm480, %v800
        %v802 = vld [vmem:[#allocation3] sm:$0xff]
        %v803 = vrcp.pop %v802
        %v804 = vld [vmem:[#allocation4] sm:$0xff]
        %806 = vset.pattern.permute.xlu0 2
        %807 = vperm.xlu0 %806, %v803
        %v808 = vpop.permute.xlu0 %807
        %v810 = vmul.f32 %v804, %v808
        %811 = vst.msk [vmem:[#allocation4] sm:$0xff] %vm628, %v810
        %v812 = vld [vmem:[#allocation3] sm:$0xff]
        %v813 = vrcp.pop %v812
        %v814 = vld [vmem:[#allocation4] sm:$0xff]
        %816 = vset.pattern.permute.xlu0 3
        %817 = vperm.xlu0 %816, %v813
        %v818 = vpop.permute.xlu0 %817
        %v820 = vmul.f32 %v814, %v818
        %821 = vst.msk [vmem:[#allocation4] sm:$0xff] %vm776, %v820
        %v822 = vld [vmem:[#allocation4] sm:$0xff]
        %v823 = vpack.c.bf16 %v822, %v822
        %vm824 = vcmask 257024
        %825 = vst.msk [vmem:[%s178] sm:$0xf] %vm824, %v823
      $region36: #{language_transformer_forward.50} parent=27 // pred_fallthru
        _
      %p826 = scmp.lt.s32.totalorder %s17, 1
      %s827 = scalar_select %p826, %s17, 1
      %s828 = smul.addr %s827, 4
      %s829 = scalar_lea.vmem %s2, %s828
      // Predicated region
      $region37: #{language_transformer_forward.50} parent=27 // pred_check
        %p830 = pneg %p97
      $region38: #{language_transformer_forward.50} parent=27 // pred_check_branch
        %832 = sbr.rel (%p830) target = $region40
      $region39: #{language_transformer_forward.50} parent=27 // pred_region
        _
      $region40: #{language_transformer_forward.50} parent=27 // pred_fallthru
        _
    $region28: #{language_transformer_forward.50} parent=5 // pred_fallthru
      _
    %p833 = scmp.le.s32.totalorder 2, %s8
    // Predicated region
    $region41: #{language_transformer_forward.50} parent=5 // pred_check
      %p834 = pneg %p833
    $region42: #{language_transformer_forward.50} parent=5 // pred_check_branch
      %836 = sbr.rel (%p834) target = $region44
    $region43: #{language_transformer_forward.50} parent=5 // pred_region
      %s837 = ssub.s32 %s8, 2
      // Predicated region
      $region45: #{language_transformer_forward.50} parent=43 // pred_check
        %p838 = pneg %p103
      $region46: #{language_transformer_forward.50} parent=43 // pred_check_branch
        %840 = sbr.rel (%p838) target = $region48
      $region47: #{language_transformer_forward.50} parent=43 // pred_region
        %p841 = scmp.lt.s32.totalorder %s19, 1
        %s842 = scalar_select %p841, %s19, 1
        %s843 = smul.addr %s842, 4
        %s844 = scalar_lea.vmem %s2, %s843
      $region48: #{language_transformer_forward.50} parent=43 // pred_fallthru
        _
    $region44: #{language_transformer_forward.50} parent=5 // pred_fallthru
      _
  $region6: #{language_transformer_forward.50} parent=0 // loop_footer
    %s12 = sadd.s32 1, %s8
  $region7: #{language_transformer_forward.50} parent=0 // loop_footer_branch
    %7 = sbr.rel target = $region3
  $region8: #{language_transformer_forward.50} parent=0 // loop_exit
    _

// kernel: language_transformer_forward.39
$region0: #{language_transformer_forward.39}
  #allocation0 [shape = 'u32[]', space=smem, size = 0x4, offset = 0x4, fixed_abs, tag = 'smem constant byte address 0x4 - core index']
  #allocation1 [shape = 'u32[144,128]{1,0:T(1,128)}', space=vmem, size = 0x12000, scoped, tag = 'internal scratch']
  #allocation2 [shape = 'f32[16,64]{1,0:T(8,128)}', space=vmem, size = 0x2000, scoped, tag = 'scratch operand']
  %s0 = inlined_call_operand.vmem [shape: bf16[16,32], index: 0, kind: input, shape index: {}]
  %s1 = inlined_call_operand.vmem [shape: bf16[32,64], index: 1, kind: input, shape index: {}]
  %s2 = inlined_call_operand.vmem [shape: f32[1,64], index: 2, kind: input, shape index: {}]
  %s3 = inlined_call_operand.vmem [shape: bf16[16,64], index: 3, kind: output, shape index: {}]
  %s4 = sld [smem:[#allocation0]]
  $region30: #{language_transformer_forward.39} parent=0
    _
  %s6 = ssub.s32 1, %s4
  %s7 = scalar_select 0, %s6, %s4
  // Predicated region
  $region2: #{language_transformer_forward.39} parent=0 // pred_check
    _
  $region3: #{language_transformer_forward.39} parent=0 // pred_check_branch
    %9 = sbr.rel (0) target = $region5
  $region4: #{language_transformer_forward.39} parent=0 // pred_region
    _
  $region5: #{language_transformer_forward.39} parent=0 // pred_fallthru
    _
  // Predicated region
  $region6: #{language_transformer_forward.39} parent=0 // pred_check
    _
  $region7: #{language_transformer_forward.39} parent=0 // pred_check_branch
    %11 = sbr.rel (0) target = $region9
  $region8: #{language_transformer_forward.39} parent=0 // pred_region
    _
  $region9: #{language_transformer_forward.39} parent=0 // pred_fallthru
    _
  // Predicated region
  $region10: #{language_transformer_forward.39} parent=0 // pred_check
    _
  $region11: #{language_transformer_forward.39} parent=0 // pred_check_branch
    %13 = sbr.rel (0) target = $region13
  $region12: #{language_transformer_forward.39} parent=0 // pred_region
    _
  $region13: #{language_transformer_forward.39} parent=0 // pred_fallthru
    _
  %p15 = scmp.eq.s32.totalorder 0, 0
  // Predicated region
  $region14: #{language_transformer_forward.39} parent=0 // pred_check
    %p16 = pneg %p15
  $region15: #{language_transformer_forward.39} parent=0 // pred_check_branch
    %18 = sbr.rel (%p16) target = $region17
  $region16: #{language_transformer_forward.39} parent=0 // pred_region
    %vm19 = vcmask 523264
    %20 = vst.msk [vmem:[#allocation2] sm:$0xff] %vm19, 0.0
    %21 = vst.msk [vmem:[#allocation2 + $0x8] sm:$0xff] %vm19, 0.0
  $region17: #{language_transformer_forward.39} parent=0 // pred_fallthru
    _
  %v22 = vld [vmem:[%s0] sm:$0xf]
  %v23 = vld [vmem:[%s0 + $0x4] sm:$0xf]
  %v24 = vld [vmem:[#allocation2] sm:$0xff]
  %v25 = vld [vmem:[#allocation2 + $0x8] sm:$0xff]
  %v26 = vld [vmem:[%s1] sm:$0xf]
  %v27 = vld [vmem:[%s1 + $0x4] sm:$0xf]
  %v28 = vld [vmem:[%s1 + $0x8] sm:$0xf]
  %v29 = vld [vmem:[%s1 + $0xc] sm:$0xf]
  %v32 = vunpack.c.l.b16 %v22
  %v33 = vunpack.c.l.b16 %v23
  %v34 = vpack.c.b16 %v33, %v32
  %v39 = vunpack.c.l.b16 %v26
  %v40 = vunpack.c.l.b16 %v27
  %v41 = vunpack.c.l.b16 %v28
  %v42 = vunpack.c.l.b16 %v29
  %v43 = vpack.c.b16 %v40, %v39
  %v44 = vpack.c.b16 %v42, %v41
  %vm47 = vcmask 261120
  %v49 = vsel %vm47, %v34, 0
  %51 = vmatprep.subr.bf16.mxu0 0
  %52 = vmatpush1.bf16.msra.mxu0 %v43
  %53 = vmatprep.subr.bf16.mxu0 0
  %54 = vmatpush1.bf16.msra.mxu0 %v44
  %55 = vmatprep.subr.bf16.mxu0 0
  %56 = vmatpush1.bf16.msra.mxu0 0
  %57 = vmatprep.subr.bf16.mxu0 0
  %58 = vmatpush1.bf16.msra.mxu0 0
  %59 = vmatprep.subr.bf16.mxu0 0
  %60 = vmatpush1.bf16.msra.mxu0 0
  %61 = vmatprep.subr.bf16.mxu0 0
  %62 = vmatpush1.bf16.msra.mxu0 0
  %63 = vmatprep.subr.bf16.mxu0 0
  %64 = vmatpush1.bf16.msra.mxu0 0
  %65 = vmatprep.subr.bf16.mxu0 0
  %66 = vmatpush1.bf16.msra.mxu0 0
  %67 = vmatprep.subr.bf16.mxu0 0
  %68 = vmatpush1.bf16.msra.mxu0 0
  %69 = vmatprep.subr.bf16.mxu0 0
  %70 = vmatpush1.bf16.msra.mxu0 0
  %71 = vmatprep.subr.bf16.mxu0 0
  %72 = vmatpush1.bf16.msra.mxu0 0
  %73 = vmatprep.subr.bf16.mxu0 0
  %74 = vmatpush1.bf16.msra.mxu0 0
  %75 = vmatprep.subr.bf16.mxu0 0
  %76 = vmatpush1.bf16.msra.mxu0 0
  %77 = vmatprep.subr.bf16.mxu0 0
  %78 = vmatpush1.bf16.msra.mxu0 0
  %79 = vmatprep.subr.bf16.mxu0 0
  %80 = vmatpush1.bf16.msra.mxu0 0
  %81 = vmatprep.subr.bf16.mxu0 0
  %82 = vmatpush1.bf16.msra.mxu0 0
  %83 = vmatprep.mubr.bf16.mxu0 0
  %84 = vmatmul.mubr.bf16.gmra.mrb[0].mxu0 %v49
  %v85 = vpop.f32.mrb[0].mxu0
  %v86 = vadd.f32 0.0, %v85
  %v87 = vpop.f32.mrb[0].mxu0
  %v88 = vpop.f32.mrb[0].mxu0
  %v89 = vadd.f32 0.0, %v88
  %v90 = vpop.f32.mrb[0].mxu0
  %91 = vdwg.mxu0
  %v92 = vadd.f32 %v24, %v86
  %v93 = vadd.f32 %v25, %v89
  %vm94 = vcmask 523264
  %95 = vst.msk [vmem:[#allocation2] sm:$0xff] %vm94, %v92
  %96 = vst.msk [vmem:[#allocation2 + $0x8] sm:$0xff] %vm94, %v93
  // Predicated region
  $region18: #{language_transformer_forward.39} parent=0 // pred_check
    %p97 = pneg %p15
  $region19: #{language_transformer_forward.39} parent=0 // pred_check_branch
    %99 = sbr.rel (%p97) target = $region21
  $region20: #{language_transformer_forward.39} parent=0 // pred_region
    %v100 = vld [vmem:[#allocation2] sm:$0xff]
    %v101 = vld [vmem:[#allocation2 + $0x8] sm:$0xff]
    %v102 = vld [vmem:[%s2] sm:$0x1]
    %v104 = vlaneseq
    %v105 = vshrl.u32 %v104, 7
    %v106 = vsub.s32 0, %v105
    %v107 = vrot.slane %v102, %v106
    %v109 = vadd.f32 %v100, %v107
    %v110 = vadd.f32 %v101, %v107
    %v111 = vmax.f32 %v109, 0.0
    %v112 = vmax.f32 %v110, 0.0
    %v113 = vpack.c.bf16 %v112, %v111
    %v115 = vunpack.c.l.b16 %v113
    %v116 = vunpack.c.h.b16 %v113
    %v117 = vpack.c.b16 %v115, %v115
    %v118 = vpack.c.b16 %v116, %v116
    %vm121 = vcmask 519168
    %122 = vst.msk [vmem:[%s3] sm:$0xf] %vm121, %v117
    %123 = vst.msk [vmem:[%s3 + $0x4] sm:$0xf] %vm121, %v118
  $region21: #{language_transformer_forward.39} parent=0 // pred_fallthru
    _
  // Predicated region
  $region22: #{language_transformer_forward.39} parent=0 // pred_check
    _
  $region23: #{language_transformer_forward.39} parent=0 // pred_check_branch
    %125 = sbr.rel (0) target = $region25
  $region24: #{language_transformer_forward.39} parent=0 // pred_region
    _
  $region25: #{language_transformer_forward.39} parent=0 // pred_fallthru
    _
  // Predicated region
  $region26: #{language_transformer_forward.39} parent=0 // pred_check
    _
  $region27: #{language_transformer_forward.39} parent=0 // pred_check_branch
    %127 = sbr.rel (0) target = $region29
  $region28: #{language_transformer_forward.39} parent=0 // pred_region
    _
  $region29: #{language_transformer_forward.39} parent=0 // pred_fallthru
    _

// kernel: language_transformer_forward.47
$region0: #{language_transformer_forward.47}
  #allocation0 [shape = 'u32[]', space=smem, size = 0x4, offset = 0x4, fixed_abs, tag = 'smem constant byte address 0x4 - core index']
  #allocation1 [shape = 'u32[144,128]{1,0:T(1,128)}', space=vmem, size = 0x12000, scoped, tag = 'internal scratch']
  %s0 = inlined_call_operand.vmem [shape: bf16[16,32], index: 0, kind: input, shape index: {}]
  %s1 = inlined_call_operand.vmem [shape: f32[1,32], index: 1, kind: input, shape index: {}]
  %s2 = inlined_call_operand.vmem [shape: f32[1,32], index: 2, kind: input, shape index: {}]
  %s3 = inlined_call_operand.vmem [shape: bf16[16,32], index: 3, kind: output, shape index: {}]
  %s4 = sld [smem:[#allocation0]]
  $region22: #{language_transformer_forward.47} parent=0
    _
  %s6 = ssub.s32 1, %s4
  %s7 = scalar_select 0, %s6, %s4
  // Predicated region
  $region2: #{language_transformer_forward.47} parent=0 // pred_check
    _
  $region3: #{language_transformer_forward.47} parent=0 // pred_check_branch
    %9 = sbr.rel (0) target = $region5
  $region4: #{language_transformer_forward.47} parent=0 // pred_region
    _
  $region5: #{language_transformer_forward.47} parent=0 // pred_fallthru
    _
  // Predicated region
  $region6: #{language_transformer_forward.47} parent=0 // pred_check
    _
  $region7: #{language_transformer_forward.47} parent=0 // pred_check_branch
    %11 = sbr.rel (0) target = $region9
  $region8: #{language_transformer_forward.47} parent=0 // pred_region
    _
  $region9: #{language_transformer_forward.47} parent=0 // pred_fallthru
    _
  // Predicated region
  $region10: #{language_transformer_forward.47} parent=0 // pred_check
    _
  $region11: #{language_transformer_forward.47} parent=0 // pred_check_branch
    %13 = sbr.rel (0) target = $region13
  $region12: #{language_transformer_forward.47} parent=0 // pred_region
    _
  $region13: #{language_transformer_forward.47} parent=0 // pred_fallthru
    _
  %v14 = vld [vmem:[%s0] sm:$0xf]
  %v15 = vld [vmem:[%s0 + $0x4] sm:$0xf]
  %v16 = vunpack.c.l.bf16 %v14
  %v17 = vunpack.c.l.bf16 %v15
  %vm18 = vcmask 261120
  %v19 = vsel %vm18, %v16, 0.0
  %20 = vadd.xlane.f32.xlu0 %v19
  %v21 = vpop.xlane.xlu0 %20
  %v22 = vsel %vm18, %v17, 0.0
  %23 = vadd.xlane.f32.xlu0 %v22
  %v24 = vpop.xlane.xlu0 %23
  %v25 = vrcp.pop 32.0
  %v26 = vmul.f32 %v21, %v25
  %v27 = vmul.f32 %v24, %v25
  %v28 = vsub.f32 %v16, %v26
  %v29 = vsub.f32 %v17, %v27
  %v30 = vmul.f32 %v28, %v28
  %v31 = vmul.f32 %v29, %v29
  %v32 = vsel %vm18, %v30, 0.0
  %33 = vadd.xlane.f32.xlu0 %v32
  %v34 = vpop.xlane.xlu0 %33
  %v35 = vsel %vm18, %v31, 0.0
  %36 = vadd.xlane.f32.xlu0 %v35
  %v37 = vpop.xlane.xlu0 %36
  %v38 = vmul.f32 %v34, %v25
  %v39 = vmul.f32 %v37, %v25
  %v40 = vadd.f32 %v38, 1e-05
  %v41 = vadd.f32 %v39, 1e-05
  %v42 = vrsqrt.pop %v40
  %v43 = vrsqrt.pop %v41
  %v44 = vmul.f32 %v28, %v42
  %v45 = vmul.f32 %v29, %v43
  %v46 = vld [vmem:[%s1] sm:$0x1]
  %v48 = vlaneseq
  %v49 = vshrl.u32 %v48, 7
  %v50 = vsub.s32 0, %v49
  %v51 = vrot.slane %v46, %v50
  %v53 = vmul.f32 %v44, %v51
  %v54 = vmul.f32 %v45, %v51
  %v55 = vld [vmem:[%s2] sm:$0x1]
  %v57 = vlaneseq
  %v58 = vshrl.u32 %v57, 7
  %v59 = vsub.s32 0, %v58
  %v60 = vrot.slane %v55, %v59
  %v62 = vadd.f32 %v53, %v60
  %v63 = vadd.f32 %v54, %v60
  %v64 = vpack.c.bf16 %v63, %v62
  %v66 = vunpack.c.l.b16 %v64
  %v67 = vunpack.c.h.b16 %v64
  %v68 = vpack.c.b16 %v66, %v66
  %v69 = vpack.c.b16 %v67, %v67
  %vm72 = vcmask 257024
  %73 = vst.msk [vmem:[%s3] sm:$0xf] %vm72, %v68
  %74 = vst.msk [vmem:[%s3 + $0x4] sm:$0xf] %vm72, %v69
  // Predicated region
  $region14: #{language_transformer_forward.47} parent=0 // pred_check
    _
  $region15: #{language_transformer_forward.47} parent=0 // pred_check_branch
    %76 = sbr.rel (0) target = $region17
  $region16: #{language_transformer_forward.47} parent=0 // pred_region
    _
  $region17: #{language_transformer_forward.47} parent=0 // pred_fallthru
    _
  // Predicated region
  $region18: #{language_transformer_forward.47} parent=0 // pred_check
    _
  $region19: #{language_transformer_forward.47} parent=0 // pred_check_branch
    %78 = sbr.rel (0) target = $region21
  $region20: #{language_transformer_forward.47} parent=0 // pred_region
    _
  $region21: #{language_transformer_forward.47} parent=0 // pred_fallthru
    _

// kernel: language_transformer_forward.40
$region0: #{language_transformer_forward.40}
  #allocation0 [shape = 'u32[]', space=smem, size = 0x4, offset = 0x4, fixed_abs, tag = 'smem constant byte address 0x4 - core index']
  #allocation1 [shape = 'u32[144,128]{1,0:T(1,128)}', space=vmem, size = 0x12000, scoped, tag = 'internal scratch']
  #allocation2 [shape = 'f32[16,32]{1,0:T(8,128)}', space=vmem, size = 0x2000, scoped, tag = 'scratch operand']
  %s0 = inlined_call_operand.vmem [shape: bf16[16,64], index: 0, kind: input, shape index: {}]
  %s1 = inlined_call_operand.vmem [shape: bf16[64,32], index: 1, kind: input, shape index: {}]
  %s2 = inlined_call_operand.vmem [shape: f32[1,32], index: 2, kind: input, shape index: {}]
  %s3 = inlined_call_operand.vmem [shape: bf16[16,32], index: 3, kind: input, shape index: {}]
  %s4 = inlined_call_operand.vmem [shape: f32[1,32], index: 4, kind: input, shape index: {}]
  %s5 = inlined_call_operand.vmem [shape: f32[1,32], index: 5, kind: input, shape index: {}]
  %s6 = inlined_call_operand.vmem [shape: bf16[16,32], index: 6, kind: output, shape index: {}]
  %s7 = sld [smem:[#allocation0]]
  $region42: #{language_transformer_forward.40} parent=0
    _
  %s9 = ssub.s32 1, %s7
  %s10 = scalar_select 0, %s9, %s7
  // Predicated region
  $region2: #{language_transformer_forward.40} parent=0 // pred_check
    _
  $region3: #{language_transformer_forward.40} parent=0 // pred_check_branch
    %12 = sbr.rel (0) target = $region5
  $region4: #{language_transformer_forward.40} parent=0 // pred_region
    _
  $region5: #{language_transformer_forward.40} parent=0 // pred_fallthru
    _
  // Predicated region
  $region6: #{language_transformer_forward.40} parent=0 // pred_check
    _
  $region7: #{language_transformer_forward.40} parent=0 // pred_check_branch
    %14 = sbr.rel (0) target = $region9
  $region8: #{language_transformer_forward.40} parent=0 // pred_region
    _
  $region9: #{language_transformer_forward.40} parent=0 // pred_fallthru
    _
  // Predicated region
  $region10: #{language_transformer_forward.40} parent=0 // pred_check
    _
  $region11: #{language_transformer_forward.40} parent=0 // pred_check_branch
    %16 = sbr.rel (0) target = $region13
  $region12: #{language_transformer_forward.40} parent=0 // pred_region
    _
  $region13: #{language_transformer_forward.40} parent=0 // pred_fallthru
    _
  // Predicated region
  $region14: #{language_transformer_forward.40} parent=0 // pred_check
    _
  $region15: #{language_transformer_forward.40} parent=0 // pred_check_branch
    %18 = sbr.rel (0) target = $region17
  $region16: #{language_transformer_forward.40} parent=0 // pred_region
    _
  $region17: #{language_transformer_forward.40} parent=0 // pred_fallthru
    _
  // Predicated region
  $region18: #{language_transformer_forward.40} parent=0 // pred_check
    _
  $region19: #{language_transformer_forward.40} parent=0 // pred_check_branch
    %20 = sbr.rel (0) target = $region21
  $region20: #{language_transformer_forward.40} parent=0 // pred_region
    _
  $region21: #{language_transformer_forward.40} parent=0 // pred_fallthru
    _
  // Predicated region
  $region22: #{language_transformer_forward.40} parent=0 // pred_check
    _
  $region23: #{language_transformer_forward.40} parent=0 // pred_check_branch
    %22 = sbr.rel (0) target = $region25
  $region24: #{language_transformer_forward.40} parent=0 // pred_region
    _
  $region25: #{language_transformer_forward.40} parent=0 // pred_fallthru
    _
  %p24 = scmp.eq.s32.totalorder 0, 0
  // Predicated region
  $region26: #{language_transformer_forward.40} parent=0 // pred_check
    %p25 = pneg %p24
  $region27: #{language_transformer_forward.40} parent=0 // pred_check_branch
    %27 = sbr.rel (%p25) target = $region29
  $region28: #{language_transformer_forward.40} parent=0 // pred_region
    %vm28 = vcmask 261120
    %29 = vst.msk [vmem:[#allocation2] sm:$0xff] %vm28, 0.0
    %30 = vst.msk [vmem:[#allocation2 + $0x8] sm:$0xff] %vm28, 0.0
  $region29: #{language_transformer_forward.40} parent=0 // pred_fallthru
    _
  %v31 = vld [vmem:[%s0] sm:$0xf]
  %v32 = vld [vmem:[%s0 + $0x4] sm:$0xf]
  %v33 = vld [vmem:[#allocation2] sm:$0xff]
  %v34 = vld [vmem:[#allocation2 + $0x8] sm:$0xff]
  %v35 = vld [vmem:[%s1] sm:$0xf]
  %v36 = vld [vmem:[%s1 + $0x4] sm:$0xf]
  %v37 = vld [vmem:[%s1 + $0x8] sm:$0xf]
  %v38 = vld [vmem:[%s1 + $0xc] sm:$0xf]
  %v39 = vld [vmem:[%s1 + $0x10] sm:$0xf]
  %v40 = vld [vmem:[%s1 + $0x14] sm:$0xf]
  %v41 = vld [vmem:[%s1 + $0x18] sm:$0xf]
  %v42 = vld [vmem:[%s1 + $0x1c] sm:$0xf]
  %v45 = vunpack.c.l.b16 %v31
  %v46 = vunpack.c.l.b16 %v32
  %v47 = vpack.c.b16 %v46, %v45
  %v56 = vunpack.c.l.b16 %v35
  %v57 = vunpack.c.l.b16 %v36
  %v58 = vunpack.c.l.b16 %v37
  %v59 = vunpack.c.l.b16 %v38
  %v60 = vunpack.c.l.b16 %v39
  %v61 = vunpack.c.l.b16 %v40
  %v62 = vunpack.c.l.b16 %v41
  %v63 = vunpack.c.l.b16 %v42
  %v64 = vpack.c.b16 %v57, %v56
  %v65 = vpack.c.b16 %v59, %v58
  %v66 = vpack.c.b16 %v61, %v60
  %v67 = vpack.c.b16 %v63, %v62
  %vm72 = vcmask 523264
  %v74 = vsel %vm72, %v47, 0
  %76 = vmatprep.subr.bf16.mxu0 0
  %77 = vmatpush1.bf16.msra.mxu0 %v64
  %78 = vmatprep.subr.bf16.mxu0 0
  %79 = vmatpush1.bf16.msra.mxu0 %v65
  %80 = vmatprep.subr.bf16.mxu0 0
  %81 = vmatpush1.bf16.msra.mxu0 %v66
  %82 = vmatprep.subr.bf16.mxu0 0
  %83 = vmatpush1.bf16.msra.mxu0 %v67
  %84 = vmatprep.subr.bf16.mxu0 0
  %85 = vmatpush1.bf16.msra.mxu0 0
  %86 = vmatprep.subr.bf16.mxu0 0
  %87 = vmatpush1.bf16.msra.mxu0 0
  %88 = vmatprep.subr.bf16.mxu0 0
  %89 = vmatpush1.bf16.msra.mxu0 0
  %90 = vmatprep.subr.bf16.mxu0 0
  %91 = vmatpush1.bf16.msra.mxu0 0
  %92 = vmatprep.subr.bf16.mxu0 0
  %93 = vmatpush1.bf16.msra.mxu0 0
  %94 = vmatprep.subr.bf16.mxu0 0
  %95 = vmatpush1.bf16.msra.mxu0 0
  %96 = vmatprep.subr.bf16.mxu0 0
  %97 = vmatpush1.bf16.msra.mxu0 0
  %98 = vmatprep.subr.bf16.mxu0 0
  %99 = vmatpush1.bf16.msra.mxu0 0
  %100 = vmatprep.subr.bf16.mxu0 0
  %101 = vmatpush1.bf16.msra.mxu0 0
  %102 = vmatprep.subr.bf16.mxu0 0
  %103 = vmatpush1.bf16.msra.mxu0 0
  %104 = vmatprep.subr.bf16.mxu0 0
  %105 = vmatpush1.bf16.msra.mxu0 0
  %106 = vmatprep.subr.bf16.mxu0 0
  %107 = vmatpush1.bf16.msra.mxu0 0
  %108 = vmatprep.mubr.bf16.mxu0 0
  %109 = vmatmul.mubr.bf16.gmra.mrb[0].mxu0 %v74
  %v110 = vpop.f32.mrb[0].mxu0
  %v111 = vadd.f32 0.0, %v110
  %v112 = vpop.f32.mrb[0].mxu0
  %v113 = vpop.f32.mrb[0].mxu0
  %v114 = vadd.f32 0.0, %v113
  %v115 = vpop.f32.mrb[0].mxu0
  %116 = vdwg.mxu0
  %v117 = vadd.f32 %v33, %v111
  %v118 = vadd.f32 %v34, %v114
  %vm119 = vcmask 261120
  %120 = vst.msk [vmem:[#allocation2] sm:$0xff] %vm119, %v117
  %121 = vst.msk [vmem:[#allocation2 + $0x8] sm:$0xff] %vm119, %v118
  // Predicated region
  $region30: #{language_transformer_forward.40} parent=0 // pred_check
    %p122 = pneg %p24
  $region31: #{language_transformer_forward.40} parent=0 // pred_check_branch
    %124 = sbr.rel (%p122) target = $region33
  $region32: #{language_transformer_forward.40} parent=0 // pred_region
    %v125 = vld [vmem:[#allocation2] sm:$0xff]
    %v126 = vld [vmem:[#allocation2 + $0x8] sm:$0xff]
    %v127 = vld [vmem:[%s2] sm:$0x1]
    %v129 = vlaneseq
    %v130 = vshrl.u32 %v129, 7
    %v131 = vsub.s32 0, %v130
    %v132 = vrot.slane %v127, %v131
    %v134 = vadd.f32 %v125, %v132
    %v135 = vadd.f32 %v126, %v132
    %v136 = vld [vmem:[%s3] sm:$0xf]
    %v137 = vld [vmem:[%s3 + $0x4] sm:$0xf]
    %v138 = vunpack.c.l.bf16 %v136
    %v139 = vunpack.c.l.bf16 %v137
    %v140 = vadd.f32 %v134, %v138
    %v141 = vadd.f32 %v135, %v139
    %v142 = vsel %vm119, %v140, 0.0
    %143 = vadd.xlane.f32.xlu0 %v142
    %v144 = vpop.xlane.xlu0 %143
    %v145 = vsel %vm119, %v141, 0.0
    %146 = vadd.xlane.f32.xlu0 %v145
    %v147 = vpop.xlane.xlu0 %146
    %v148 = vrcp.pop 32.0
    %v149 = vmul.f32 %v144, %v148
    %v150 = vmul.f32 %v147, %v148
    %v151 = vsub.f32 %v140, %v149
    %v152 = vsub.f32 %v141, %v150
    %v153 = vmul.f32 %v151, %v151
    %v154 = vmul.f32 %v152, %v152
    %v155 = vsel %vm119, %v153, 0.0
    %156 = vadd.xlane.f32.xlu0 %v155
    %v157 = vpop.xlane.xlu0 %156
    %v158 = vsel %vm119, %v154, 0.0
    %159 = vadd.xlane.f32.xlu0 %v158
    %v160 = vpop.xlane.xlu0 %159
    %v161 = vmul.f32 %v157, %v148
    %v162 = vmul.f32 %v160, %v148
    %v163 = vadd.f32 %v161, 1e-05
    %v164 = vadd.f32 %v162, 1e-05
    %v165 = vrsqrt.pop %v163
    %v166 = vrsqrt.pop %v164
    %v167 = vmul.f32 %v151, %v165
    %v168 = vmul.f32 %v152, %v166
    %v169 = vld [vmem:[%s4] sm:$0x1]
    %v171 = vlaneseq
    %v172 = vshrl.u32 %v171, 7
    %v173 = vsub.s32 0, %v172
    %v174 = vrot.slane %v169, %v173
    %v176 = vmul.f32 %v167, %v174
    %v177 = vmul.f32 %v168, %v174
    %v178 = vld [vmem:[%s5] sm:$0x1]
    %v180 = vlaneseq
    %v181 = vshrl.u32 %v180, 7
    %v182 = vsub.s32 0, %v181
    %v183 = vrot.slane %v178, %v182
    %v185 = vadd.f32 %v176, %v183
    %v186 = vadd.f32 %v177, %v183
    %v187 = vpack.c.bf16 %v186, %v185
    %v189 = vunpack.c.l.b16 %v187
    %v190 = vunpack.c.h.b16 %v187
    %v191 = vpack.c.b16 %v189, %v189
    %v192 = vpack.c.b16 %v190, %v190
    %vm195 = vcmask 257024
    %196 = vst.msk [vmem:[%s6] sm:$0xf] %vm195, %v191
    %197 = vst.msk [vmem:[%s6 + $0x4] sm:$0xf] %vm195, %v192
  $region33: #{language_transformer_forward.40} parent=0 // pred_fallthru
    _
  // Predicated region
  $region34: #{language_transformer_forward.40} parent=0 // pred_check
    _
  $region35: #{language_transformer_forward.40} parent=0 // pred_check_branch
    %199 = sbr.rel (0) target = $region37
  $region36: #{language_transformer_forward.40} parent=0 // pred_region
    _
  $region37: #{language_transformer_forward.40} parent=0 // pred_fallthru
    _
  // Predicated region
  $region38: #{language_transformer_forward.40} parent=0 // pred_check
    _
  $region39: #{language_transformer_forward.40} parent=0 // pred_check_branch
    %201 = sbr.rel (0) target = $region41
  $region40: #{language_transformer_forward.40} parent=0 // pred_region
    _
  $region41: #{language_transformer_forward.40} parent=0 // pred_fallthru
    _

// kernel: language_transformer_forward.37
$region0: #{language_transformer_forward.37}
  #allocation0 [shape = 'u32[]', space=smem, size = 0x4, offset = 0x4, fixed_abs, tag = 'smem constant byte address 0x4 - core index']
  #allocation1 [shape = 'u32[144,128]{1,0:T(1,128)}', space=vmem, size = 0x12000, scoped, tag = 'internal scratch']
  #allocation2 [shape = 'f32[8,4]{1,0:T(8,128)}', space=vmem, size = 0x1000, scoped, tag = 'scratch operand']
  #allocation3 [shape = 'f32[8,4]{1,0:T(8,128)}', space=vmem, size = 0x1000, scoped, tag = 'scratch operand']
  #allocation4 [shape = 'f32[8,32]{1,0:T(8,128)}', space=vmem, size = 0x1000, scoped, tag = 'scratch operand']
  %s0 = inlined_call_operand.vmem [shape: bf16[2,8,32], index: 0, kind: input, shape index: {}]
  %s1 = inlined_call_operand.vmem [shape: bf16[2,8,64], index: 1, kind: input, shape index: {}]
  %s2 = inlined_call_operand.vmem [shape: bf16[2,8,32], index: 2, kind: output, shape index: {}]
  %s3 = sld [smem:[#allocation0]]
  $region49: #{language_transformer_forward.37} parent=0
    _
  %s5 = ssub.s32 1, %s3
  %s6 = scalar_select 0, %s5, %s3
  loop: start=0, step=1, limit=4
  $region2: #{language_transformer_forward.37} parent=0 // loop_pre_header
    _
  $region3: #{language_transformer_forward.37} parent=0 // loop_header
    %s8 = sphi 0, %s12
    %p9 = scmp.ge.s32.totalorder %s8, 4
    %s15 = sphi 0, %s27
    %s16 = sphi 0, %s23
    %s17 = sphi 0, %s15
    %s18 = sphi 0, %s16
    %s19 = sphi 0, %s17
    %s20 = sphi 0, %s18
    %s30 = sphi 0, %s32
    %s33 = sphi 0, %s30
    %s34 = sphi 0, %s33
    %s50 = sphi 0, %s34
    %s58 = sphi 0, %s60
    %s61 = sphi 0, %s58
    %s62 = sphi 0, %s61
    %s78 = sphi 0, %s62
    %s84 = sphi 0, %s86
    %s87 = sphi 0, %s84
    %s88 = sphi 0, %s87
    %s104 = sphi 0, %s88
  $region4: #{language_transformer_forward.37} parent=0 // loop_header_branch
    %11 = sbr.rel (%p9) target = $region8
  $region5: #{language_transformer_forward.37} parent=0 // loop_body
    %s13 = ssub.s32 %s8, 1
    %s14 = ssub.s32 %s8, 2
    %s21 = sadd.s32 1, %s16
    %p22 = scmp.ge.s32.totalorder %s21, 1
    %s23 = scalar_select %p22, 0, %s21
    %s24 = sadd.s32 1, %s15
    %s25 = scalar_select %p22, %s24, %s15
    %p26 = scmp.ge.s32.totalorder %s25, 2
    %s27 = scalar_select %p26, 0, %s25
    %s28 = ssub.s32 %s15, %s27
    %p29 = scmp.eq.s32.totalorder %s28, 0
    %s31 = sadd.s32 %s30, 1
    %s32 = scalar_select %p29, %s30, %s31
    %p35 = pneg %p29
    %p36 = scmp.eq.s32.totalorder %s8, 1
    %p37 = por %p35, %p36
    %p38 = scmp.ne.s32.totalorder %s30, %s33
    %p39 = scmp.eq.s32.totalorder %s8, 0
    %p40 = por %p38, %p39
    %p41 = scmp.ne.s32.totalorder %s30, %s33
    %p42 = scmp.eq.s32.totalorder %s13, 1
    %p43 = por %p41, %p42
    %p44 = scmp.ne.s32.totalorder %s33, %s34
    %p45 = scmp.eq.s32.totalorder %s13, 0
    %p46 = por %p44, %p45
    %p47 = scmp.ne.s32.totalorder %s33, %s34
    %p48 = scmp.eq.s32.totalorder %s14, 1
    %p49 = por %p47, %p48
    %p51 = scmp.ne.s32.totalorder %s34, %s50
    %p52 = scmp.eq.s32.totalorder %s14, 0
    %p53 = por %p51, %p52
    %s54 = ssub.s32 %s15, %s27
    %s55 = ssub.s32 %s16, %s23
    %s56 = sor.u32 %s54, %s55
    %p57 = scmp.eq.s32.totalorder %s56, 0
    %s59 = sadd.s32 %s58, 1
    %s60 = scalar_select %p57, %s58, %s59
    %p63 = pneg %p57
    %p64 = scmp.eq.s32.totalorder %s8, 1
    %p65 = por %p63, %p64
    %p66 = scmp.ne.s32.totalorder %s58, %s61
    %p67 = scmp.eq.s32.totalorder %s8, 0
    %p68 = por %p66, %p67
    %p69 = scmp.ne.s32.totalorder %s58, %s61
    %p70 = scmp.eq.s32.totalorder %s13, 1
    %p71 = por %p69, %p70
    %p72 = scmp.ne.s32.totalorder %s61, %s62
    %p73 = scmp.eq.s32.totalorder %s13, 0
    %p74 = por %p72, %p73
    %p75 = scmp.ne.s32.totalorder %s61, %s62
    %p76 = scmp.eq.s32.totalorder %s14, 1
    %p77 = por %p75, %p76
    %p79 = scmp.ne.s32.totalorder %s62, %s78
    %p80 = scmp.eq.s32.totalorder %s14, 0
    %p81 = por %p79, %p80
    %s82 = ssub.s32 %s15, %s27
    %p83 = scmp.eq.s32.totalorder %s82, 0
    %s85 = sadd.s32 %s84, 1
    %s86 = scalar_select %p83, %s84, %s85
    %p89 = pneg %p83
    %p90 = scmp.eq.s32.totalorder %s8, 1
    %p91 = por %p89, %p90
    %p92 = scmp.ne.s32.totalorder %s84, %s87
    %p93 = scmp.eq.s32.totalorder %s8, 0
    %p94 = por %p92, %p93
    %p95 = scmp.ne.s32.totalorder %s84, %s87
    %p96 = scmp.eq.s32.totalorder %s13, 1
    %p97 = por %p95, %p96
    %p98 = scmp.ne.s32.totalorder %s87, %s88
    %p99 = scmp.eq.s32.totalorder %s13, 0
    %p100 = por %p98, %p99
    %p101 = scmp.ne.s32.totalorder %s87, %s88
    %p102 = scmp.eq.s32.totalorder %s14, 1
    %p103 = por %p101, %p102
    %p105 = scmp.ne.s32.totalorder %s88, %s104
    %p106 = scmp.eq.s32.totalorder %s14, 0
    %p107 = por %p105, %p106
    %p108 = scmp.le.s32.totalorder 1, %s8
    %p109 = scmp.lt.s32.totalorder %s8, 3
    %p110 = pnand %p108, %p109
    %p111 = pneg %p110
    // Predicated region
    $region9: #{language_transformer_forward.37} parent=5 // pred_check
      _
    $region10: #{language_transformer_forward.37} parent=5 // pred_check_branch
      %113 = sbr.rel (%p110) target = $region12
    $region11: #{language_transformer_forward.37} parent=5 // pred_region
      %s114 = ssub.s32 %s8, 1
    $region12: #{language_transformer_forward.37} parent=5 // pred_fallthru
      _
    %p115 = scmp.lt.s32.totalorder %s8, 2
    // Predicated region
    $region13: #{language_transformer_forward.37} parent=5 // pred_check
      %p116 = pneg %p115
    $region14: #{language_transformer_forward.37} parent=5 // pred_check_branch
      %118 = sbr.rel (%p116) target = $region16
    $region15: #{language_transformer_forward.37} parent=5 // pred_region
      // Predicated region
      $region17: #{language_transformer_forward.37} parent=15 // pred_check
        %p119 = pneg %p40
      $region18: #{language_transformer_forward.37} parent=15 // pred_check_branch
        %121 = sbr.rel (%p119) target = $region20
      $region19: #{language_transformer_forward.37} parent=15 // pred_region
        %p122 = scmp.lt.s32.totalorder %s15, 1
        %s123 = scalar_select %p122, %s15, 1
        %s124 = smul.addr %s123, 4
        %s125 = scalar_lea.vmem %s0, %s124
      $region20: #{language_transformer_forward.37} parent=15 // pred_fallthru
        _
      // Predicated region
      $region21: #{language_transformer_forward.37} parent=15 // pred_check
        %p126 = pneg %p68
      $region22: #{language_transformer_forward.37} parent=15 // pred_check_branch
        %128 = sbr.rel (%p126) target = $region24
      $region23: #{language_transformer_forward.37} parent=15 // pred_region
        %p129 = scmp.lt.s32.totalorder %s15, 1
        %s130 = scalar_select %p129, %s15, 1
        %p131 = scmp.lt.s32.totalorder %s16, 0
        %s132 = scalar_select %p131, %s16, 0
        %s133 = sadd.s32 %s132, %s130
        %s134 = smul.addr %s133, 4
        %s135 = scalar_lea.vmem %s1, %s134
      $region24: #{language_transformer_forward.37} parent=15 // pred_fallthru
        _
    $region16: #{language_transformer_forward.37} parent=5 // pred_fallthru
      _
    %p136 = scmp.le.s32.totalorder 1, %s8
    %p137 = scmp.lt.s32.totalorder %s8, 3
    %p138 = pnand %p136, %p137
    %p139 = pneg %p138
    // Predicated region
    $region25: #{language_transformer_forward.37} parent=5 // pred_check
      _
    $region26: #{language_transformer_forward.37} parent=5 // pred_check_branch
      %141 = sbr.rel (%p138) target = $region28
    $region27: #{language_transformer_forward.37} parent=5 // pred_region
      %s142 = ssub.s32 %s8, 1
      %p143 = scmp.lt.s32.totalorder %s17, 1
      %s144 = scalar_select %p143, %s17, 1
      %s145 = smul.addr %s144, 4
      %s146 = scalar_lea.vmem %s0, %s145
      %p147 = pneg %p46
      %p148 = pneg %p43
      %p149 = scmp.lt.s32.totalorder %s17, 1
      %s150 = scalar_select %p149, %s17, 1
      %p151 = scmp.lt.s32.totalorder %s18, 0
      %s152 = scalar_select %p151, %s18, 0
      %s153 = sadd.s32 %s152, %s150
      %s154 = smul.addr %s153, 4
      %s155 = scalar_lea.vmem %s1, %s154
      %p156 = pneg %p74
      %p157 = pneg %p71
      %p158 = pneg %p100
      %p159 = pneg %p97
      %p160 = scmp.lt.s32.totalorder %s17, 1
      %s161 = scalar_select %p160, %s17, 1
      %s162 = smul.addr %s161, 4
      %s163 = scalar_lea.vmem %s2, %s162
      %p164 = scmp.lt.s32.totalorder %s17, 1
      %s165 = scalar_select %p164, %s17, 1
      %s166 = smul.addr %s165, 4
      %s167 = scalar_lea.vmem %s0, %s166
      %p168 = scmp.lt.s32.totalorder %s17, 1
      %s169 = scalar_select %p168, %s17, 1
      %p170 = scmp.lt.s32.totalorder %s18, 0
      %s171 = scalar_select %p170, %s18, 0
      %s172 = sadd.s32 %s171, %s169
      %s173 = smul.addr %s172, 4
      %s174 = scalar_lea.vmem %s1, %s173
      %p175 = scmp.lt.s32.totalorder %s17, 1
      %s176 = scalar_select %p175, %s17, 1
      %s177 = smul.addr %s176, 4
      %s178 = scalar_lea.vmem %s2, %s177
      %p180 = scmp.eq.s32.totalorder %s18, 0
      // Predicated region
      $region29: #{language_transformer_forward.37} parent=27 // pred_check
        %p181 = pneg %p180
      $region30: #{language_transformer_forward.37} parent=27 // pred_check_branch
        %183 = sbr.rel (%p181) target = $region32
      $region31: #{language_transformer_forward.37} parent=27 // pred_region
        %vm184 = vcmask 31744
        %185 = vst.msk [vmem:[#allocation2] sm:$0xff] %vm184, -1e+30
        %186 = vst.msk [vmem:[#allocation3] sm:$0xff] %vm184, 0.0
        %vm187 = vcmask 261120
        %188 = vst.msk [vmem:[#allocation4] sm:$0xff] %vm187, 0.0
      $region32: #{language_transformer_forward.37} parent=27 // pred_fallthru
        _
      %v189 = vld [vmem:[%s167] sm:$0xf]
      %v190 = vld [vmem:[%s174] sm:$0xf]
      %vm191 = vcmask 64512
      %v193 = vsel %vm191, %v189, 0
      %v196 = vsel %vm191, %v190, 0
      %198 = vmatprep.subr.bf16.mxu0 0
      %199 = vmatpush1.bf16.xpose.msra.mxu0 %v196
      %200 = vmatprep.subr.bf16.mxu0 0
      %201 = vmatpush1.bf16.xpose.msra.mxu0 0
      %202 = vmatprep.subr.bf16.mxu0 0
      %203 = vmatpush1.bf16.xpose.msra.mxu0 0
      %204 = vmatprep.subr.bf16.mxu0 0
      %205 = vmatpush1.bf16.xpose.msra.mxu0 0
      %206 = vmatprep.subr.bf16.mxu0 0
      %207 = vmatpush1.bf16.xpose.msra.mxu0 0
      %208 = vmatprep.subr.bf16.mxu0 0
      %209 = vmatpush1.bf16.xpose.msra.mxu0 0
      %210 = vmatprep.subr.bf16.mxu0 0
      %211 = vmatpush1.bf16.xpose.msra.mxu0 0
      %212 = vmatprep.subr.bf16.mxu0 0
      %213 = vmatpush1.bf16.xpose.msra.mxu0 0
      %214 = vmatprep.subr.bf16.mxu0 0
      %215 = vmatpush1.bf16.xpose.msra.mxu0 0
      %216 = vmatprep.subr.bf16.mxu0 0
      %217 = vmatpush1.bf16.xpose.msra.mxu0 0
      %218 = vmatprep.subr.bf16.mxu0 0
      %219 = vmatpush1.bf16.xpose.msra.mxu0 0
      %220 = vmatprep.subr.bf16.mxu0 0
      %221 = vmatpush1.bf16.xpose.msra.mxu0 0
      %222 = vmatprep.subr.bf16.mxu0 0
      %223 = vmatpush1.bf16.xpose.msra.mxu0 0
      %224 = vmatprep.subr.bf16.mxu0 0
      %225 = vmatpush1.bf16.xpose.msra.mxu0 0
      %226 = vmatprep.subr.bf16.mxu0 0
      %227 = vmatpush1.bf16.xpose.msra.mxu0 0
      %228 = vmatprep.subr.bf16.mxu0 0
      %229 = vmatpush1.bf16.xpose.msra.mxu0 0
      %230 = vmatprep.mubr.bf16.mxu0 0
      %231 = vmatmul.mubr.bf16.gmra.mrb[0].mxu0 %v193
      %v232 = vpop.f32.mrb[0].mxu0
      %v233 = vadd.f32 0.0, %v232
      %v234 = vpop.f32.mrb[0].mxu0
      %v235 = vpop.f32.mrb[0].mxu0
      %v236 = vpop.f32.mrb[0].mxu0
      %237 = vdwg.mxu0
      %v238 = vmul.f32 %v233, 0.35355338
      %v239 = vld [vmem:[#allocation2] sm:$0xff]
      %v240 = vsel %vm191, %v238, -inf
      %241 = vmax.xlane.f32.xlu0 %v240
      %v242 = vpop.xlane.xlu0 %241
      %v243 = vmax.f32 %v239, %v242
      %v244 = vsub.f32 %v239, %v243
      %v245 = vmul.f32 %v244, 1.442695
      %v246 = vpow.pop %v245
      %248 = vset.pattern.permute.xlu0 0
      %249 = vperm.xlu0 %248, %v243
      %v250 = vpop.permute.xlu0 %249
      %v252 = vsub.f32 %v238, %v250
      %v253 = vmul.f32 %v252, 1.442695
      %v254 = vpow.pop %v253
      %v255 = vld [vmem:[#allocation3] sm:$0xff]
      %v256 = vmul.f32 %v246, %v255
      %v257 = vsel %vm191, %v254, 0.0
      %258 = vadd.xlane.f32.xlu0 %v257
      %v259 = vpop.xlane.xlu0 %258
      %v260 = vadd.f32 %v256, %v259
      %vm261 = vcmask 7168
      %262 = vst.msk [vmem:[#allocation3] sm:$0xff] %vm261, %v260
      %v263 = vpack.c.bf16 %v254, %v254
      %v265 = vunpack.c.l.b16 %v190
      %v266 = vpack.c.b16 %v265, %v265
      %267 = vrot.lane.b32.xlu0 %v266, 96
      %v268 = vpop.permute.xlu0 %267
      %v270 = vsel %vm191, %v263, 0
      %vm272 = vcmask 1043456
      %v274 = vsel %vm272, %v268, 0
      %276 = vmatprep.subr.bf16.mxu0 0
      %277 = vmatpush1.bf16.msra.mxu0 %v274
      %278 = vmatprep.subr.bf16.mxu0 0
      %279 = vmatpush1.bf16.msra.mxu0 0
      %280 = vmatprep.subr.bf16.mxu0 0
      %281 = vmatpush1.bf16.msra.mxu0 0
      %282 = vmatprep.subr.bf16.mxu0 0
      %283 = vmatpush1.bf16.msra.mxu0 0
      %284 = vmatprep.subr.bf16.mxu0 0
      %285 = vmatpush1.bf16.msra.mxu0 0
      %286 = vmatprep.subr.bf16.mxu0 0
      %287 = vmatpush1.bf16.msra.mxu0 0
      %288 = vmatprep.subr.bf16.mxu0 0
      %289 = vmatpush1.bf16.msra.mxu0 0
      %290 = vmatprep.subr.bf16.mxu0 0
      %291 = vmatpush1.bf16.msra.mxu0 0
      %292 = vmatprep.subr.bf16.mxu0 0
      %293 = vmatpush1.bf16.msra.mxu0 0
      %294 = vmatprep.subr.bf16.mxu0 0
      %295 = vmatpush1.bf16.msra.mxu0 0
      %296 = vmatprep.subr.bf16.mxu0 0
      %297 = vmatpush1.bf16.msra.mxu0 0
      %298 = vmatprep.subr.bf16.mxu0 0
      %299 = vmatpush1.bf16.msra.mxu0 0
      %300 = vmatprep.subr.bf16.mxu0 0
      %301 = vmatpush1.bf16.msra.mxu0 0
      %302 = vmatprep.subr.bf16.mxu0 0
      %303 = vmatpush1.bf16.msra.mxu0 0
      %304 = vmatprep.subr.bf16.mxu0 0
      %305 = vmatpush1.bf16.msra.mxu0 0
      %306 = vmatprep.subr.bf16.mxu0 0
      %307 = vmatpush1.bf16.msra.mxu0 0
      %308 = vmatprep.mubr.bf16.mxu0 0
      %309 = vmatmul.mubr.bf16.gmra.mrb[0].mxu0 %v270
      %v310 = vpop.f32.mrb[0].mxu0
      %v311 = vadd.f32 0.0, %v310
      %v312 = vpop.f32.mrb[0].mxu0
      %v313 = vpop.f32.mrb[0].mxu0
      %v314 = vpop.f32.mrb[0].mxu0
      %315 = vdwg.mxu0
      %v316 = vld [vmem:[#allocation4] sm:$0xff]
      %318 = vset.pattern.permute.xlu0 0
      %319 = vperm.xlu0 %318, %v246
      %v320 = vpop.permute.xlu0 %319
      %v322 = vmul.f32 %v320, %v316
      %v323 = vadd.f32 %v322, %v311
      %324 = vst.msk [vmem:[#allocation4] sm:$0xff] %vm191, %v323
      %325 = vst.msk [vmem:[#allocation2] sm:$0xff] %vm261, %v243
      %v326 = vld [vmem:[%s167] sm:$0xf]
      %v327 = vld [vmem:[%s174] sm:$0xf]
      %v329 = vunpack.c.l.b16 %v326
      %v330 = vpack.c.b16 %v329, %v329
      %331 = vrot.lane.b32.xlu0 %v330, 120
      %v332 = vpop.permute.xlu0 %331
      %v334 = vunpack.c.l.b16 %v327
      %v335 = vpack.c.b16 %v334, %v334
      %336 = vrot.lane.b32.xlu0 %v335, 120
      %v337 = vpop.permute.xlu0 %336
      %v339 = vsel %vm191, %v332, 0
      %v342 = vsel %vm191, %v337, 0
      %344 = vmatprep.subr.bf16.mxu0 0
      %345 = vmatpush1.bf16.xpose.msra.mxu0 %v342
      %346 = vmatprep.subr.bf16.mxu0 0
      %347 = vmatpush1.bf16.xpose.msra.mxu0 0
      %348 = vmatprep.subr.bf16.mxu0 0
      %349 = vmatpush1.bf16.xpose.msra.mxu0 0
      %350 = vmatprep.subr.bf16.mxu0 0
      %351 = vmatpush1.bf16.xpose.msra.mxu0 0
      %352 = vmatprep.subr.bf16.mxu0 0
      %353 = vmatpush1.bf16.xpose.msra.mxu0 0
      %354 = vmatprep.subr.bf16.mxu0 0
      %355 = vmatpush1.bf16.xpose.msra.mxu0 0
      %356 = vmatprep.subr.bf16.mxu0 0
      %357 = vmatpush1.bf16.xpose.msra.mxu0 0
      %358 = vmatprep.subr.bf16.mxu0 0
      %359 = vmatpush1.bf16.xpose.msra.mxu0 0
      %360 = vmatprep.subr.bf16.mxu0 0
      %361 = vmatpush1.bf16.xpose.msra.mxu0 0
      %362 = vmatprep.subr.bf16.mxu0 0
      %363 = vmatpush1.bf16.xpose.msra.mxu0 0
      %364 = vmatprep.subr.bf16.mxu0 0
      %365 = vmatpush1.bf16.xpose.msra.mxu0 0
      %366 = vmatprep.subr.bf16.mxu0 0
      %367 = vmatpush1.bf16.xpose.msra.mxu0 0
      %368 = vmatprep.subr.bf16.mxu0 0
      %369 = vmatpush1.bf16.xpose.msra.mxu0 0
      %370 = vmatprep.subr.bf16.mxu0 0
      %371 = vmatpush1.bf16.xpose.msra.mxu0 0
      %372 = vmatprep.subr.bf16.mxu0 0
      %373 = vmatpush1.bf16.xpose.msra.mxu0 0
      %374 = vmatprep.subr.bf16.mxu0 0
      %375 = vmatpush1.bf16.xpose.msra.mxu0 0
      %376 = vmatprep.mubr.bf16.mxu0 0
      %377 = vmatmul.mubr.bf16.gmra.mrb[0].mxu0 %v339
      %v378 = vpop.f32.mrb[0].mxu0
      %v379 = vadd.f32 0.0, %v378
      %v380 = vpop.f32.mrb[0].mxu0
      %v381 = vpop.f32.mrb[0].mxu0
      %v382 = vpop.f32.mrb[0].mxu0
      %383 = vdwg.mxu0
      %v384 = vmul.f32 %v379, 0.35355338
      %v385 = vld [vmem:[#allocation2] sm:$0xff]
      %v386 = vsel %vm191, %v384, -inf
      %387 = vmax.xlane.f32.xlu0 %v386
      %v388 = vpop.xlane.xlu0 %387
      %v389 = vmax.f32 %v385, %v388
      %v390 = vsub.f32 %v385, %v389
      %v391 = vmul.f32 %v390, 1.442695
      %v392 = vpow.pop %v391
      %394 = vset.pattern.permute.xlu0 1
      %395 = vperm.xlu0 %394, %v389
      %v396 = vpop.permute.xlu0 %395
      %v398 = vsub.f32 %v384, %v396
      %v399 = vmul.f32 %v398, 1.442695
      %v400 = vpow.pop %v399
      %v401 = vld [vmem:[#allocation3] sm:$0xff]
      %v402 = vmul.f32 %v392, %v401
      %v403 = vsel %vm191, %v400, 0.0
      %404 = vadd.xlane.f32.xlu0 %v403
      %v405 = vpop.xlane.xlu0 %404
      %v406 = vadd.f32 %v402, %v405
      %vm407 = vcmask 15368
      %408 = vst.msk [vmem:[#allocation3] sm:$0xff] %vm407, %v406
      %v409 = vpack.c.bf16 %v400, %v400
      %410 = vrot.lane.b32.xlu0 %v335, 88
      %v411 = vpop.permute.xlu0 %410
      %v413 = vsel %vm191, %v409, 0
      %v416 = vsel %vm272, %v411, 0
      %418 = vmatprep.subr.bf16.mxu0 0
      %419 = vmatpush1.bf16.msra.mxu0 %v416
      %420 = vmatprep.subr.bf16.mxu0 0
      %421 = vmatpush1.bf16.msra.mxu0 0
      %422 = vmatprep.subr.bf16.mxu0 0
      %423 = vmatpush1.bf16.msra.mxu0 0
      %424 = vmatprep.subr.bf16.mxu0 0
      %425 = vmatpush1.bf16.msra.mxu0 0
      %426 = vmatprep.subr.bf16.mxu0 0
      %427 = vmatpush1.bf16.msra.mxu0 0
      %428 = vmatprep.subr.bf16.mxu0 0
      %429 = vmatpush1.bf16.msra.mxu0 0
      %430 = vmatprep.subr.bf16.mxu0 0
      %431 = vmatpush1.bf16.msra.mxu0 0
      %432 = vmatprep.subr.bf16.mxu0 0
      %433 = vmatpush1.bf16.msra.mxu0 0
      %434 = vmatprep.subr.bf16.mxu0 0
      %435 = vmatpush1.bf16.msra.mxu0 0
      %436 = vmatprep.subr.bf16.mxu0 0
      %437 = vmatpush1.bf16.msra.mxu0 0
      %438 = vmatprep.subr.bf16.mxu0 0
      %439 = vmatpush1.bf16.msra.mxu0 0
      %440 = vmatprep.subr.bf16.mxu0 0
      %441 = vmatpush1.bf16.msra.mxu0 0
      %442 = vmatprep.subr.bf16.mxu0 0
      %443 = vmatpush1.bf16.msra.mxu0 0
      %444 = vmatprep.subr.bf16.mxu0 0
      %445 = vmatpush1.bf16.msra.mxu0 0
      %446 = vmatprep.subr.bf16.mxu0 0
      %447 = vmatpush1.bf16.msra.mxu0 0
      %448 = vmatprep.subr.bf16.mxu0 0
      %449 = vmatpush1.bf16.msra.mxu0 0
      %450 = vmatprep.mubr.bf16.mxu0 0
      %451 = vmatmul.mubr.bf16.gmra.mrb[0].mxu0 %v413
      %v452 = vpop.f32.mrb[0].mxu0
      %v453 = vadd.f32 0.0, %v452
      %v454 = vpop.f32.mrb[0].mxu0
      %v455 = vpop.f32.mrb[0].mxu0
      %v456 = vpop.f32.mrb[0].mxu0
      %457 = vdwg.mxu0
      %v458 = vld [vmem:[#allocation4] sm:$0xff]
      %460 = vset.pattern.permute.xlu0 1
      %461 = vperm.xlu0 %460, %v392
      %v462 = vpop.permute.xlu0 %461
      %v464 = vmul.f32 %v462, %v458
      %466 = vrot.lane.b32.xlu0 %v453, 8
      %v467 = vpop.permute.xlu0 %466
      %v469 = vadd.f32 %v464, %v467
      %vm470 = vcmask 130112
      %471 = vst.msk [vmem:[#allocation4] sm:$0xff] %vm470, %v469
      %472 = vst.msk [vmem:[#allocation2] sm:$0xff] %vm407, %v389
      %v473 = vld [vmem:[%s167] sm:$0xf]
      %v474 = vld [vmem:[%s174] sm:$0xf]
      %v476 = vunpack.c.l.b16 %v473
      %v477 = vpack.c.b16 %v476, %v476
      %478 = vrot.lane.b32.xlu0 %v477, 112
      %v479 = vpop.permute.xlu0 %478
      %v481 = vunpack.c.l.b16 %v474
      %v482 = vpack.c.b16 %v481, %v481
      %483 = vrot.lane.b32.xlu0 %v482, 112
      %v484 = vpop.permute.xlu0 %483
      %v486 = vsel %vm191, %v479, 0
      %v489 = vsel %vm191, %v484, 0
      %491 = vmatprep.subr.bf16.mxu0 0
      %492 = vmatpush1.bf16.xpose.msra.mxu0 %v489
      %493 = vmatprep.subr.bf16.mxu0 0
      %494 = vmatpush1.bf16.xpose.msra.mxu0 0
      %495 = vmatprep.subr.bf16.mxu0 0
      %496 = vmatpush1.bf16.xpose.msra.mxu0 0
      %497 = vmatprep.subr.bf16.mxu0 0
      %498 = vmatpush1.bf16.xpose.msra.mxu0 0
      %499 = vmatprep.subr.bf16.mxu0 0
      %500 = vmatpush1.bf16.xpose.msra.mxu0 0
      %501 = vmatprep.subr.bf16.mxu0 0
      %502 = vmatpush1.bf16.xpose.msra.mxu0 0
      %503 = vmatprep.subr.bf16.mxu0 0
      %504 = vmatpush1.bf16.xpose.msra.mxu0 0
      %505 = vmatprep.subr.bf16.mxu0 0
      %506 = vmatpush1.bf16.xpose.msra.mxu0 0
      %507 = vmatprep.subr.bf16.mxu0 0
      %508 = vmatpush1.bf16.xpose.msra.mxu0 0
      %509 = vmatprep.subr.bf16.mxu0 0
      %510 = vmatpush1.bf16.xpose.msra.mxu0 0
      %511 = vmatprep.subr.bf16.mxu0 0
      %512 = vmatpush1.bf16.xpose.msra.mxu0 0
      %513 = vmatprep.subr.bf16.mxu0 0
      %514 = vmatpush1.bf16.xpose.msra.mxu0 0
      %515 = vmatprep.subr.bf16.mxu0 0
      %516 = vmatpush1.bf16.xpose.msra.mxu0 0
      %517 = vmatprep.subr.bf16.mxu0 0
      %518 = vmatpush1.bf16.xpose.msra.mxu0 0
      %519 = vmatprep.subr.bf16.mxu0 0
      %520 = vmatpush1.bf16.xpose.msra.mxu0 0
      %521 = vmatprep.subr.bf16.mxu0 0
      %522 = vmatpush1.bf16.xpose.msra.mxu0 0
      %523 = vmatprep.mubr.bf16.mxu0 0
      %524 = vmatmul.mubr.bf16.gmra.mrb[0].mxu0 %v486
      %v525 = vpop.f32.mrb[0].mxu0
      %v526 = vadd.f32 0.0, %v525
      %v527 = vpop.f32.mrb[0].mxu0
      %v528 = vpop.f32.mrb[0].mxu0
      %v529 = vpop.f32.mrb[0].mxu0
      %530 = vdwg.mxu0
      %v531 = vmul.f32 %v526, 0.35355338
      %v532 = vld [vmem:[#allocation2] sm:$0xff]
      %v533 = vsel %vm191, %v531, -inf
      %534 = vmax.xlane.f32.xlu0 %v533
      %v535 = vpop.xlane.xlu0 %534
      %v536 = vmax.f32 %v532, %v535
      %v537 = vsub.f32 %v532, %v536
      %v538 = vmul.f32 %v537, 1.442695
      %v539 = vpow.pop %v538
      %541 = vset.pattern.permute.xlu0 2
      %542 = vperm.xlu0 %541, %v536
      %v543 = vpop.permute.xlu0 %542
      %v545 = vsub.f32 %v531, %v543
      %v546 = vmul.f32 %v545, 1.442695
      %v547 = vpow.pop %v546
      %v548 = vld [vmem:[#allocation3] sm:$0xff]
      %v549 = vmul.f32 %v539, %v548
      %v550 = vsel %vm191, %v547, 0.0
      %551 = vadd.xlane.f32.xlu0 %v550
      %v552 = vpop.xlane.xlu0 %551
      %v553 = vadd.f32 %v549, %v552
      %vm554 = vcmask 23568
      %555 = vst.msk [vmem:[#allocation3] sm:$0xff] %vm554, %v553
      %v556 = vpack.c.bf16 %v547, %v547
      %557 = vrot.lane.b32.xlu0 %v482, 80
      %v558 = vpop.permute.xlu0 %557
      %v560 = vsel %vm191, %v556, 0
      %v563 = vsel %vm272, %v558, 0
      %565 = vmatprep.subr.bf16.mxu0 0
      %566 = vmatpush1.bf16.msra.mxu0 %v563
      %567 = vmatprep.subr.bf16.mxu0 0
      %568 = vmatpush1.bf16.msra.mxu0 0
      %569 = vmatprep.subr.bf16.mxu0 0
      %570 = vmatpush1.bf16.msra.mxu0 0
      %571 = vmatprep.subr.bf16.mxu0 0
      %572 = vmatpush1.bf16.msra.mxu0 0
      %573 = vmatprep.subr.bf16.mxu0 0
      %574 = vmatpush1.bf16.msra.mxu0 0
      %575 = vmatprep.subr.bf16.mxu0 0
      %576 = vmatpush1.bf16.msra.mxu0 0
      %577 = vmatprep.subr.bf16.mxu0 0
      %578 = vmatpush1.bf16.msra.mxu0 0
      %579 = vmatprep.subr.bf16.mxu0 0
      %580 = vmatpush1.bf16.msra.mxu0 0
      %581 = vmatprep.subr.bf16.mxu0 0
      %582 = vmatpush1.bf16.msra.mxu0 0
      %583 = vmatprep.subr.bf16.mxu0 0
      %584 = vmatpush1.bf16.msra.mxu0 0
      %585 = vmatprep.subr.bf16.mxu0 0
      %586 = vmatpush1.bf16.msra.mxu0 0
      %587 = vmatprep.subr.bf16.mxu0 0
      %588 = vmatpush1.bf16.msra.mxu0 0
      %589 = vmatprep.subr.bf16.mxu0 0
      %590 = vmatpush1.bf16.msra.mxu0 0
      %591 = vmatprep.subr.bf16.mxu0 0
      %592 = vmatpush1.bf16.msra.mxu0 0
      %593 = vmatprep.subr.bf16.mxu0 0
      %594 = vmatpush1.bf16.msra.mxu0 0
      %595 = vmatprep.subr.bf16.mxu0 0
      %596 = vmatpush1.bf16.msra.mxu0 0
      %597 = vmatprep.mubr.bf16.mxu0 0
      %598 = vmatmul.mubr.bf16.gmra.mrb[0].mxu0 %v560
      %v599 = vpop.f32.mrb[0].mxu0
      %v600 = vadd.f32 0.0, %v599
      %v601 = vpop.f32.mrb[0].mxu0
      %v602 = vpop.f32.mrb[0].mxu0
      %v603 = vpop.f32.mrb[0].mxu0
      %604 = vdwg.mxu0
      %v605 = vld [vmem:[#allocation4] sm:$0xff]
      %607 = vset.pattern.permute.xlu0 2
      %608 = vperm.xlu0 %607, %v539
      %v609 = vpop.permute.xlu0 %608
      %v611 = vmul.f32 %v609, %v605
      %613 = vrot.lane.b32.xlu0 %v600, 16
      %v614 = vpop.permute.xlu0 %613
      %v616 = vadd.f32 %v611, %v614
      %vm617 = vcmask 195712
      %618 = vst.msk [vmem:[#allocation4] sm:$0xff] %vm617, %v616
      %619 = vst.msk [vmem:[#allocation2] sm:$0xff] %vm554, %v536
      %v620 = vld [vmem:[%s167] sm:$0xf]
      %v621 = vld [vmem:[%s174] sm:$0xf]
      %v623 = vunpack.c.l.b16 %v620
      %v624 = vpack.c.b16 %v623, %v623
      %625 = vrot.lane.b32.xlu0 %v624, 104
      %v626 = vpop.permute.xlu0 %625
      %v628 = vunpack.c.l.b16 %v621
      %v629 = vpack.c.b16 %v628, %v628
      %630 = vrot.lane.b32.xlu0 %v629, 104
      %v631 = vpop.permute.xlu0 %630
      %v633 = vsel %vm191, %v626, 0
      %v636 = vsel %vm191, %v631, 0
      %638 = vmatprep.subr.bf16.mxu0 0
      %639 = vmatpush1.bf16.xpose.msra.mxu0 %v636
      %640 = vmatprep.subr.bf16.mxu0 0
      %641 = vmatpush1.bf16.xpose.msra.mxu0 0
      %642 = vmatprep.subr.bf16.mxu0 0
      %643 = vmatpush1.bf16.xpose.msra.mxu0 0
      %644 = vmatprep.subr.bf16.mxu0 0
      %645 = vmatpush1.bf16.xpose.msra.mxu0 0
      %646 = vmatprep.subr.bf16.mxu0 0
      %647 = vmatpush1.bf16.xpose.msra.mxu0 0
      %648 = vmatprep.subr.bf16.mxu0 0
      %649 = vmatpush1.bf16.xpose.msra.mxu0 0
      %650 = vmatprep.subr.bf16.mxu0 0
      %651 = vmatpush1.bf16.xpose.msra.mxu0 0
      %652 = vmatprep.subr.bf16.mxu0 0
      %653 = vmatpush1.bf16.xpose.msra.mxu0 0
      %654 = vmatprep.subr.bf16.mxu0 0
      %655 = vmatpush1.bf16.xpose.msra.mxu0 0
      %656 = vmatprep.subr.bf16.mxu0 0
      %657 = vmatpush1.bf16.xpose.msra.mxu0 0
      %658 = vmatprep.subr.bf16.mxu0 0
      %659 = vmatpush1.bf16.xpose.msra.mxu0 0
      %660 = vmatprep.subr.bf16.mxu0 0
      %661 = vmatpush1.bf16.xpose.msra.mxu0 0
      %662 = vmatprep.subr.bf16.mxu0 0
      %663 = vmatpush1.bf16.xpose.msra.mxu0 0
      %664 = vmatprep.subr.bf16.mxu0 0
      %665 = vmatpush1.bf16.xpose.msra.mxu0 0
      %666 = vmatprep.subr.bf16.mxu0 0
      %667 = vmatpush1.bf16.xpose.msra.mxu0 0
      %668 = vmatprep.subr.bf16.mxu0 0
      %669 = vmatpush1.bf16.xpose.msra.mxu0 0
      %670 = vmatprep.mubr.bf16.mxu0 0
      %671 = vmatmul.mubr.bf16.gmra.mrb[0].mxu0 %v633
      %v672 = vpop.f32.mrb[0].mxu0
      %v673 = vadd.f32 0.0, %v672
      %v674 = vpop.f32.mrb[0].mxu0
      %v675 = vpop.f32.mrb[0].mxu0
      %v676 = vpop.f32.mrb[0].mxu0
      %677 = vdwg.mxu0
      %v678 = vmul.f32 %v673, 0.35355338
      %v679 = vld [vmem:[#allocation2] sm:$0xff]
      %v680 = vsel %vm191, %v678, -inf
      %681 = vmax.xlane.f32.xlu0 %v680
      %v682 = vpop.xlane.xlu0 %681
      %v683 = vmax.f32 %v679, %v682
      %v684 = vsub.f32 %v679, %v683
      %v685 = vmul.f32 %v684, 1.442695
      %v686 = vpow.pop %v685
      %688 = vset.pattern.permute.xlu0 3
      %689 = vperm.xlu0 %688, %v683
      %v690 = vpop.permute.xlu0 %689
      %v692 = vsub.f32 %v678, %v690
      %v693 = vmul.f32 %v692, 1.442695
      %v694 = vpow.pop %v693
      %v695 = vld [vmem:[#allocation3] sm:$0xff]
      %v696 = vmul.f32 %v686, %v695
      %v697 = vsel %vm191, %v694, 0.0
      %698 = vadd.xlane.f32.xlu0 %v697
      %v699 = vpop.xlane.xlu0 %698
      %v700 = vadd.f32 %v696, %v699
      %vm701 = vcmask 31768
      %702 = vst.msk [vmem:[#allocation3] sm:$0xff] %vm701, %v700
      %v703 = vpack.c.bf16 %v694, %v694
      %704 = vrot.lane.b32.xlu0 %v629, 72
      %v705 = vpop.permute.xlu0 %704
      %v707 = vsel %vm191, %v703, 0
      %v710 = vsel %vm272, %v705, 0
      %712 = vmatprep.subr.bf16.mxu0 0
      %713 = vmatpush1.bf16.msra.mxu0 %v710
      %714 = vmatprep.subr.bf16.mxu0 0
      %715 = vmatpush1.bf16.msra.mxu0 0
      %716 = vmatprep.subr.bf16.mxu0 0
      %717 = vmatpush1.bf16.msra.mxu0 0
      %718 = vmatprep.subr.bf16.mxu0 0
      %719 = vmatpush1.bf16.msra.mxu0 0
      %720 = vmatprep.subr.bf16.mxu0 0
      %721 = vmatpush1.bf16.msra.mxu0 0
      %722 = vmatprep.subr.bf16.mxu0 0
      %723 = vmatpush1.bf16.msra.mxu0 0
      %724 = vmatprep.subr.bf16.mxu0 0
      %725 = vmatpush1.bf16.msra.mxu0 0
      %726 = vmatprep.subr.bf16.mxu0 0
      %727 = vmatpush1.bf16.msra.mxu0 0
      %728 = vmatprep.subr.bf16.mxu0 0
      %729 = vmatpush1.bf16.msra.mxu0 0
      %730 = vmatprep.subr.bf16.mxu0 0
      %731 = vmatpush1.bf16.msra.mxu0 0
      %732 = vmatprep.subr.bf16.mxu0 0
      %733 = vmatpush1.bf16.msra.mxu0 0
      %734 = vmatprep.subr.bf16.mxu0 0
      %735 = vmatpush1.bf16.msra.mxu0 0
      %736 = vmatprep.subr.bf16.mxu0 0
      %737 = vmatpush1.bf16.msra.mxu0 0
      %738 = vmatprep.subr.bf16.mxu0 0
      %739 = vmatpush1.bf16.msra.mxu0 0
      %740 = vmatprep.subr.bf16.mxu0 0
      %741 = vmatpush1.bf16.msra.mxu0 0
      %742 = vmatprep.subr.bf16.mxu0 0
      %743 = vmatpush1.bf16.msra.mxu0 0
      %744 = vmatprep.mubr.bf16.mxu0 0
      %745 = vmatmul.mubr.bf16.gmra.mrb[0].mxu0 %v707
      %v746 = vpop.f32.mrb[0].mxu0
      %v747 = vadd.f32 0.0, %v746
      %v748 = vpop.f32.mrb[0].mxu0
      %v749 = vpop.f32.mrb[0].mxu0
      %v750 = vpop.f32.mrb[0].mxu0
      %751 = vdwg.mxu0
      %v752 = vld [vmem:[#allocation4] sm:$0xff]
      %754 = vset.pattern.permute.xlu0 3
      %755 = vperm.xlu0 %754, %v686
      %v756 = vpop.permute.xlu0 %755
      %v758 = vmul.f32 %v756, %v752
      %760 = vrot.lane.b32.xlu0 %v747, 24
      %v761 = vpop.permute.xlu0 %760
      %v763 = vadd.f32 %v758, %v761
      %vm764 = vcmask 261312
      %765 = vst.msk [vmem:[#allocation4] sm:$0xff] %vm764, %v763
      %766 = vst.msk [vmem:[#allocation2] sm:$0xff] %vm701, %v683
      // Predicated region
      $region33: #{language_transformer_forward.37} parent=27 // pred_check
        %p767 = pneg %p180
      $region34: #{language_transformer_forward.37} parent=27 // pred_check_branch
        %769 = sbr.rel (%p767) target = $region36
      $region35: #{language_transformer_forward.37} parent=27 // pred_region
        %v770 = vld [vmem:[#allocation3] sm:$0xff]
        %v771 = vrcp.pop %v770
        %v772 = vld [vmem:[#allocation4] sm:$0xff]
        %774 = vset.pattern.permute.xlu0 0
        %775 = vperm.xlu0 %774, %v771
        %v776 = vpop.permute.xlu0 %775
        %v778 = vmul.f32 %v772, %v776
        %779 = vst.msk [vmem:[#allocation4] sm:$0xff] %vm191, %v778
        %v780 = vld [vmem:[#allocation3] sm:$0xff]
        %v781 = vrcp.pop %v780
        %v782 = vld [vmem:[#allocation4] sm:$0xff]
        %784 = vset.pattern.permute.xlu0 1
        %785 = vperm.xlu0 %784, %v781
        %v786 = vpop.permute.xlu0 %785
        %v788 = vmul.f32 %v782, %v786
        %789 = vst.msk [vmem:[#allocation4] sm:$0xff] %vm470, %v788
        %v790 = vld [vmem:[#allocation3] sm:$0xff]
        %v791 = vrcp.pop %v790
        %v792 = vld [vmem:[#allocation4] sm:$0xff]
        %794 = vset.pattern.permute.xlu0 2
        %795 = vperm.xlu0 %794, %v791
        %v796 = vpop.permute.xlu0 %795
        %v798 = vmul.f32 %v792, %v796
        %799 = vst.msk [vmem:[#allocation4] sm:$0xff] %vm617, %v798
        %v800 = vld [vmem:[#allocation3] sm:$0xff]
        %v801 = vrcp.pop %v800
        %v802 = vld [vmem:[#allocation4] sm:$0xff]
        %804 = vset.pattern.permute.xlu0 3
        %805 = vperm.xlu0 %804, %v801
        %v806 = vpop.permute.xlu0 %805
        %v808 = vmul.f32 %v802, %v806
        %809 = vst.msk [vmem:[#allocation4] sm:$0xff] %vm764, %v808
        %v810 = vld [vmem:[#allocation4] sm:$0xff]
        %v811 = vpack.c.bf16 %v810, %v810
        %vm812 = vcmask 257024
        %813 = vst.msk [vmem:[%s178] sm:$0xf] %vm812, %v811
      $region36: #{language_transformer_forward.37} parent=27 // pred_fallthru
        _
      %p814 = scmp.lt.s32.totalorder %s17, 1
      %s815 = scalar_select %p814, %s17, 1
      %s816 = smul.addr %s815, 4
      %s817 = scalar_lea.vmem %s2, %s816
      // Predicated region
      $region37: #{language_transformer_forward.37} parent=27 // pred_check
        %p818 = pneg %p97
      $region38: #{language_transformer_forward.37} parent=27 // pred_check_branch
        %820 = sbr.rel (%p818) target = $region40
      $region39: #{language_transformer_forward.37} parent=27 // pred_region
        _
      $region40: #{language_transformer_forward.37} parent=27 // pred_fallthru
        _
    $region28: #{language_transformer_forward.37} parent=5 // pred_fallthru
      _
    %p821 = scmp.le.s32.totalorder 2, %s8
    // Predicated region
    $region41: #{language_transformer_forward.37} parent=5 // pred_check
      %p822 = pneg %p821
    $region42: #{language_transformer_forward.37} parent=5 // pred_check_branch
      %824 = sbr.rel (%p822) target = $region44
    $region43: #{language_transformer_forward.37} parent=5 // pred_region
      %s825 = ssub.s32 %s8, 2
      // Predicated region
      $region45: #{language_transformer_forward.37} parent=43 // pred_check
        %p826 = pneg %p103
      $region46: #{language_transformer_forward.37} parent=43 // pred_check_branch
        %828 = sbr.rel (%p826) target = $region48
      $region47: #{language_transformer_forward.37} parent=43 // pred_region
        %p829 = scmp.lt.s32.totalorder %s19, 1
        %s830 = scalar_select %p829, %s19, 1
        %s831 = smul.addr %s830, 4
        %s832 = scalar_lea.vmem %s2, %s831
      $region48: #{language_transformer_forward.37} parent=43 // pred_fallthru
        _
    $region44: #{language_transformer_forward.37} parent=5 // pred_fallthru
      _
  $region6: #{language_transformer_forward.37} parent=0 // loop_footer
    %s12 = sadd.s32 1, %s8
  $region7: #{language_transformer_forward.37} parent=0 // loop_footer_branch
    %7 = sbr.rel target = $region3
  $region8: #{language_transformer_forward.37} parent=0 // loop_exit
    _

// kernel: language_transformer_forward.69
$region0: #{language_transformer_forward.69}
  #allocation0 [shape = 'u32[]', space=smem, size = 0x4, offset = 0x4, fixed_abs, tag = 'smem constant byte address 0x4 - core index']
  #allocation1 [shape = 'u32[144,128]{1,0:T(1,128)}', space=vmem, size = 0x12000, scoped, tag = 'internal scratch']
  #allocation2 [shape = 'f32[16,64]{1,0:T(8,128)}', space=vmem, size = 0x2000, scoped, tag = 'scratch operand']
  %s0 = inlined_call_operand.vmem [shape: bf16[16,32], index: 0, kind: input, shape index: {}]
  %s1 = inlined_call_operand.vmem [shape: bf16[32,64], index: 1, kind: input, shape index: {}]
  %s2 = inlined_call_operand.vmem [shape: f32[1,64], index: 2, kind: input, shape index: {}]
  %s3 = inlined_call_operand.hbm [shape: f32[16,64], index: 3, kind: output, shape index: {}]
  %s4 = sld [smem:[#allocation0]]
  $region30: #{language_transformer_forward.69} parent=0
    _
  %s6 = ssub.s32 1, %s4
  %s7 = scalar_select 0, %s6, %s4
  $region1: #{language_transformer_forward.69} parent=0
    #allocation3 [shape = 'u8[8192]{0}', space=vmem, size = 0x2000, scoped, tag = 'output window, operand 0, single buffered']
    #allocation4 [shape = 's32[1]{0}', space=sflag, size = 0x4, scoped, tag = 'scoped memory for language_transformer_forward.69']
    %8 = vsyncpa [#allocation4], 0
    // Predicated region
    $region2: #{language_transformer_forward.69} parent=1 // pred_check
      _
    $region3: #{language_transformer_forward.69} parent=1 // pred_check_branch
      %10 = sbr.rel (0) target = $region5
    $region4: #{language_transformer_forward.69} parent=1 // pred_region
      _
    $region5: #{language_transformer_forward.69} parent=1 // pred_fallthru
      _
    // Predicated region
    $region6: #{language_transformer_forward.69} parent=1 // pred_check
      _
    $region7: #{language_transformer_forward.69} parent=1 // pred_check_branch
      %12 = sbr.rel (0) target = $region9
    $region8: #{language_transformer_forward.69} parent=1 // pred_region
      _
    $region9: #{language_transformer_forward.69} parent=1 // pred_fallthru
      _
    // Predicated region
    $region10: #{language_transformer_forward.69} parent=1 // pred_check
      _
    $region11: #{language_transformer_forward.69} parent=1 // pred_check_branch
      %14 = sbr.rel (0) target = $region13
    $region12: #{language_transformer_forward.69} parent=1 // pred_region
      _
    $region13: #{language_transformer_forward.69} parent=1 // pred_fallthru
      _
    %p16 = scmp.eq.s32.totalorder 0, 0
    // Predicated region
    $region14: #{language_transformer_forward.69} parent=1 // pred_check
      %p17 = pneg %p16
    $region15: #{language_transformer_forward.69} parent=1 // pred_check_branch
      %19 = sbr.rel (%p17) target = $region17
    $region16: #{language_transformer_forward.69} parent=1 // pred_region
      %vm20 = vcmask 523264
      %21 = vst.msk [vmem:[#allocation2] sm:$0xff] %vm20, 0.0
      %22 = vst.msk [vmem:[#allocation2 + $0x8] sm:$0xff] %vm20, 0.0
    $region17: #{language_transformer_forward.69} parent=1 // pred_fallthru
      _
    %v23 = vld [vmem:[%s0] sm:$0xf]
    %v24 = vld [vmem:[%s0 + $0x4] sm:$0xf]
    %v25 = vld [vmem:[#allocation2] sm:$0xff]
    %v26 = vld [vmem:[#allocation2 + $0x8] sm:$0xff]
    %v27 = vld [vmem:[%s1] sm:$0xf]
    %v28 = vld [vmem:[%s1 + $0x4] sm:$0xf]
    %v29 = vld [vmem:[%s1 + $0x8] sm:$0xf]
    %v30 = vld [vmem:[%s1 + $0xc] sm:$0xf]
    %v33 = vunpack.c.l.b16 %v23
    %v34 = vunpack.c.l.b16 %v24
    %v35 = vpack.c.b16 %v34, %v33
    %v40 = vunpack.c.l.b16 %v27
    %v41 = vunpack.c.l.b16 %v28
    %v42 = vunpack.c.l.b16 %v29
    %v43 = vunpack.c.l.b16 %v30
    %v44 = vpack.c.b16 %v41, %v40
    %v45 = vpack.c.b16 %v43, %v42
    %vm48 = vcmask 261120
    %v50 = vsel %vm48, %v35, 0
    %52 = vmatprep.subr.bf16.mxu0 0
    %53 = vmatpush1.bf16.msra.mxu0 %v44
    %54 = vmatprep.subr.bf16.mxu0 0
    %55 = vmatpush1.bf16.msra.mxu0 %v45
    %56 = vmatprep.subr.bf16.mxu0 0
    %57 = vmatpush1.bf16.msra.mxu0 0
    %58 = vmatprep.subr.bf16.mxu0 0
    %59 = vmatpush1.bf16.msra.mxu0 0
    %60 = vmatprep.subr.bf16.mxu0 0
    %61 = vmatpush1.bf16.msra.mxu0 0
    %62 = vmatprep.subr.bf16.mxu0 0
    %63 = vmatpush1.bf16.msra.mxu0 0
    %64 = vmatprep.subr.bf16.mxu0 0
    %65 = vmatpush1.bf16.msra.mxu0 0
    %66 = vmatprep.subr.bf16.mxu0 0
    %67 = vmatpush1.bf16.msra.mxu0 0
    %68 = vmatprep.subr.bf16.mxu0 0
    %69 = vmatpush1.bf16.msra.mxu0 0
    %70 = vmatprep.subr.bf16.mxu0 0
    %71 = vmatpush1.bf16.msra.mxu0 0
    %72 = vmatprep.subr.bf16.mxu0 0
    %73 = vmatpush1.bf16.msra.mxu0 0
    %74 = vmatprep.subr.bf16.mxu0 0
    %75 = vmatpush1.bf16.msra.mxu0 0
    %76 = vmatprep.subr.bf16.mxu0 0
    %77 = vmatpush1.bf16.msra.mxu0 0
    %78 = vmatprep.subr.bf16.mxu0 0
    %79 = vmatpush1.bf16.msra.mxu0 0
    %80 = vmatprep.subr.bf16.mxu0 0
    %81 = vmatpush1.bf16.msra.mxu0 0
    %82 = vmatprep.subr.bf16.mxu0 0
    %83 = vmatpush1.bf16.msra.mxu0 0
    %84 = vmatprep.mubr.bf16.mxu0 0
    %85 = vmatmul.mubr.bf16.gmra.mrb[0].mxu0 %v50
    %v86 = vpop.f32.mrb[0].mxu0
    %v87 = vadd.f32 0.0, %v86
    %v88 = vpop.f32.mrb[0].mxu0
    %v89 = vpop.f32.mrb[0].mxu0
    %v90 = vadd.f32 0.0, %v89
    %v91 = vpop.f32.mrb[0].mxu0
    %92 = vdwg.mxu0
    %v93 = vadd.f32 %v25, %v87
    %v94 = vadd.f32 %v26, %v90
    %vm95 = vcmask 523264
    %96 = vst.msk [vmem:[#allocation2] sm:$0xff] %vm95, %v93
    %97 = vst.msk [vmem:[#allocation2 + $0x8] sm:$0xff] %vm95, %v94
    // Predicated region
    $region18: #{language_transformer_forward.69} parent=1 // pred_check
      %p98 = pneg %p16
    $region19: #{language_transformer_forward.69} parent=1 // pred_check_branch
      %100 = sbr.rel (%p98) target = $region21
    $region20: #{language_transformer_forward.69} parent=1 // pred_region
      %v101 = vld [vmem:[#allocation2] sm:$0xff]
      %v102 = vld [vmem:[#allocation2 + $0x8] sm:$0xff]
      %v103 = vld [vmem:[%s2] sm:$0x1]
      %v105 = vlaneseq
      %v106 = vshrl.u32 %v105, 7
      %v107 = vsub.s32 0, %v106
      %v108 = vrot.slane %v103, %v107
      %v110 = vadd.f32 %v101, %v108
      %v111 = vadd.f32 %v102, %v108
      %112 = vst.msk [vmem:[#allocation3] sm:$0xff] %vm95, %v110
      %113 = vst.msk [vmem:[#allocation3 + $0x8] sm:$0xff] %vm95, %v111
    $region21: #{language_transformer_forward.69} parent=1 // pred_fallthru
      _
    // Predicated region
    $region22: #{language_transformer_forward.69} parent=1 // pred_check
      _
    $region23: #{language_transformer_forward.69} parent=1 // pred_check_branch
      %115 = sbr.rel (0) target = $region25
    $region24: #{language_transformer_forward.69} parent=1 // pred_region
      %s117 = ssub.s32 256, 256
      %118 = vsyncadd [#allocation4], %s117
      %s119 = sshll.u32 [#allocation3], 4
      %s120 = int_to_ptr.vmem [resolvable:$true] %s119
      %125 = dma.vmem_to_hbm [thread:$0]  %s120, 256, %s3, [#allocation4], 128, 128, 8
    $region25: #{language_transformer_forward.69} parent=1 // pred_fallthru
      _
    // Predicated region
    $region26: #{language_transformer_forward.69} parent=1 // pred_check
      _
    $region27: #{language_transformer_forward.69} parent=1 // pred_check_branch
      %127 = sbr.rel (0) target = $region29
    $region28: #{language_transformer_forward.69} parent=1 // pred_region
      %128 = dma.done [#allocation4], 256
    $region29: #{language_transformer_forward.69} parent=1 // pred_fallthru
      _
    %129 = vsyncpa [#allocation4], 1

</llo_original>
